<compile_context>
chip_gen: v7x
topology: tpu7x:2x2x1
jax: 0.10.0
libtpu: 0.0.40
codegen_flags: <defaults>
</compile_context>

<pallas_src>
import functools
import math

import jax
import jax.numpy as jnp
from jax.experimental import pallas as pl
from jax.experimental.pallas import tpu as pltpu

EPS = 1e-5
NGF = 16            # spatial size / base channels
COEF = 4            # intermediate channels
K = 5               # deconv kernel size
PAD = 2             # deconv padding
S = NGF * NGF       # 256 spatial positions per channel
F1 = COEF * S       # 1024 linear output features
COUT = NGF * COEF   # 64 output channels
NTAP = K * K        # 25 conv taps
PK = 128            # stage-2 reduction dim padded 25*4=100 -> 128 for the MXU


def _gelu_exact(x):
    # F.gelu default (approximate='none'): 0.5*x*(1+erf(x/sqrt(2)))
    return 0.5 * x * (1.0 + jax.lax.erf(x * 0.7071067811865476))


def projection_kernel(x_ref, w1_ref, g1_ref, beta1_ref, w2_ref, g2_ref, beta2_ref,
                      o_ref, acc_sc, p_sc):
    """Fused Linear+BN1d+GELU -> ConvTranspose2d(5,s=1,p=2)+BN2d+GELU (training stats)."""
    k = pl.program_id(0)
    nb = x_ref.shape[0]          # batch
    ncol = nb * S                # lane width of the transposed activations

    @pl.when(k == 0)
    def _init():
        acc_sc[...] = jnp.zeros_like(acc_sc)

    # ---- stage 1 partial matmul (bf16 operands, f32 accumulation on the MXU) ----
    acc_sc[...] += jnp.dot(x_ref[...], w1_ref[...],
                           preferred_element_type=jnp.float32)

    @pl.when(k == pl.num_programs(0) - 1)
    def _finalize():
        # ---- BatchNorm1d (biased batch stats, two-pass variance) + GELU ----
        h = acc_sc[...]                                    # (nb, 1024) f32
        mean = jnp.mean(h, axis=0, keepdims=True)
        d = h - mean
        var = jnp.mean(d * d, axis=0, keepdims=True)
        hn = d * jax.lax.rsqrt(var + EPS)
        hg = _gelu_exact(hn * g1_ref[...] + beta1_ref[...])  # (nb, 1024) f32

        # ---- relayout to channel-major without a scratch roundtrip:
        #      ht[c, b*S + p] = hg[b, c*S + p]  (pure lane-slice + concat, stays in vregs)
        ht = jnp.concatenate(
            [jnp.concatenate([hg[b:b + 1, c * S:(c + 1) * S] for b in range(nb)], axis=1)
             for c in range(COEF)], axis=0)                # (COEF, nb*S)

        # spatial coordinates of every lane (i = row, j = col of the 16x16 map),
        # plus separable boundary masks hoisted out of the 25-tap loop.
        col = jax.lax.broadcasted_iota(jnp.int32, (COEF, ncol), 1)
        i_idx = (col >> 4) & (NGF - 1)
        j_idx = col & (NGF - 1)
        row_ok = [((i_idx + (ky - PAD)) >= 0) & ((i_idx + (ky - PAD)) < NGF)
                  for ky in range(K)]
        col_ok = [((j_idx + (kx - PAD)) >= 0) & ((j_idx + (kx - PAD)) < NGF)
                  for kx in range(K)]

        def make_tap(t):
            ky, kx = divmod(t, K)
            shift = (ky - PAD) * NGF + (kx - PAD)
            rolled = ht if shift == 0 else pltpu.roll(ht, (-shift) % ncol, axis=1)
            return jnp.where(row_ok[ky] & col_ok[kx], rolled, 0.0)   # (COEF, ncol)

        # ---- build the 5x5 im2col (transposed) with 8-sublane-aligned stores ----
        npair = NTAP // 2                                  # 12 pairs -> rows 0..95
        for pr in range(npair):
            p_sc[8 * pr:8 * pr + 8, :] = jnp.concatenate(
                [make_tap(2 * pr), make_tap(2 * pr + 1)], axis=0)
        last = make_tap(NTAP - 1)                          # rows 96..99 (+ zero pad 100..103)
        p_sc[8 * npair:8 * npair + 8, :] = jnp.concatenate(
            [last, jnp.zeros_like(last)], axis=0)
        # keep padded rows 104..127 explicitly zeroed (stale VMEM could be NaN)
        p_sc[8 * npair + 8:, :] = jnp.zeros((PK - (8 * npair + 8), ncol), jnp.float32)

        # ---- stage 2: conv-as-matmul (transposed, lane-dense) + BN2d + GELU ----
        y = jnp.dot(w2_ref[...], p_sc[...],
                    preferred_element_type=jnp.float32)    # (64, nb*S)
        m2 = jnp.mean(y, axis=1, keepdims=True)
        d2 = y - m2
        v2 = jnp.mean(d2 * d2, axis=1, keepdims=True)
        yn = d2 * jax.lax.rsqrt(v2 + EPS)
        out_t = _gelu_exact(yn * g2_ref[...] + beta2_ref[...])   # (64, nb*S)

        # write channel-major per-batch slabs -> output is (B, 64, 256), no wrapper transpose
        for b in range(nb):
            o_ref[b, :, :] = out_t[:, b * S:(b + 1) * S]


def projection_forward(x, params, *, tk=None):
    """Equivalent of Projection.forward (training-mode BatchNorm), single fused kernel."""
    B = x.shape[0]
    in_dim = x.shape[1] * x.shape[2] * x.shape[3]
    x_flat = x.reshape(B, in_dim).astype(jnp.bfloat16)     # tiny; bf16 feeds the MXU

    w1 = params["linear_w"]
    if w1.dtype != jnp.bfloat16:
        w1 = w1.astype(jnp.bfloat16)

    if tk is None:
        tk = in_dim if in_dim <= 4096 else 2048            # grid=1 at this problem size
    tk = min(tk, in_dim)
    assert in_dim % tk == 0, "in_dim must be divisible by the K tile"
    nk = in_dim // tk

    # ConvTranspose2d(4,64,5,s=1,p=2,bias=False) == Conv2d(p=2) with
    # Wc[o,c,ky,kx] = Wt[c,o,4-ky,4-kx].  Pack it transposed and K-padded (100->128)
    # so the in-kernel matmul is out^T = W2 @ patches^T.
    wt = params["deconv_w"]                                # (4, 64, 5, 5)
    w_flip = wt[:, :, ::-1, ::-1]
    w_mat = jnp.transpose(w_flip, (2, 3, 0, 1)).reshape(NTAP * COEF, COUT)  # (100, 64)
    w2 = jnp.zeros((COUT, PK), jnp.float32).at[:, :NTAP * COEF].set(w_mat.T)

    g1 = params["bn1_gamma"].reshape(1, F1).astype(jnp.float32)
    beta1 = params["bn1_beta"].reshape(1, F1).astype(jnp.float32)
    g2 = params["bn2_gamma"].reshape(COUT, 1).astype(jnp.float32)
    beta2 = params["bn2_beta"].reshape(COUT, 1).astype(jnp.float32)
    # NOTE: params["linear_b"] is intentionally unused: a per-feature bias is exactly
    # cancelled by the training-mode BatchNorm1d that immediately follows the Linear.

    out = pl.pallas_call(
        projection_kernel,
        out_shape=jax.ShapeDtypeStruct((B, COUT, S), jnp.float32),
        grid=(nk,),
        in_specs=[
            pl.BlockSpec((B, tk), lambda k: (0, k)),       # x: streamed over K (bf16)
            pl.BlockSpec((tk, F1), lambda k: (k, 0)),      # W1: streamed over K (bf16, pipelined)
            pl.BlockSpec((1, F1), lambda k: (0, 0)),       # bn1 gamma (resident)
            pl.BlockSpec((1, F1), lambda k: (0, 0)),       # bn1 beta
            pl.BlockSpec((COUT, PK), lambda k: (0, 0)),    # W2 (resident)
            pl.BlockSpec((COUT, 1), lambda k: (0, 0)),     # bn2 gamma
            pl.BlockSpec((COUT, 1), lambda k: (0, 0)),     # bn2 beta
        ],
        out_specs=pl.BlockSpec((B, COUT, S), lambda k: (0, 0, 0)),
        scratch_shapes=[
            pltpu.VMEM((B, F1), jnp.float32),              # stage-1 accumulator
            pltpu.VMEM((PK, B * S), jnp.float32),          # padded im2col (transposed)
        ],
        compiler_params=pltpu.CompilerParams(
            dimension_semantics=("arbitrary",),            # reduction axis
        ),
    )(x_flat, w1, g1, beta1, w2, g2, beta2)

    # (B, 64, 256) channel-major -> NCHW (B, 64, 16, 16): pure reshape (no data movement).
    return out.reshape(B, COUT, NGF, NGF)


def init_params(key, in_dim):
    k1, k2, k3 = jax.random.split(key, 3)
    lim = 1.0 / math.sqrt(in_dim)
    lim_c = 1.0 / math.sqrt(COEF * K * K)
    return {
        # Stored pre-transposed (in_dim, out) and in bf16: the kernel is weight-DMA bound,
        # so streaming W1 at half width is the dominant lever (f32 MXU accumulation).
        "linear_w": jax.random.uniform(k1, (in_dim, F1), jnp.float32, -lim, lim
                                       ).astype(jnp.bfloat16),
        "linear_b": jax.random.uniform(k2, (F1,), jnp.float32, -lim, lim),
        "bn1_gamma": jnp.ones((F1,), jnp.float32),
        "bn1_beta": jnp.zeros((F1,), jnp.float32),
        # PyTorch ConvTranspose2d weight layout: (C_in, C_out, kH, kW)
        "deconv_w": jax.random.uniform(k3, (COEF, COUT, K, K), jnp.float32, -lim_c, lim_c),
        "bn2_gamma": jnp.ones((COUT,), jnp.float32),
        "bn2_beta": jnp.zeros((COUT,), jnp.float32),
    }


def reference_forward(x, params):
    """Pure-JAX reference (same math & same bf16 matmul operands) for a sanity check."""
    B = x.shape[0]
    xb = x.reshape(B, -1).astype(jnp.bfloat16)
    w1 = params["linear_w"].astype(jnp.bfloat16)
    h = jnp.dot(xb, w1, preferred_element_type=jnp.float32) + params["linear_b"]
    m = h.mean(0)
    v = ((h - m) ** 2).mean(0)
    h = (h - m) / jnp.sqrt(v + EPS) * params["bn1_gamma"] + params["bn1_beta"]
    h = _gelu_exact(h)
    h = h.reshape(B, COEF, NGF, NGF)
    wc = jnp.transpose(params["deconv_w"][:, :, ::-1, ::-1], (1, 0, 2, 3))  # (64,4,5,5)
    y = jax.lax.conv_general_dilated(
        h, wc, window_strides=(1, 1), padding=((2, 2), (2, 2)),
        dimension_numbers=("NCHW", "OIHW", "NCHW"))
    m2 = y.mean(axis=(0, 2, 3), keepdims=True)
    v2 = ((y - m2) ** 2).mean(axis=(0, 2, 3), keepdims=True)
    y = (y - m2) / jnp.sqrt(v2 + EPS)
    y = y * params["bn2_gamma"].reshape(1, -1, 1, 1) + params["bn2_beta"].reshape(1, -1, 1, 1)
    return _gelu_exact(y)


if __name__ == "__main__":
    key = jax.random.PRNGKey(0)
    kx_, kp = jax.random.split(key)
    B, C, H, W = 2, 4, 16, 16              # in_dim = 4*16*16 = 1024
    x = jax.random.normal(kx_, (B, C, H, W), jnp.float32)
    params = init_params(kp, C * H * W)

    fwd = jax.jit(functools.partial(projection_forward, params=params))
    out = jax.block_until_ready(fwd(x))
    assert out.shape == (B, COUT, NGF, NGF), out.shape

    ref = reference_forward(x, params)
    max_diff = float(jnp.max(jnp.abs(out - ref)))
    assert bool(jnp.allclose(out, ref, atol=1e-2, rtol=1e-2)), (
        "mismatch vs reference, max abs diff = %e" % max_diff)

    print("KERNEL_OK")
</pallas_src>

<mosaic_0001>
module attributes {stable_mosaic.version = 11 : i64} {
  func.func @projection_kernel(%arg0: i32, %arg1: memref<2x1024xbf16, #tpu.memory_space<vmem>>, %arg2: memref<1024x1024xbf16, #tpu.memory_space<vmem>>, %arg3: memref<1x1024xf32, #tpu.memory_space<vmem>>, %arg4: memref<1x1024xf32, #tpu.memory_space<vmem>>, %arg5: memref<64x128xf32, #tpu.memory_space<vmem>>, %arg6: memref<64x1xf32, #tpu.memory_space<vmem>>, %arg7: memref<64x1xf32, #tpu.memory_space<vmem>>, %arg8: memref<2x64x256xf32, #tpu.memory_space<vmem>>, %arg9: memref<2x1024xf32, #tpu.memory_space<vmem>>, %arg10: memref<128x512xf32, #tpu.memory_space<vmem>>) attributes {dimension_semantics = [#tpu.dimension_semantics<arbitrary>], iteration_bounds = array<i64: 1>, scalar_prefetch = 0 : i64, scratch_operands = 2 : i64, tpu.core_type = #tpu.core_type<tc>, window_params = [{transform_indices = @transform_0, window_bounds = array<i64: 2, 1024>}, {transform_indices = @transform_1, window_bounds = array<i64: 1024, 1024>}, {pipeline_mode = #tpu.pipeline_mode<synchronous>, transform_indices = @transform_2, window_bounds = array<i64: 1, 1024>}, {pipeline_mode = #tpu.pipeline_mode<synchronous>, transform_indices = @transform_3, window_bounds = array<i64: 1, 1024>}, {pipeline_mode = #tpu.pipeline_mode<synchronous>, transform_indices = @transform_4, window_bounds = array<i64: 64, 128>}, {pipeline_mode = #tpu.pipeline_mode<synchronous>, transform_indices = @transform_5, window_bounds = array<i64: 64, 1>}, {pipeline_mode = #tpu.pipeline_mode<synchronous>, transform_indices = @transform_6, window_bounds = array<i64: 64, 1>}, {pipeline_mode = #tpu.pipeline_mode<synchronous>, transform_indices = @transform_7, window_bounds = array<i64: 2, 64, 256>}]} {
    %c0_i32 = arith.constant 0 : i32
    %0 = arith.cmpi eq, %arg0, %c0_i32 : i32
    %1 = arith.extui %0 : i1 to i32
    %c0_i32_0 = arith.constant 0 : i32
    %2 = arith.cmpi ne, %1, %c0_i32_0 : i32
    scf.if %2 {
      %cst_10 = arith.constant 0.000000e+00 : f32
      %12 = vector.broadcast %cst_10 : f32 to vector<2x1024xf32>
      %c0_11 = arith.constant 0 : index
      %c0_12 = arith.constant 0 : index
      %13 = vector.load %arg9[%c0_11, %c0_12] : memref<2x1024xf32, #tpu.memory_space<vmem>>, vector<2x1024xf32>
      tpu.vector_store %arg9[%c0_11, %c0_12], %12 {strides = array<i32>} : memref<2x1024xf32, #tpu.memory_space<vmem>>, vector<2x1024xf32>,
    } else {
    }
    %c0 = arith.constant 0 : index
    %c0_1 = arith.constant 0 : index
    %3 = vector.load %arg9[%c0, %c0_1] : memref<2x1024xf32, #tpu.memory_space<vmem>>, vector<2x1024xf32>
    %c0_2 = arith.constant 0 : index
    %c0_3 = arith.constant 0 : index
    %4 = vector.load %arg1[%c0_2, %c0_3] : memref<2x1024xbf16, #tpu.memory_space<vmem>>, vector<2x1024xbf16>
    %c0_4 = arith.constant 0 : index
    %c0_5 = arith.constant 0 : index
    %5 = vector.load %arg2[%c0_4, %c0_5] : memref<1024x1024xbf16, #tpu.memory_space<vmem>>, vector<1024x1024xbf16>
    %cst = arith.constant dense<0.000000e+00> : vector<2x1024xf32>
    %6 = tpu.matmul %4, %5, %cst {dimension_numbers = #tpu.dot_dimension_numbers<[1], [0], [0], [1], [0, 0, 1, 1], [], []>} : vector<2x1024xbf16>, vector<1024x1024xbf16>, vector<2x1024xf32> -> vector<2x1024xf32>
    %7 = arith.addf %3, %6 : vector<2x1024xf32>
    %c0_6 = arith.constant 0 : index
    %c0_7 = arith.constant 0 : index
    %8 = vector.load %arg9[%c0_6, %c0_7] : memref<2x1024xf32, #tpu.memory_space<vmem>>, vector<2x1024xf32>
    tpu.vector_store %arg9[%c0_6, %c0_7], %7 {strides = array<i32>} : memref<2x1024xf32, #tpu.memory_space<vmem>>, vector<2x1024xf32>,
    %c0_i32_8 = arith.constant 0 : i32
    %9 = arith.cmpi eq, %arg0, %c0_i32_8 : i32
    %10 = arith.extui %9 : i1 to i32
    %c0_i32_9 = arith.constant 0 : i32
    %11 = arith.cmpi ne, %10, %c0_i32_9 : i32
    scf.if %11 {
      %c0_10 = arith.constant 0 : index
      %c0_11 = arith.constant 0 : index
      %12 = vector.load %arg9[%c0_10, %c0_11] : memref<2x1024xf32, #tpu.memory_space<vmem>>, vector<2x1024xf32>
      %cst_12 = arith.constant dense<0.000000e+00> : vector<1024xf32>
      %13 = vector.multi_reduction <add>, %12, %cst_12 [0] : vector<2x1024xf32> to vector<1024xf32>
      %14 = vector.shape_cast %13 : vector<1024xf32> to vector<1x1024xf32>
      %cst_13 = arith.constant 2.000000e+00 : f32
      %15 = vector.broadcast %cst_13 : f32 to vector<1x1024xf32>
      %16 = arith.divf %14, %15 : vector<1x1024xf32>
      %17 = vector.broadcast %16 : vector<1x1024xf32> to vector<2x1024xf32>
      %18 = arith.subf %12, %17 : vector<2x1024xf32>
      %19 = arith.mulf %18, %18 : vector<2x1024xf32>
      %cst_14 = arith.constant dense<0.000000e+00> : vector<1024xf32>
      %20 = vector.multi_reduction <add>, %19, %cst_14 [0] : vector<2x1024xf32> to vector<1024xf32>
      %21 = vector.shape_cast %20 : vector<1024xf32> to vector<1x1024xf32>
      %cst_15 = arith.constant 2.000000e+00 : f32
      %22 = vector.broadcast %cst_15 : f32 to vector<1x1024xf32>
      %23 = arith.divf %21, %22 : vector<1x1024xf32>
      %cst_16 = arith.constant 9.99999974E-6 : f32
      %24 = vector.broadcast %cst_16 : f32 to vector<1x1024xf32>
      %25 = arith.addf %23, %24 : vector<1x1024xf32>
      %26 = math.rsqrt %25 : vector<1x1024xf32>
      %27 = vector.broadcast %26 : vector<1x1024xf32> to vector<2x1024xf32>
      %28 = arith.mulf %18, %27 : vector<2x1024xf32>
      %c0_17 = arith.constant 0 : index
      %c0_18 = arith.constant 0 : index
      %29 = vector.load %arg3[%c0_17, %c0_18] : memref<1x1024xf32, #tpu.memory_space<vmem>>, vector<1x1024xf32>
      %30 = vector.broadcast %29 : vector<1x1024xf32> to vector<2x1024xf32>
      %31 = arith.mulf %28, %30 : vector<2x1024xf32>
      %c0_19 = arith.constant 0 : index
      %c0_20 = arith.constant 0 : index
      %32 = vector.load %arg4[%c0_19, %c0_20] : memref<1x1024xf32, #tpu.memory_space<vmem>>, vector<1x1024xf32>
      %33 = vector.broadcast %32 : vector<1x1024xf32> to vector<2x1024xf32>
      %34 = arith.addf %31, %33 : vector<2x1024xf32>
      %cst_21 = arith.constant 5.000000e-01 : f32
      %35 = vector.broadcast %cst_21 : f32 to vector<2x1024xf32>
      %36 = arith.mulf %35, %34 : vector<2x1024xf32>
      %cst_22 = arith.constant 0.707106769 : f32
      %37 = vector.broadcast %cst_22 : f32 to vector<2x1024xf32>
      %38 = arith.mulf %34, %37 : vector<2x1024xf32>
      %39 = math.erf %38 : vector<2x1024xf32>
      %cst_23 = arith.constant 1.000000e+00 : f32
      %40 = vector.broadcast %cst_23 : f32 to vector<2x1024xf32>
      %41 = arith.addf %40, %39 : vector<2x1024xf32>
      %42 = arith.mulf %36, %41 : vector<2x1024xf32>
      %43 = vector.extract_strided_slice %42 {offsets = [0, 0], sizes = [1, 256], strides = [1, 1]} : vector<2x1024xf32> to vector<1x256xf32>
      %44 = vector.extract_strided_slice %42 {offsets = [1, 0], sizes = [1, 256], strides = [1, 1]} : vector<2x1024xf32> to vector<1x256xf32>
      %45 = tpu.concatenate %43, %44 in 1 : vector<1x256xf32>, vector<1x256xf32> -> vector<1x512xf32>
      %46 = vector.extract_strided_slice %42 {offsets = [0, 256], sizes = [1, 256], strides = [1, 1]} : vector<2x1024xf32> to vector<1x256xf32>
      %47 = vector.extract_strided_slice %42 {offsets = [1, 256], sizes = [1, 256], strides = [1, 1]} : vector<2x1024xf32> to vector<1x256xf32>
      %48 = tpu.concatenate %46, %47 in 1 : vector<1x256xf32>, vector<1x256xf32> -> vector<1x512xf32>
      %49 = vector.extract_strided_slice %42 {offsets = [0, 512], sizes = [1, 256], strides = [1, 1]} : vector<2x1024xf32> to vector<1x256xf32>
      %50 = vector.extract_strided_slice %42 {offsets = [1, 512], sizes = [1, 256], strides = [1, 1]} : vector<2x1024xf32> to vector<1x256xf32>
      %51 = tpu.concatenate %49, %50 in 1 : vector<1x256xf32>, vector<1x256xf32> -> vector<1x512xf32>
      %52 = vector.extract_strided_slice %42 {offsets = [0, 768], sizes = [1, 256], strides = [1, 1]} : vector<2x1024xf32> to vector<1x256xf32>
      %53 = vector.extract_strided_slice %42 {offsets = [1, 768], sizes = [1, 256], strides = [1, 1]} : vector<2x1024xf32> to vector<1x256xf32>
      %54 = tpu.concatenate %52, %53 in 1 : vector<1x256xf32>, vector<1x256xf32> -> vector<1x512xf32>
      %55 = tpu.concatenate %45, %48, %51, %54 in 0 : vector<1x512xf32>, vector<1x512xf32>, vector<1x512xf32>, vector<1x512xf32> -> vector<4x512xf32>
      %56 = tpu.iota {dimensions = array<i32: 1>} : vector<4x512xi32>
      %c4_i32 = arith.constant 4 : i32
      %57 = vector.broadcast %c4_i32 : i32 to vector<4x512xi32>
      %58 = arith.shrsi %56, %57 : vector<4x512xi32>
      %c15_i32 = arith.constant 15 : i32
      %59 = vector.broadcast %c15_i32 : i32 to vector<4x512xi32>
      %60 = arith.andi %58, %59 : vector<4x512xi32>
      %c15_i32_24 = arith.constant 15 : i32
      %61 = vector.broadcast %c15_i32_24 : i32 to vector<4x512xi32>
      %62 = arith.andi %56, %61 : vector<4x512xi32>
      %c-2_i32 = arith.constant -2 : i32
      %63 = vector.broadcast %c-2_i32 : i32 to vector<4x512xi32>
      %64 = arith.addi %60, %63 : vector<4x512xi32>
      %c0_i32_25 = arith.constant 0 : i32
      %65 = vector.broadcast %c0_i32_25 : i32 to vector<4x512xi32>
      %66 = arith.cmpi sge, %64, %65 : vector<4x512xi32>
      %c-2_i32_26 = arith.constant -2 : i32
      %67 = vector.broadcast %c-2_i32_26 : i32 to vector<4x512xi32>
      %68 = arith.addi %60, %67 : vector<4x512xi32>
      %c16_i32 = arith.constant 16 : i32
      %69 = vector.broadcast %c16_i32 : i32 to vector<4x512xi32>
      %70 = arith.cmpi slt, %68, %69 : vector<4x512xi32>
      %71 = arith.andi %66, %70 : vector<4x512xi1>
      %c-1_i32 = arith.constant -1 : i32
      %72 = vector.broadcast %c-1_i32 : i32 to vector<4x512xi32>
      %73 = arith.addi %60, %72 : vector<4x512xi32>
      %c0_i32_27 = arith.constant 0 : i32
      %74 = vector.broadcast %c0_i32_27 : i32 to vector<4x512xi32>
      %75 = arith.cmpi sge, %73, %74 : vector<4x512xi32>
      %c-1_i32_28 = arith.constant -1 : i32
      %76 = vector.broadcast %c-1_i32_28 : i32 to vector<4x512xi32>
      %77 = arith.addi %60, %76 : vector<4x512xi32>
      %c16_i32_29 = arith.constant 16 : i32
      %78 = vector.broadcast %c16_i32_29 : i32 to vector<4x512xi32>
      %79 = arith.cmpi slt, %77, %78 : vector<4x512xi32>
      %80 = arith.andi %75, %79 : vector<4x512xi1>
      %c0_i32_30 = arith.constant 0 : i32
      %81 = vector.broadcast %c0_i32_30 : i32 to vector<4x512xi32>
      %82 = arith.addi %60, %81 : vector<4x512xi32>
      %c0_i32_31 = arith.constant 0 : i32
      %83 = vector.broadcast %c0_i32_31 : i32 to vector<4x512xi32>
      %84 = arith.cmpi sge, %82, %83 : vector<4x512xi32>
      %c0_i32_32 = arith.constant 0 : i32
      %85 = vector.broadcast %c0_i32_32 : i32 to vector<4x512xi32>
      %86 = arith.addi %60, %85 : vector<4x512xi32>
      %c16_i32_33 = arith.constant 16 : i32
      %87 = vector.broadcast %c16_i32_33 : i32 to vector<4x512xi32>
      %88 = arith.cmpi slt, %86, %87 : vector<4x512xi32>
      %89 = arith.andi %84, %88 : vector<4x512xi1>
      %c1_i32 = arith.constant 1 : i32
      %90 = vector.broadcast %c1_i32 : i32 to vector<4x512xi32>
      %91 = arith.addi %60, %90 : vector<4x512xi32>
      %c0_i32_34 = arith.constant 0 : i32
      %92 = vector.broadcast %c0_i32_34 : i32 to vector<4x512xi32>
      %93 = arith.cmpi sge, %91, %92 : vector<4x512xi32>
      %c1_i32_35 = arith.constant 1 : i32
      %94 = vector.broadcast %c1_i32_35 : i32 to vector<4x512xi32>
      %95 = arith.addi %60, %94 : vector<4x512xi32>
      %c16_i32_36 = arith.constant 16 : i32
      %96 = vector.broadcast %c16_i32_36 : i32 to vector<4x512xi32>
      %97 = arith.cmpi slt, %95, %96 : vector<4x512xi32>
      %98 = arith.andi %93, %97 : vector<4x512xi1>
      %c2_i32 = arith.constant 2 : i32
      %99 = vector.broadcast %c2_i32 : i32 to vector<4x512xi32>
      %100 = arith.addi %60, %99 : vector<4x512xi32>
      %c0_i32_37 = arith.constant 0 : i32
      %101 = vector.broadcast %c0_i32_37 : i32 to vector<4x512xi32>
      %102 = arith.cmpi sge, %100, %101 : vector<4x512xi32>
      %c2_i32_38 = arith.constant 2 : i32
      %103 = vector.broadcast %c2_i32_38 : i32 to vector<4x512xi32>
      %104 = arith.addi %60, %103 : vector<4x512xi32>
      %c16_i32_39 = arith.constant 16 : i32
      %105 = vector.broadcast %c16_i32_39 : i32 to vector<4x512xi32>
      %106 = arith.cmpi slt, %104, %105 : vector<4x512xi32>
      %107 = arith.andi %102, %106 : vector<4x512xi1>
      %c-2_i32_40 = arith.constant -2 : i32
      %108 = vector.broadcast %c-2_i32_40 : i32 to vector<4x512xi32>
      %109 = arith.addi %62, %108 : vector<4x512xi32>
      %c0_i32_41 = arith.constant 0 : i32
      %110 = vector.broadcast %c0_i32_41 : i32 to vector<4x512xi32>
      %111 = arith.cmpi sge, %109, %110 : vector<4x512xi32>
      %c-2_i32_42 = arith.constant -2 : i32
      %112 = vector.broadcast %c-2_i32_42 : i32 to vector<4x512xi32>
      %113 = arith.addi %62, %112 : vector<4x512xi32>
      %c16_i32_43 = arith.constant 16 : i32
      %114 = vector.broadcast %c16_i32_43 : i32 to vector<4x512xi32>
      %115 = arith.cmpi slt, %113, %114 : vector<4x512xi32>
      %116 = arith.andi %111, %115 : vector<4x512xi1>
      %c-1_i32_44 = arith.constant -1 : i32
      %117 = vector.broadcast %c-1_i32_44 : i32 to vector<4x512xi32>
      %118 = arith.addi %62, %117 : vector<4x512xi32>
      %c0_i32_45 = arith.constant 0 : i32
      %119 = vector.broadcast %c0_i32_45 : i32 to vector<4x512xi32>
      %120 = arith.cmpi sge, %118, %119 : vector<4x512xi32>
      %c-1_i32_46 = arith.constant -1 : i32
      %121 = vector.broadcast %c-1_i32_46 : i32 to vector<4x512xi32>
      %122 = arith.addi %62, %121 : vector<4x512xi32>
      %c16_i32_47 = arith.constant 16 : i32
      %123 = vector.broadcast %c16_i32_47 : i32 to vector<4x512xi32>
      %124 = arith.cmpi slt, %122, %123 : vector<4x512xi32>
      %125 = arith.andi %120, %124 : vector<4x512xi1>
      %c0_i32_48 = arith.constant 0 : i32
      %126 = vector.broadcast %c0_i32_48 : i32 to vector<4x512xi32>
      %127 = arith.addi %62, %126 : vector<4x512xi32>
      %c0_i32_49 = arith.constant 0 : i32
      %128 = vector.broadcast %c0_i32_49 : i32 to vector<4x512xi32>
      %129 = arith.cmpi sge, %127, %128 : vector<4x512xi32>
      %c0_i32_50 = arith.constant 0 : i32
      %130 = vector.broadcast %c0_i32_50 : i32 to vector<4x512xi32>
      %131 = arith.addi %62, %130 : vector<4x512xi32>
      %c16_i32_51 = arith.constant 16 : i32
      %132 = vector.broadcast %c16_i32_51 : i32 to vector<4x512xi32>
      %133 = arith.cmpi slt, %131, %132 : vector<4x512xi32>
      %134 = arith.andi %129, %133 : vector<4x512xi1>
      %c1_i32_52 = arith.constant 1 : i32
      %135 = vector.broadcast %c1_i32_52 : i32 to vector<4x512xi32>
      %136 = arith.addi %62, %135 : vector<4x512xi32>
      %c0_i32_53 = arith.constant 0 : i32
      %137 = vector.broadcast %c0_i32_53 : i32 to vector<4x512xi32>
      %138 = arith.cmpi sge, %136, %137 : vector<4x512xi32>
      %c1_i32_54 = arith.constant 1 : i32
      %139 = vector.broadcast %c1_i32_54 : i32 to vector<4x512xi32>
      %140 = arith.addi %62, %139 : vector<4x512xi32>
      %c16_i32_55 = arith.constant 16 : i32
      %141 = vector.broadcast %c16_i32_55 : i32 to vector<4x512xi32>
      %142 = arith.cmpi slt, %140, %141 : vector<4x512xi32>
      %143 = arith.andi %138, %142 : vector<4x512xi1>
      %c2_i32_56 = arith.constant 2 : i32
      %144 = vector.broadcast %c2_i32_56 : i32 to vector<4x512xi32>
      %145 = arith.addi %62, %144 : vector<4x512xi32>
      %c0_i32_57 = arith.constant 0 : i32
      %146 = vector.broadcast %c0_i32_57 : i32 to vector<4x512xi32>
      %147 = arith.cmpi sge, %145, %146 : vector<4x512xi32>
      %c2_i32_58 = arith.constant 2 : i32
      %148 = vector.broadcast %c2_i32_58 : i32 to vector<4x512xi32>
      %149 = arith.addi %62, %148 : vector<4x512xi32>
      %c16_i32_59 = arith.constant 16 : i32
      %150 = vector.broadcast %c16_i32_59 : i32 to vector<4x512xi32>
      %151 = arith.cmpi slt, %149, %150 : vector<4x512xi32>
      %152 = arith.andi %147, %151 : vector<4x512xi1>
      %c34_i32 = arith.constant 34 : i32
      %153 = tpu.dynamic_rotate %55 by %c34_i32 dim 1 : vector<4x512xf32>, i32 -> vector<4x512xf32>
      %154 = arith.andi %71, %116 : vector<4x512xi1>
      %cst_60 = arith.constant 0.000000e+00 : f32
      %155 = vector.broadcast %cst_60 : f32 to vector<4x512xf32>
      %156 = arith.select %154, %153, %155 : vector<4x512xi1>, vector<4x512xf32>
      %c33_i32 = arith.constant 33 : i32
      %157 = tpu.dynamic_rotate %55 by %c33_i32 dim 1 : vector<4x512xf32>, i32 -> vector<4x512xf32>
      %158 = arith.andi %71, %125 : vector<4x512xi1>
      %cst_61 = arith.constant 0.000000e+00 : f32
      %159 = vector.broadcast %cst_61 : f32 to vector<4x512xf32>
      %160 = arith.select %158, %157, %159 : vector<4x512xi1>, vector<4x512xf32>
      %161 = tpu.concatenate %156, %160 in 0 : vector<4x512xf32>, vector<4x512xf32> -> vector<8x512xf32>
      %c0_62 = arith.constant 0 : index
      %c0_63 = arith.constant 0 : index
      %162 = vector.load %arg10[%c0_62, %c0_63] : memref<128x512xf32, #tpu.memory_space<vmem>>, vector<8x512xf32>
      tpu.vector_store %arg10[%c0_62, %c0_63], %161 {strides = array<i32>} : memref<128x512xf32, #tpu.memory_space<vmem>>, vector<8x512xf32>,
      %c32_i32 = arith.constant 32 : i32
      %163 = tpu.dynamic_rotate %55 by %c32_i32 dim 1 : vector<4x512xf32>, i32 -> vector<4x512xf32>
      %164 = arith.andi %71, %134 : vector<4x512xi1>
      %cst_64 = arith.constant 0.000000e+00 : f32
      %165 = vector.broadcast %cst_64 : f32 to vector<4x512xf32>
      %166 = arith.select %164, %163, %165 : vector<4x512xi1>, vector<4x512xf32>
      %c31_i32 = arith.constant 31 : i32
      %167 = tpu.dynamic_rotate %55 by %c31_i32 dim 1 : vector<4x512xf32>, i32 -> vector<4x512xf32>
      %168 = arith.andi %71, %143 : vector<4x512xi1>
      %cst_65 = arith.constant 0.000000e+00 : f32
      %169 = vector.broadcast %cst_65 : f32 to vector<4x512xf32>
      %170 = arith.select %168, %167, %169 : vector<4x512xi1>, vector<4x512xf32>
      %171 = tpu.concatenate %166, %170 in 0 : vector<4x512xf32>, vector<4x512xf32> -> vector<8x512xf32>
      %c8 = arith.constant 8 : index
      %c0_66 = arith.constant 0 : index
      %172 = vector.load %arg10[%c8, %c0_66] : memref<128x512xf32, #tpu.memory_space<vmem>>, vector<8x512xf32>
      tpu.vector_store %arg10[%c8, %c0_66], %171 {strides = array<i32>} : memref<128x512xf32, #tpu.memory_space<vmem>>, vector<8x512xf32>,
      %c30_i32 = arith.constant 30 : i32
      %173 = tpu.dynamic_rotate %55 by %c30_i32 dim 1 : vector<4x512xf32>, i32 -> vector<4x512xf32>
      %174 = arith.andi %71, %152 : vector<4x512xi1>
      %cst_67 = arith.constant 0.000000e+00 : f32
      %175 = vector.broadcast %cst_67 : f32 to vector<4x512xf32>
      %176 = arith.select %174, %173, %175 : vector<4x512xi1>, vector<4x512xf32>
      %c18_i32 = arith.constant 18 : i32
      %177 = tpu.dynamic_rotate %55 by %c18_i32 dim 1 : vector<4x512xf32>, i32 -> vector<4x512xf32>
      %178 = arith.andi %80, %116 : vector<4x512xi1>
      %cst_68 = arith.constant 0.000000e+00 : f32
      %179 = vector.broadcast %cst_68 : f32 to vector<4x512xf32>
      %180 = arith.select %178, %177, %179 : vector<4x512xi1>, vector<4x512xf32>
      %181 = tpu.concatenate %176, %180 in 0 : vector<4x512xf32>, vector<4x512xf32> -> vector<8x512xf32>
      %c16 = arith.constant 16 : index
      %c0_69 = arith.constant 0 : index
      %182 = vector.load %arg10[%c16, %c0_69] : memref<128x512xf32, #tpu.memory_space<vmem>>, vector<8x512xf32>
      tpu.vector_store %arg10[%c16, %c0_69], %181 {strides = array<i32>} : memref<128x512xf32, #tpu.memory_space<vmem>>, vector<8x512xf32>,
      %c17_i32 = arith.constant 17 : i32
      %183 = tpu.dynamic_rotate %55 by %c17_i32 dim 1 : vector<4x512xf32>, i32 -> vector<4x512xf32>
      %184 = arith.andi %80, %125 : vector<4x512xi1>
      %cst_70 = arith.constant 0.000000e+00 : f32
      %185 = vector.broadcast %cst_70 : f32 to vector<4x512xf32>
      %186 = arith.select %184, %183, %185 : vector<4x512xi1>, vector<4x512xf32>
      %c16_i32_71 = arith.constant 16 : i32
      %187 = tpu.dynamic_rotate %55 by %c16_i32_71 dim 1 : vector<4x512xf32>, i32 -> vector<4x512xf32>
      %188 = arith.andi %80, %134 : vector<4x512xi1>
      %cst_72 = arith.constant 0.000000e+00 : f32
      %189 = vector.broadcast %cst_72 : f32 to vector<4x512xf32>
      %190 = arith.select %188, %187, %189 : vector<4x512xi1>, vector<4x512xf32>
      %191 = tpu.concatenate %186, %190 in 0 : vector<4x512xf32>, vector<4x512xf32> -> vector<8x512xf32>
      %c24 = arith.constant 24 : index
      %c0_73 = arith.constant 0 : index
      %192 = vector.load %arg10[%c24, %c0_73] : memref<128x512xf32, #tpu.memory_space<vmem>>, vector<8x512xf32>
      tpu.vector_store %arg10[%c24, %c0_73], %191 {strides = array<i32>} : memref<128x512xf32, #tpu.memory_space<vmem>>, vector<8x512xf32>,
      %c15_i32_74 = arith.constant 15 : i32
      %193 = tpu.dynamic_rotate %55 by %c15_i32_74 dim 1 : vector<4x512xf32>, i32 -> vector<4x512xf32>
      %194 = arith.andi %80, %143 : vector<4x512xi1>
      %cst_75 = arith.constant 0.000000e+00 : f32
      %195 = vector.broadcast %cst_75 : f32 to vector<4x512xf32>
      %196 = arith.select %194, %193, %195 : vector<4x512xi1>, vector<4x512xf32>
      %c14_i32 = arith.constant 14 : i32
      %197 = tpu.dynamic_rotate %55 by %c14_i32 dim 1 : vector<4x512xf32>, i32 -> vector<4x512xf32>
      %198 = arith.andi %80, %152 : vector<4x512xi1>
      %cst_76 = arith.constant 0.000000e+00 : f32
      %199 = vector.broadcast %cst_76 : f32 to vector<4x512xf32>
      %200 = arith.select %198, %197, %199 : vector<4x512xi1>, vector<4x512xf32>
      %201 = tpu.concatenate %196, %200 in 0 : vector<4x512xf32>, vector<4x512xf32> -> vector<8x512xf32>
      %c32 = arith.constant 32 : index
      %c0_77 = arith.constant 0 : index
      %202 = vector.load %arg10[%c32, %c0_77] : memref<128x512xf32, #tpu.memory_space<vmem>>, vector<8x512xf32>
      tpu.vector_store %arg10[%c32, %c0_77], %201 {strides = array<i32>} : memref<128x512xf32, #tpu.memory_space<vmem>>, vector<8x512xf32>,
      %c2_i32_78 = arith.constant 2 : i32
      %203 = tpu.dynamic_rotate %55 by %c2_i32_78 dim 1 : vector<4x512xf32>, i32 -> vector<4x512xf32>
      %204 = arith.andi %89, %116 : vector<4x512xi1>
      %cst_79 = arith.constant 0.000000e+00 : f32
      %205 = vector.broadcast %cst_79 : f32 to vector<4x512xf32>
      %206 = arith.select %204, %203, %205 : vector<4x512xi1>, vector<4x512xf32>
      %c1_i32_80 = arith.constant 1 : i32
      %207 = tpu.dynamic_rotate %55 by %c1_i32_80 dim 1 : vector<4x512xf32>, i32 -> vector<4x512xf32>
      %208 = arith.andi %89, %125 : vector<4x512xi1>
      %cst_81 = arith.constant 0.000000e+00 : f32
      %209 = vector.broadcast %cst_81 : f32 to vector<4x512xf32>
      %210 = arith.select %208, %207, %209 : vector<4x512xi1>, vector<4x512xf32>
      %211 = tpu.concatenate %206, %210 in 0 : vector<4x512xf32>, vector<4x512xf32> -> vector<8x512xf32>
      %c40 = arith.constant 40 : index
      %c0_82 = arith.constant 0 : index
      %212 = vector.load %arg10[%c40, %c0_82] : memref<128x512xf32, #tpu.memory_space<vmem>>, vector<8x512xf32>
      tpu.vector_store %arg10[%c40, %c0_82], %211 {strides = array<i32>} : memref<128x512xf32, #tpu.memory_space<vmem>>, vector<8x512xf32>,
      %213 = arith.andi %89, %134 : vector<4x512xi1>
      %cst_83 = arith.constant 0.000000e+00 : f32
      %214 = vector.broadcast %cst_83 : f32 to vector<4x512xf32>
      %215 = arith.select %213, %55, %214 : vector<4x512xi1>, vector<4x512xf32>
      %c511_i32 = arith.constant 511 : i32
      %216 = tpu.dynamic_rotate %55 by %c511_i32 dim 1 : vector<4x512xf32>, i32 -> vector<4x512xf32>
      %217 = arith.andi %89, %143 : vector<4x512xi1>
      %cst_84 = arith.constant 0.000000e+00 : f32
      %218 = vector.broadcast %cst_84 : f32 to vector<4x512xf32>
      %219 = arith.select %217, %216, %218 : vector<4x512xi1>, vector<4x512xf32>
      %220 = tpu.concatenate %215, %219 in 0 : vector<4x512xf32>, vector<4x512xf32> -> vector<8x512xf32>
      %c48 = arith.constant 48 : index
      %c0_85 = arith.constant 0 : index
      %221 = vector.load %arg10[%c48, %c0_85] : memref<128x512xf32, #tpu.memory_space<vmem>>, vector<8x512xf32>
      tpu.vector_store %arg10[%c48, %c0_85], %220 {strides = array<i32>} : memref<128x512xf32, #tpu.memory_space<vmem>>, vector<8x512xf32>,
      %c510_i32 = arith.constant 510 : i32
      %222 = tpu.dynamic_rotate %55 by %c510_i32 dim 1 : vector<4x512xf32>, i32 -> vector<4x512xf32>
      %223 = arith.andi %89, %152 : vector<4x512xi1>
      %cst_86 = arith.constant 0.000000e+00 : f32
      %224 = vector.broadcast %cst_86 : f32 to vector<4x512xf32>
      %225 = arith.select %223, %222, %224 : vector<4x512xi1>, vector<4x512xf32>
      %c498_i32 = arith.constant 498 : i32
      %226 = tpu.dynamic_rotate %55 by %c498_i32 dim 1 : vector<4x512xf32>, i32 -> vector<4x512xf32>
      %227 = arith.andi %98, %116 : vector<4x512xi1>
      %cst_87 = arith.constant 0.000000e+00 : f32
      %228 = vector.broadcast %cst_87 : f32 to vector<4x512xf32>
      %229 = arith.select %227, %226, %228 : vector<4x512xi1>, vector<4x512xf32>
      %230 = tpu.concatenate %225, %229 in 0 : vector<4x512xf32>, vector<4x512xf32> -> vector<8x512xf32>
      %c56 = arith.constant 56 : index
      %c0_88 = arith.constant 0 : index
      %231 = vector.load %arg10[%c56, %c0_88] : memref<128x512xf32, #tpu.memory_space<vmem>>, vector<8x512xf32>
      tpu.vector_store %arg10[%c56, %c0_88], %230 {strides = array<i32>} : memref<128x512xf32, #tpu.memory_space<vmem>>, vector<8x512xf32>,
      %c497_i32 = arith.constant 497 : i32
      %232 = tpu.dynamic_rotate %55 by %c497_i32 dim 1 : vector<4x512xf32>, i32 -> vector<4x512xf32>
      %233 = arith.andi %98, %125 : vector<4x512xi1>
      %cst_89 = arith.constant 0.000000e+00 : f32
      %234 = vector.broadcast %cst_89 : f32 to vector<4x512xf32>
      %235 = arith.select %233, %232, %234 : vector<4x512xi1>, vector<4x512xf32>
      %c496_i32 = arith.constant 496 : i32
      %236 = tpu.dynamic_rotate %55 by %c496_i32 dim 1 : vector<4x512xf32>, i32 -> vector<4x512xf32>
      %237 = arith.andi %98, %134 : vector<4x512xi1>
      %cst_90 = arith.constant 0.000000e+00 : f32
      %238 = vector.broadcast %cst_90 : f32 to vector<4x512xf32>
      %239 = arith.select %237, %236, %238 : vector<4x512xi1>, vector<4x512xf32>
      %240 = tpu.concatenate %235, %239 in 0 : vector<4x512xf32>, vector<4x512xf32> -> vector<8x512xf32>
      %c64 = arith.constant 64 : index
      %c0_91 = arith.constant 0 : index
      %241 = vector.load %arg10[%c64, %c0_91] : memref<128x512xf32, #tpu.memory_space<vmem>>, vector<8x512xf32>
      tpu.vector_store %arg10[%c64, %c0_91], %240 {strides = array<i32>} : memref<128x512xf32, #tpu.memory_space<vmem>>, vector<8x512xf32>,
      %c495_i32 = arith.constant 495 : i32
      %242 = tpu.dynamic_rotate %55 by %c495_i32 dim 1 : vector<4x512xf32>, i32 -> vector<4x512xf32>
      %243 = arith.andi %98, %143 : vector<4x512xi1>
      %cst_92 = arith.constant 0.000000e+00 : f32
      %244 = vector.broadcast %cst_92 : f32 to vector<4x512xf32>
      %245 = arith.select %243, %242, %244 : vector<4x512xi1>, vector<4x512xf32>
      %c494_i32 = arith.constant 494 : i32
      %246 = tpu.dynamic_rotate %55 by %c494_i32 dim 1 : vector<4x512xf32>, i32 -> vector<4x512xf32>
      %247 = arith.andi %98, %152 : vector<4x512xi1>
      %cst_93 = arith.constant 0.000000e+00 : f32
      %248 = vector.broadcast %cst_93 : f32 to vector<4x512xf32>
      %249 = arith.select %247, %246, %248 : vector<4x512xi1>, vector<4x512xf32>
      %250 = tpu.concatenate %245, %249 in 0 : vector<4x512xf32>, vector<4x512xf32> -> vector<8x512xf32>
      %c72 = arith.constant 72 : index
      %c0_94 = arith.constant 0 : index
      %251 = vector.load %arg10[%c72, %c0_94] : memref<128x512xf32, #tpu.memory_space<vmem>>, vector<8x512xf32>
      tpu.vector_store %arg10[%c72, %c0_94], %250 {strides = array<i32>} : memref<128x512xf32, #tpu.memory_space<vmem>>, vector<8x512xf32>,
      %c482_i32 = arith.constant 482 : i32
      %252 = tpu.dynamic_rotate %55 by %c482_i32 dim 1 : vector<4x512xf32>, i32 -> vector<4x512xf32>
      %253 = arith.andi %107, %116 : vector<4x512xi1>
      %cst_95 = arith.constant 0.000000e+00 : f32
      %254 = vector.broadcast %cst_95 : f32 to vector<4x512xf32>
      %255 = arith.select %253, %252, %254 : vector<4x512xi1>, vector<4x512xf32>
      %c481_i32 = arith.constant 481 : i32
      %256 = tpu.dynamic_rotate %55 by %c481_i32 dim 1 : vector<4x512xf32>, i32 -> vector<4x512xf32>
      %257 = arith.andi %107, %125 : vector<4x512xi1>
      %cst_96 = arith.constant 0.000000e+00 : f32
      %258 = vector.broadcast %cst_96 : f32 to vector<4x512xf32>
      %259 = arith.select %257, %256, %258 : vector<4x512xi1>, vector<4x512xf32>
      %260 = tpu.concatenate %255, %259 in 0 : vector<4x512xf32>, vector<4x512xf32> -> vector<8x512xf32>
      %c80 = arith.constant 80 : index
      %c0_97 = arith.constant 0 : index
      %261 = vector.load %arg10[%c80, %c0_97] : memref<128x512xf32, #tpu.memory_space<vmem>>, vector<8x512xf32>
      tpu.vector_store %arg10[%c80, %c0_97], %260 {strides = array<i32>} : memref<128x512xf32, #tpu.memory_space<vmem>>, vector<8x512xf32>,
      %c480_i32 = arith.constant 480 : i32
      %262 = tpu.dynamic_rotate %55 by %c480_i32 dim 1 : vector<4x512xf32>, i32 -> vector<4x512xf32>
      %263 = arith.andi %107, %134 : vector<4x512xi1>
      %cst_98 = arith.constant 0.000000e+00 : f32
      %264 = vector.broadcast %cst_98 : f32 to vector<4x512xf32>
      %265 = arith.select %263, %262, %264 : vector<4x512xi1>, vector<4x512xf32>
      %c479_i32 = arith.constant 479 : i32
      %266 = tpu.dynamic_rotate %55 by %c479_i32 dim 1 : vector<4x512xf32>, i32 -> vector<4x512xf32>
      %267 = arith.andi %107, %143 : vector<4x512xi1>
      %cst_99 = arith.constant 0.000000e+00 : f32
      %268 = vector.broadcast %cst_99 : f32 to vector<4x512xf32>
      %269 = arith.select %267, %266, %268 : vector<4x512xi1>, vector<4x512xf32>
      %270 = tpu.concatenate %265, %269 in 0 : vector<4x512xf32>, vector<4x512xf32> -> vector<8x512xf32>
      %c88 = arith.constant 88 : index
      %c0_100 = arith.constant 0 : index
      %271 = vector.load %arg10[%c88, %c0_100] : memref<128x512xf32, #tpu.memory_space<vmem>>, vector<8x512xf32>
      tpu.vector_store %arg10[%c88, %c0_100], %270 {strides = array<i32>} : memref<128x512xf32, #tpu.memory_space<vmem>>, vector<8x512xf32>,
      %c478_i32 = arith.constant 478 : i32
      %272 = tpu.dynamic_rotate %55 by %c478_i32 dim 1 : vector<4x512xf32>, i32 -> vector<4x512xf32>
      %273 = arith.andi %107, %152 : vector<4x512xi1>
      %cst_101 = arith.constant 0.000000e+00 : f32
      %274 = vector.broadcast %cst_101 : f32 to vector<4x512xf32>
      %275 = arith.select %273, %272, %274 : vector<4x512xi1>, vector<4x512xf32>
      %cst_102 = arith.constant 0.000000e+00 : f32
      %276 = vector.broadcast %cst_102 : f32 to vector<4x512xf32>
      %277 = tpu.concatenate %275, %276 in 0 : vector<4x512xf32>, vector<4x512xf32> -> vector<8x512xf32>
      %c96 = arith.constant 96 : index
      %c0_103 = arith.constant 0 : index
      %278 = vector.load %arg10[%c96, %c0_103] : memref<128x512xf32, #tpu.memory_space<vmem>>, vector<8x512xf32>
      tpu.vector_store %arg10[%c96, %c0_103], %277 {strides = array<i32>} : memref<128x512xf32, #tpu.memory_space<vmem>>, vector<8x512xf32>,
      %cst_104 = arith.constant 0.000000e+00 : f32
      %279 = vector.broadcast %cst_104 : f32 to vector<24x512xf32>
      %c104 = arith.constant 104 : index
      %c0_105 = arith.constant 0 : index
      %280 = vector.load %arg10[%c104, %c0_105] : memref<128x512xf32, #tpu.memory_space<vmem>>, vector<24x512xf32>
      tpu.vector_store %arg10[%c104, %c0_105], %279 {strides = array<i32>} : memref<128x512xf32, #tpu.memory_space<vmem>>, vector<24x512xf32>,
      %c0_106 = arith.constant 0 : index
      %c0_107 = arith.constant 0 : index
      %281 = vector.load %arg5[%c0_106, %c0_107] : memref<64x128xf32, #tpu.memory_space<vmem>>, vector<64x128xf32>
      %c0_108 = arith.constant 0 : index
      %c0_109 = arith.constant 0 : index
      %282 = vector.load %arg10[%c0_108, %c0_109] : memref<128x512xf32, #tpu.memory_space<vmem>>, vector<128x512xf32>
      %cst_110 = arith.constant dense<0.000000e+00> : vector<64x512xf32>
      %283 = tpu.matmul %281, %282, %cst_110 {dimension_numbers = #tpu.dot_dimension_numbers<[1], [0], [0], [1], [0, 0, 1, 1], [], []>} : vector<64x128xf32>, vector<128x512xf32>, vector<64x512xf32> -> vector<64x512xf32>
      %cst_111 = arith.constant dense<0.000000e+00> : vector<64xf32>
      %284 = vector.multi_reduction <add>, %283, %cst_111 [1] : vector<64x512xf32> to vector<64xf32>
      %285 = vector.shape_cast %284 : vector<64xf32> to vector<64x1xf32>
      %cst_112 = arith.constant 5.120000e+02 : f32
      %286 = vector.broadcast %cst_112 : f32 to vector<64x1xf32>
      %287 = arith.divf %285, %286 : vector<64x1xf32>
      %288 = vector.broadcast %287 : vector<64x1xf32> to vector<64x512xf32>
      %289 = arith.subf %283, %288 : vector<64x512xf32>
      %290 = arith.mulf %289, %289 : vector<64x512xf32>
      %cst_113 = arith.constant dense<0.000000e+00> : vector<64xf32>
      %291 = vector.multi_reduction <add>, %290, %cst_113 [1] : vector<64x512xf32> to vector<64xf32>
      %292 = vector.shape_cast %291 : vector<64xf32> to vector<64x1xf32>
      %cst_114 = arith.constant 5.120000e+02 : f32
      %293 = vector.broadcast %cst_114 : f32 to vector<64x1xf32>
      %294 = arith.divf %292, %293 : vector<64x1xf32>
      %cst_115 = arith.constant 9.99999974E-6 : f32
      %295 = vector.broadcast %cst_115 : f32 to vector<64x1xf32>
      %296 = arith.addf %294, %295 : vector<64x1xf32>
      %297 = math.rsqrt %296 : vector<64x1xf32>
      %298 = vector.broadcast %297 : vector<64x1xf32> to vector<64x512xf32>
      %299 = arith.mulf %289, %298 : vector<64x512xf32>
      %c0_116 = arith.constant 0 : index
      %c0_117 = arith.constant 0 : index
      %300 = vector.load %arg6[%c0_116, %c0_117] : memref<64x1xf32, #tpu.memory_space<vmem>>, vector<64x1xf32>
      %301 = vector.broadcast %300 : vector<64x1xf32> to vector<64x512xf32>
      %302 = arith.mulf %299, %301 : vector<64x512xf32>
      %c0_118 = arith.constant 0 : index
      %c0_119 = arith.constant 0 : index
      %303 = vector.load %arg7[%c0_118, %c0_119] : memref<64x1xf32, #tpu.memory_space<vmem>>, vector<64x1xf32>
      %304 = vector.broadcast %303 : vector<64x1xf32> to vector<64x512xf32>
      %305 = arith.addf %302, %304 : vector<64x512xf32>
      %cst_120 = arith.constant 5.000000e-01 : f32
      %306 = vector.broadcast %cst_120 : f32 to vector<64x512xf32>
      %307 = arith.mulf %306, %305 : vector<64x512xf32>
      %cst_121 = arith.constant 0.707106769 : f32
      %308 = vector.broadcast %cst_121 : f32 to vector<64x512xf32>
      %309 = arith.mulf %305, %308 : vector<64x512xf32>
      %310 = math.erf %309 : vector<64x512xf32>
      %cst_122 = arith.constant 1.000000e+00 : f32
      %311 = vector.broadcast %cst_122 : f32 to vector<64x512xf32>
      %312 = arith.addf %311, %310 : vector<64x512xf32>
      %313 = arith.mulf %307, %312 : vector<64x512xf32>
      %314 = vector.extract_strided_slice %313 {offsets = [0, 0], sizes = [64, 256], strides = [1, 1]} : vector<64x512xf32> to vector<64x256xf32>
      %c0_123 = arith.constant 0 : index
      %c0_124 = arith.constant 0 : index
      %c0_125 = arith.constant 0 : index
      %315 = vector.load %arg8[%c0_123, %c0_124, %c0_125] : memref<2x64x256xf32, #tpu.memory_space<vmem>>, vector<1x64x256xf32>
      %316 = vector.shape_cast %315 : vector<1x64x256xf32> to vector<64x256xf32>
      %317 = vector.shape_cast %314 : vector<64x256xf32> to vector<1x64x256xf32>
      tpu.vector_store %arg8[%c0_123, %c0_124, %c0_125], %317 {strides = array<i32>} : memref<2x64x256xf32, #tpu.memory_space<vmem>>, vector<1x64x256xf32>,
      %318 = vector.extract_strided_slice %313 {offsets = [0, 256], sizes = [64, 256], strides = [1, 1]} : vector<64x512xf32> to vector<64x256xf32>
      %c1 = arith.constant 1 : index
      %c0_126 = arith.constant 0 : index
      %c0_127 = arith.constant 0 : index
      %319 = vector.load %arg8[%c1, %c0_126, %c0_127] : memref<2x64x256xf32, #tpu.memory_space<vmem>>, vector<1x64x256xf32>
      %320 = vector.shape_cast %319 : vector<1x64x256xf32> to vector<64x256xf32>
      %321 = vector.shape_cast %318 : vector<64x256xf32> to vector<1x64x256xf32>
      tpu.vector_store %arg8[%c1, %c0_126, %c0_127], %321 {strides = array<i32>} : memref<2x64x256xf32, #tpu.memory_space<vmem>>, vector<1x64x256xf32>,
    } else {
    }
    return
  }
  func.func @transform_0(%arg0: i32) -> (i32, i32) {
    %c0_i32 = arith.constant 0 : i32
    %c0_i32_0 = arith.constant 0 : i32
    return %c0_i32, %arg0 : i32, i32
  }
  func.func @transform_1(%arg0: i32) -> (i32, i32) {
    %c0_i32 = arith.constant 0 : i32
    %c0_i32_0 = arith.constant 0 : i32
    return %arg0, %c0_i32 : i32, i32
  }
  func.func @transform_2(%arg0: i32) -> (i32, i32) {
    %c0_i32 = arith.constant 0 : i32
    %c0_i32_0 = arith.constant 0 : i32
    %c0_i32_1 = arith.constant 0 : i32
    return %c0_i32, %c0_i32_0 : i32, i32
  }
  func.func @transform_3(%arg0: i32) -> (i32, i32) {
    %c0_i32 = arith.constant 0 : i32
    %c0_i32_0 = arith.constant 0 : i32
    %c0_i32_1 = arith.constant 0 : i32
    return %c0_i32, %c0_i32_0 : i32, i32
  }
  func.func @transform_4(%arg0: i32) -> (i32, i32) {
    %c0_i32 = arith.constant 0 : i32
    %c0_i32_0 = arith.constant 0 : i32
    %c0_i32_1 = arith.constant 0 : i32
    return %c0_i32, %c0_i32_0 : i32, i32
  }
  func.func @transform_5(%arg0: i32) -> (i32, i32) {
    %c0_i32 = arith.constant 0 : i32
    %c0_i32_0 = arith.constant 0 : i32
    %c0_i32_1 = arith.constant 0 : i32
    return %c0_i32, %c0_i32_0 : i32, i32
  }
  func.func @transform_6(%arg0: i32) -> (i32, i32) {
    %c0_i32 = arith.constant 0 : i32
    %c0_i32_0 = arith.constant 0 : i32
    %c0_i32_1 = arith.constant 0 : i32
    return %c0_i32, %c0_i32_0 : i32, i32
  }
  func.func @transform_7(%arg0: i32) -> (i32, i32, i32) {
    %c0_i32 = arith.constant 0 : i32
    %c0_i32_0 = arith.constant 0 : i32
    %c0_i32_1 = arith.constant 0 : i32
    %c0_i32_2 = arith.constant 0 : i32
    return %c0_i32, %c0_i32_0, %c0_i32_1 : i32, i32, i32
  }
}

</mosaic_0001>

<llo_original>
// kernel: projection_forward.1
$region0: #{projection_forward.1}
  #allocation0 [shape = 'u32[]', space=smem, size = 0x4, offset = 0x4, fixed_abs, tag = 'smem constant byte address 0x4 - core index']
  #allocation1 [shape = 'u32[144,128]{1,0:T(1,128)}', space=vmem, size = 0x12000, scoped, tag = 'internal scratch']
  #allocation2 [shape = 'f32[2,1024]{1,0:T(2,128)}', space=vmem, size = 0x2000, scoped, tag = 'scratch operand']
  #allocation3 [shape = 'f32[128,512]{1,0:T(8,128)}', space=vmem, size = 0x40000, scoped, tag = 'scratch operand']
  %s0 = inlined_call_operand.vmem [shape: bf16[2,1024], index: 0, kind: input, shape index: {}]
  %s1 = inlined_call_operand.vmem [shape: bf16[1024,1024], index: 1, kind: input, shape index: {}]
  %s2 = inlined_call_operand.vmem [shape: f32[1,1024], index: 2, kind: input, shape index: {}]
  %s3 = inlined_call_operand.vmem [shape: f32[1,1024], index: 3, kind: input, shape index: {}]
  %s4 = inlined_call_operand.vmem [shape: f32[64,128], index: 4, kind: input, shape index: {}]
  %s5 = inlined_call_operand.vmem [shape: f32[64,1], index: 5, kind: input, shape index: {}]
  %s6 = inlined_call_operand.vmem [shape: f32[64,1], index: 6, kind: input, shape index: {}]
  %s7 = inlined_call_operand.vmem [shape: f32[2,64,256], index: 7, kind: output, shape index: {}]
  %s8 = sld [smem:[#allocation0]]
  $region46: #{projection_forward.1} parent=0
    _
  %s10 = ssub.s32 1, %s8
  %s11 = scalar_select 0, %s10, %s8
  // Predicated region
  $region2: #{projection_forward.1} parent=0 // pred_check
    _
  $region3: #{projection_forward.1} parent=0 // pred_check_branch
    %13 = sbr.rel (0) target = $region5
  $region4: #{projection_forward.1} parent=0 // pred_region
    _
  $region5: #{projection_forward.1} parent=0 // pred_fallthru
    _
  // Predicated region
  $region6: #{projection_forward.1} parent=0 // pred_check
    _
  $region7: #{projection_forward.1} parent=0 // pred_check_branch
    %15 = sbr.rel (0) target = $region9
  $region8: #{projection_forward.1} parent=0 // pred_region
    _
  $region9: #{projection_forward.1} parent=0 // pred_fallthru
    _
  // Predicated region
  $region10: #{projection_forward.1} parent=0 // pred_check
    _
  $region11: #{projection_forward.1} parent=0 // pred_check_branch
    %17 = sbr.rel (0) target = $region13
  $region12: #{projection_forward.1} parent=0 // pred_region
    _
  $region13: #{projection_forward.1} parent=0 // pred_fallthru
    _
  // Predicated region
  $region14: #{projection_forward.1} parent=0 // pred_check
    _
  $region15: #{projection_forward.1} parent=0 // pred_check_branch
    %19 = sbr.rel (0) target = $region17
  $region16: #{projection_forward.1} parent=0 // pred_region
    _
  $region17: #{projection_forward.1} parent=0 // pred_fallthru
    _
  // Predicated region
  $region18: #{projection_forward.1} parent=0 // pred_check
    _
  $region19: #{projection_forward.1} parent=0 // pred_check_branch
    %21 = sbr.rel (0) target = $region21
  $region20: #{projection_forward.1} parent=0 // pred_region
    _
  $region21: #{projection_forward.1} parent=0 // pred_fallthru
    _
  // Predicated region
  $region22: #{projection_forward.1} parent=0 // pred_check
    _
  $region23: #{projection_forward.1} parent=0 // pred_check_branch
    %23 = sbr.rel (0) target = $region25
  $region24: #{projection_forward.1} parent=0 // pred_region
    _
  $region25: #{projection_forward.1} parent=0 // pred_fallthru
    _
  // Predicated region
  $region26: #{projection_forward.1} parent=0 // pred_check
    _
  $region27: #{projection_forward.1} parent=0 // pred_check_branch
    %25 = sbr.rel (0) target = $region29
  $region28: #{projection_forward.1} parent=0 // pred_region
    _
  $region29: #{projection_forward.1} parent=0 // pred_fallthru
    _
  %p26 = scmp.eq.s32.totalorder 0, 0
  // Predicated region
  $region30: #{projection_forward.1} parent=0 // pred_check
    %p27 = pneg %p26
  $region31: #{projection_forward.1} parent=0 // pred_check_branch
    %29 = sbr.rel (%p27) target = $region33
  $region32: #{projection_forward.1} parent=0 // pred_region
    %30 = vst [vmem:[#allocation2] sm:$0xff] 0.0
    %31 = vst [vmem:[#allocation2 + $0x8] sm:$0xff] 0.0
  $region33: #{projection_forward.1} parent=0 // pred_fallthru
    _
  %v32 = vld [vmem:[#allocation2] sm:$0xff]
  %v33 = vld [vmem:[#allocation2 + $0x8] sm:$0xff]
  %v34 = vld [vmem:[%s0] sm:$0xff]
  %v35 = vld [vmem:[%s1] sm:$0xff]
  %v36 = vld [vmem:[%s1 + $0x8] sm:$0xff]
  %v37 = vld [vmem:[%s1 + $0x10] sm:$0xff]
  %v38 = vld [vmem:[%s1 + $0x18] sm:$0xff]
  %v39 = vld [vmem:[%s1 + $0x20] sm:$0xff]
  %v40 = vld [vmem:[%s1 + $0x28] sm:$0xff]
  %v41 = vld [vmem:[%s1 + $0x30] sm:$0xff]
  %v42 = vld [vmem:[%s1 + $0x38] sm:$0xff]
  %v43 = vld [vmem:[%s1 + $0x40] sm:$0xff]
  %v44 = vld [vmem:[%s1 + $0x48] sm:$0xff]
  %v45 = vld [vmem:[%s1 + $0x50] sm:$0xff]
  %v46 = vld [vmem:[%s1 + $0x58] sm:$0xff]
  %v47 = vld [vmem:[%s1 + $0x60] sm:$0xff]
  %v48 = vld [vmem:[%s1 + $0x68] sm:$0xff]
  %v49 = vld [vmem:[%s1 + $0x70] sm:$0xff]
  %v50 = vld [vmem:[%s1 + $0x78] sm:$0xff]
  %v51 = vld [vmem:[%s1 + $0x80] sm:$0xff]
  %v52 = vld [vmem:[%s1 + $0x88] sm:$0xff]
  %v53 = vld [vmem:[%s1 + $0x90] sm:$0xff]
  %v54 = vld [vmem:[%s1 + $0x98] sm:$0xff]
  %v55 = vld [vmem:[%s1 + $0xa0] sm:$0xff]
  %v56 = vld [vmem:[%s1 + $0xa8] sm:$0xff]
  %v57 = vld [vmem:[%s1 + $0xb0] sm:$0xff]
  %v58 = vld [vmem:[%s1 + $0xb8] sm:$0xff]
  %v59 = vld [vmem:[%s1 + $0xc0] sm:$0xff]
  %v60 = vld [vmem:[%s1 + $0xc8] sm:$0xff]
  %v61 = vld [vmem:[%s1 + $0xd0] sm:$0xff]
  %v62 = vld [vmem:[%s1 + $0xd8] sm:$0xff]
  %v63 = vld [vmem:[%s1 + $0xe0] sm:$0xff]
  %v64 = vld [vmem:[%s1 + $0xe8] sm:$0xff]
  %v65 = vld [vmem:[%s1 + $0xf0] sm:$0xff]
  %v66 = vld [vmem:[%s1 + $0xf8] sm:$0xff]
  %v67 = vld [vmem:[%s1 + $0x100] sm:$0xff]
  %v68 = vld [vmem:[%s1 + $0x108] sm:$0xff]
  %v69 = vld [vmem:[%s1 + $0x110] sm:$0xff]
  %v70 = vld [vmem:[%s1 + $0x118] sm:$0xff]
  %v71 = vld [vmem:[%s1 + $0x120] sm:$0xff]
  %v72 = vld [vmem:[%s1 + $0x128] sm:$0xff]
  %v73 = vld [vmem:[%s1 + $0x130] sm:$0xff]
  %v74 = vld [vmem:[%s1 + $0x138] sm:$0xff]
  %v75 = vld [vmem:[%s1 + $0x140] sm:$0xff]
  %v76 = vld [vmem:[%s1 + $0x148] sm:$0xff]
  %v77 = vld [vmem:[%s1 + $0x150] sm:$0xff]
  %v78 = vld [vmem:[%s1 + $0x158] sm:$0xff]
  %v79 = vld [vmem:[%s1 + $0x160] sm:$0xff]
  %v80 = vld [vmem:[%s1 + $0x168] sm:$0xff]
  %v81 = vld [vmem:[%s1 + $0x170] sm:$0xff]
  %v82 = vld [vmem:[%s1 + $0x178] sm:$0xff]
  %v83 = vld [vmem:[%s1 + $0x180] sm:$0xff]
  %v84 = vld [vmem:[%s1 + $0x188] sm:$0xff]
  %v85 = vld [vmem:[%s1 + $0x190] sm:$0xff]
  %v86 = vld [vmem:[%s1 + $0x198] sm:$0xff]
  %v87 = vld [vmem:[%s1 + $0x1a0] sm:$0xff]
  %v88 = vld [vmem:[%s1 + $0x1a8] sm:$0xff]
  %v89 = vld [vmem:[%s1 + $0x1b0] sm:$0xff]
  %v90 = vld [vmem:[%s1 + $0x1b8] sm:$0xff]
  %v91 = vld [vmem:[%s1 + $0x1c0] sm:$0xff]
  %v92 = vld [vmem:[%s1 + $0x1c8] sm:$0xff]
  %v93 = vld [vmem:[%s1 + $0x1d0] sm:$0xff]
  %v94 = vld [vmem:[%s1 + $0x1d8] sm:$0xff]
  %v95 = vld [vmem:[%s1 + $0x1e0] sm:$0xff]
  %v96 = vld [vmem:[%s1 + $0x1e8] sm:$0xff]
  %v97 = vld [vmem:[%s1 + $0x1f0] sm:$0xff]
  %v98 = vld [vmem:[%s1 + $0x1f8] sm:$0xff]
  %v99 = vld [vmem:[%s1 + $0x200] sm:$0xff]
  %v100 = vld [vmem:[%s1 + $0x208] sm:$0xff]
  %v101 = vld [vmem:[%s1 + $0x210] sm:$0xff]
  %v102 = vld [vmem:[%s1 + $0x218] sm:$0xff]
  %v103 = vld [vmem:[%s1 + $0x220] sm:$0xff]
  %v104 = vld [vmem:[%s1 + $0x228] sm:$0xff]
  %v105 = vld [vmem:[%s1 + $0x230] sm:$0xff]
  %v106 = vld [vmem:[%s1 + $0x238] sm:$0xff]
  %v107 = vld [vmem:[%s1 + $0x240] sm:$0xff]
  %v108 = vld [vmem:[%s1 + $0x248] sm:$0xff]
  %v109 = vld [vmem:[%s1 + $0x250] sm:$0xff]
  %v110 = vld [vmem:[%s1 + $0x258] sm:$0xff]
  %v111 = vld [vmem:[%s1 + $0x260] sm:$0xff]
  %v112 = vld [vmem:[%s1 + $0x268] sm:$0xff]
  %v113 = vld [vmem:[%s1 + $0x270] sm:$0xff]
  %v114 = vld [vmem:[%s1 + $0x278] sm:$0xff]
  %v115 = vld [vmem:[%s1 + $0x280] sm:$0xff]
  %v116 = vld [vmem:[%s1 + $0x288] sm:$0xff]
  %v117 = vld [vmem:[%s1 + $0x290] sm:$0xff]
  %v118 = vld [vmem:[%s1 + $0x298] sm:$0xff]
  %v119 = vld [vmem:[%s1 + $0x2a0] sm:$0xff]
  %v120 = vld [vmem:[%s1 + $0x2a8] sm:$0xff]
  %v121 = vld [vmem:[%s1 + $0x2b0] sm:$0xff]
  %v122 = vld [vmem:[%s1 + $0x2b8] sm:$0xff]
  %v123 = vld [vmem:[%s1 + $0x2c0] sm:$0xff]
  %v124 = vld [vmem:[%s1 + $0x2c8] sm:$0xff]
  %v125 = vld [vmem:[%s1 + $0x2d0] sm:$0xff]
  %v126 = vld [vmem:[%s1 + $0x2d8] sm:$0xff]
  %v127 = vld [vmem:[%s1 + $0x2e0] sm:$0xff]
  %v128 = vld [vmem:[%s1 + $0x2e8] sm:$0xff]
  %v129 = vld [vmem:[%s1 + $0x2f0] sm:$0xff]
  %v130 = vld [vmem:[%s1 + $0x2f8] sm:$0xff]
  %v131 = vld [vmem:[%s1 + $0x300] sm:$0xff]
  %v132 = vld [vmem:[%s1 + $0x308] sm:$0xff]
  %v133 = vld [vmem:[%s1 + $0x310] sm:$0xff]
  %v134 = vld [vmem:[%s1 + $0x318] sm:$0xff]
  %v135 = vld [vmem:[%s1 + $0x320] sm:$0xff]
  %v136 = vld [vmem:[%s1 + $0x328] sm:$0xff]
  %v137 = vld [vmem:[%s1 + $0x330] sm:$0xff]
  %v138 = vld [vmem:[%s1 + $0x338] sm:$0xff]
  %v139 = vld [vmem:[%s1 + $0x340] sm:$0xff]
  %v140 = vld [vmem:[%s1 + $0x348] sm:$0xff]
  %v141 = vld [vmem:[%s1 + $0x350] sm:$0xff]
  %v142 = vld [vmem:[%s1 + $0x358] sm:$0xff]
  %v143 = vld [vmem:[%s1 + $0x360] sm:$0xff]
  %v144 = vld [vmem:[%s1 + $0x368] sm:$0xff]
  %v145 = vld [vmem:[%s1 + $0x370] sm:$0xff]
  %v146 = vld [vmem:[%s1 + $0x378] sm:$0xff]
  %v147 = vld [vmem:[%s1 + $0x380] sm:$0xff]
  %v148 = vld [vmem:[%s1 + $0x388] sm:$0xff]
  %v149 = vld [vmem:[%s1 + $0x390] sm:$0xff]
  %v150 = vld [vmem:[%s1 + $0x398] sm:$0xff]
  %v151 = vld [vmem:[%s1 + $0x3a0] sm:$0xff]
  %v152 = vld [vmem:[%s1 + $0x3a8] sm:$0xff]
  %v153 = vld [vmem:[%s1 + $0x3b0] sm:$0xff]
  %v154 = vld [vmem:[%s1 + $0x3b8] sm:$0xff]
  %v155 = vld [vmem:[%s1 + $0x3c0] sm:$0xff]
  %v156 = vld [vmem:[%s1 + $0x3c8] sm:$0xff]
  %v157 = vld [vmem:[%s1 + $0x3d0] sm:$0xff]
  %v158 = vld [vmem:[%s1 + $0x3d8] sm:$0xff]
  %v159 = vld [vmem:[%s1 + $0x3e0] sm:$0xff]
  %v160 = vld [vmem:[%s1 + $0x3e8] sm:$0xff]
  %v161 = vld [vmem:[%s1 + $0x3f0] sm:$0xff]
  %v162 = vld [vmem:[%s1 + $0x3f8] sm:$0xff]
  %v163 = vld [vmem:[%s1 + $0x400] sm:$0xff]
  %v164 = vld [vmem:[%s1 + $0x408] sm:$0xff]
  %v165 = vld [vmem:[%s1 + $0x410] sm:$0xff]
  %v166 = vld [vmem:[%s1 + $0x418] sm:$0xff]
  %v167 = vld [vmem:[%s1 + $0x420] sm:$0xff]
  %v168 = vld [vmem:[%s1 + $0x428] sm:$0xff]
  %v169 = vld [vmem:[%s1 + $0x430] sm:$0xff]
  %v170 = vld [vmem:[%s1 + $0x438] sm:$0xff]
  %v171 = vld [vmem:[%s1 + $0x440] sm:$0xff]
  %v172 = vld [vmem:[%s1 + $0x448] sm:$0xff]
  %v173 = vld [vmem:[%s1 + $0x450] sm:$0xff]
  %v174 = vld [vmem:[%s1 + $0x458] sm:$0xff]
  %v175 = vld [vmem:[%s1 + $0x460] sm:$0xff]
  %v176 = vld [vmem:[%s1 + $0x468] sm:$0xff]
  %v177 = vld [vmem:[%s1 + $0x470] sm:$0xff]
  %v178 = vld [vmem:[%s1 + $0x478] sm:$0xff]
  %v179 = vld [vmem:[%s1 + $0x480] sm:$0xff]
  %v180 = vld [vmem:[%s1 + $0x488] sm:$0xff]
  %v181 = vld [vmem:[%s1 + $0x490] sm:$0xff]
  %v182 = vld [vmem:[%s1 + $0x498] sm:$0xff]
  %v183 = vld [vmem:[%s1 + $0x4a0] sm:$0xff]
  %v184 = vld [vmem:[%s1 + $0x4a8] sm:$0xff]
  %v185 = vld [vmem:[%s1 + $0x4b0] sm:$0xff]
  %v186 = vld [vmem:[%s1 + $0x4b8] sm:$0xff]
  %v187 = vld [vmem:[%s1 + $0x4c0] sm:$0xff]
  %v188 = vld [vmem:[%s1 + $0x4c8] sm:$0xff]
  %v189 = vld [vmem:[%s1 + $0x4d0] sm:$0xff]
  %v190 = vld [vmem:[%s1 + $0x4d8] sm:$0xff]
  %v191 = vld [vmem:[%s1 + $0x4e0] sm:$0xff]
  %v192 = vld [vmem:[%s1 + $0x4e8] sm:$0xff]
  %v193 = vld [vmem:[%s1 + $0x4f0] sm:$0xff]
  %v194 = vld [vmem:[%s1 + $0x4f8] sm:$0xff]
  %v195 = vld [vmem:[%s1 + $0x500] sm:$0xff]
  %v196 = vld [vmem:[%s1 + $0x508] sm:$0xff]
  %v197 = vld [vmem:[%s1 + $0x510] sm:$0xff]
  %v198 = vld [vmem:[%s1 + $0x518] sm:$0xff]
  %v199 = vld [vmem:[%s1 + $0x520] sm:$0xff]
  %v200 = vld [vmem:[%s1 + $0x528] sm:$0xff]
  %v201 = vld [vmem:[%s1 + $0x530] sm:$0xff]
  %v202 = vld [vmem:[%s1 + $0x538] sm:$0xff]
  %v203 = vld [vmem:[%s1 + $0x540] sm:$0xff]
  %v204 = vld [vmem:[%s1 + $0x548] sm:$0xff]
  %v205 = vld [vmem:[%s1 + $0x550] sm:$0xff]
  %v206 = vld [vmem:[%s1 + $0x558] sm:$0xff]
  %v207 = vld [vmem:[%s1 + $0x560] sm:$0xff]
  %v208 = vld [vmem:[%s1 + $0x568] sm:$0xff]
  %v209 = vld [vmem:[%s1 + $0x570] sm:$0xff]
  %v210 = vld [vmem:[%s1 + $0x578] sm:$0xff]
  %v211 = vld [vmem:[%s1 + $0x580] sm:$0xff]
  %v212 = vld [vmem:[%s1 + $0x588] sm:$0xff]
  %v213 = vld [vmem:[%s1 + $0x590] sm:$0xff]
  %v214 = vld [vmem:[%s1 + $0x598] sm:$0xff]
  %v215 = vld [vmem:[%s1 + $0x5a0] sm:$0xff]
  %v216 = vld [vmem:[%s1 + $0x5a8] sm:$0xff]
  %v217 = vld [vmem:[%s1 + $0x5b0] sm:$0xff]
  %v218 = vld [vmem:[%s1 + $0x5b8] sm:$0xff]
  %v219 = vld [vmem:[%s1 + $0x5c0] sm:$0xff]
  %v220 = vld [vmem:[%s1 + $0x5c8] sm:$0xff]
  %v221 = vld [vmem:[%s1 + $0x5d0] sm:$0xff]
  %v222 = vld [vmem:[%s1 + $0x5d8] sm:$0xff]
  %v223 = vld [vmem:[%s1 + $0x5e0] sm:$0xff]
  %v224 = vld [vmem:[%s1 + $0x5e8] sm:$0xff]
  %v225 = vld [vmem:[%s1 + $0x5f0] sm:$0xff]
  %v226 = vld [vmem:[%s1 + $0x5f8] sm:$0xff]
  %v227 = vld [vmem:[%s1 + $0x600] sm:$0xff]
  %v228 = vld [vmem:[%s1 + $0x608] sm:$0xff]
  %v229 = vld [vmem:[%s1 + $0x610] sm:$0xff]
  %v230 = vld [vmem:[%s1 + $0x618] sm:$0xff]
  %v231 = vld [vmem:[%s1 + $0x620] sm:$0xff]
  %v232 = vld [vmem:[%s1 + $0x628] sm:$0xff]
  %v233 = vld [vmem:[%s1 + $0x630] sm:$0xff]
  %v234 = vld [vmem:[%s1 + $0x638] sm:$0xff]
  %v235 = vld [vmem:[%s1 + $0x640] sm:$0xff]
  %v236 = vld [vmem:[%s1 + $0x648] sm:$0xff]
  %v237 = vld [vmem:[%s1 + $0x650] sm:$0xff]
  %v238 = vld [vmem:[%s1 + $0x658] sm:$0xff]
  %v239 = vld [vmem:[%s1 + $0x660] sm:$0xff]
  %v240 = vld [vmem:[%s1 + $0x668] sm:$0xff]
  %v241 = vld [vmem:[%s1 + $0x670] sm:$0xff]
  %v242 = vld [vmem:[%s1 + $0x678] sm:$0xff]
  %v243 = vld [vmem:[%s1 + $0x680] sm:$0xff]
  %v244 = vld [vmem:[%s1 + $0x688] sm:$0xff]
  %v245 = vld [vmem:[%s1 + $0x690] sm:$0xff]
  %v246 = vld [vmem:[%s1 + $0x698] sm:$0xff]
  %v247 = vld [vmem:[%s1 + $0x6a0] sm:$0xff]
  %v248 = vld [vmem:[%s1 + $0x6a8] sm:$0xff]
  %v249 = vld [vmem:[%s1 + $0x6b0] sm:$0xff]
  %v250 = vld [vmem:[%s1 + $0x6b8] sm:$0xff]
  %v251 = vld [vmem:[%s1 + $0x6c0] sm:$0xff]
  %v252 = vld [vmem:[%s1 + $0x6c8] sm:$0xff]
  %v253 = vld [vmem:[%s1 + $0x6d0] sm:$0xff]
  %v254 = vld [vmem:[%s1 + $0x6d8] sm:$0xff]
  %v255 = vld [vmem:[%s1 + $0x6e0] sm:$0xff]
  %v256 = vld [vmem:[%s1 + $0x6e8] sm:$0xff]
  %v257 = vld [vmem:[%s1 + $0x6f0] sm:$0xff]
  %v258 = vld [vmem:[%s1 + $0x6f8] sm:$0xff]
  %v259 = vld [vmem:[%s1 + $0x700] sm:$0xff]
  %v260 = vld [vmem:[%s1 + $0x708] sm:$0xff]
  %v261 = vld [vmem:[%s1 + $0x710] sm:$0xff]
  %v262 = vld [vmem:[%s1 + $0x718] sm:$0xff]
  %v263 = vld [vmem:[%s1 + $0x720] sm:$0xff]
  %v264 = vld [vmem:[%s1 + $0x728] sm:$0xff]
  %v265 = vld [vmem:[%s1 + $0x730] sm:$0xff]
  %v266 = vld [vmem:[%s1 + $0x738] sm:$0xff]
  %v267 = vld [vmem:[%s1 + $0x740] sm:$0xff]
  %v268 = vld [vmem:[%s1 + $0x748] sm:$0xff]
  %v269 = vld [vmem:[%s1 + $0x750] sm:$0xff]
  %v270 = vld [vmem:[%s1 + $0x758] sm:$0xff]
  %v271 = vld [vmem:[%s1 + $0x760] sm:$0xff]
  %v272 = vld [vmem:[%s1 + $0x768] sm:$0xff]
  %v273 = vld [vmem:[%s1 + $0x770] sm:$0xff]
  %v274 = vld [vmem:[%s1 + $0x778] sm:$0xff]
  %v275 = vld [vmem:[%s1 + $0x780] sm:$0xff]
  %v276 = vld [vmem:[%s1 + $0x788] sm:$0xff]
  %v277 = vld [vmem:[%s1 + $0x790] sm:$0xff]
  %v278 = vld [vmem:[%s1 + $0x798] sm:$0xff]
  %v279 = vld [vmem:[%s1 + $0x7a0] sm:$0xff]
  %v280 = vld [vmem:[%s1 + $0x7a8] sm:$0xff]
  %v281 = vld [vmem:[%s1 + $0x7b0] sm:$0xff]
  %v282 = vld [vmem:[%s1 + $0x7b8] sm:$0xff]
  %v283 = vld [vmem:[%s1 + $0x7c0] sm:$0xff]
  %v284 = vld [vmem:[%s1 + $0x7c8] sm:$0xff]
  %v285 = vld [vmem:[%s1 + $0x7d0] sm:$0xff]
  %v286 = vld [vmem:[%s1 + $0x7d8] sm:$0xff]
  %v287 = vld [vmem:[%s1 + $0x7e0] sm:$0xff]
  %v288 = vld [vmem:[%s1 + $0x7e8] sm:$0xff]
  %v289 = vld [vmem:[%s1 + $0x7f0] sm:$0xff]
  %v290 = vld [vmem:[%s1 + $0x7f8] sm:$0xff]
  %v291 = vld [vmem:[%s1 + $0x800] sm:$0xff]
  %v292 = vld [vmem:[%s1 + $0x808] sm:$0xff]
  %v293 = vld [vmem:[%s1 + $0x810] sm:$0xff]
  %v294 = vld [vmem:[%s1 + $0x818] sm:$0xff]
  %v295 = vld [vmem:[%s1 + $0x820] sm:$0xff]
  %v296 = vld [vmem:[%s1 + $0x828] sm:$0xff]
  %v297 = vld [vmem:[%s1 + $0x830] sm:$0xff]
  %v298 = vld [vmem:[%s1 + $0x838] sm:$0xff]
  %v299 = vld [vmem:[%s1 + $0x840] sm:$0xff]
  %v300 = vld [vmem:[%s1 + $0x848] sm:$0xff]
  %v301 = vld [vmem:[%s1 + $0x850] sm:$0xff]
  %v302 = vld [vmem:[%s1 + $0x858] sm:$0xff]
  %v303 = vld [vmem:[%s1 + $0x860] sm:$0xff]
  %v304 = vld [vmem:[%s1 + $0x868] sm:$0xff]
  %v305 = vld [vmem:[%s1 + $0x870] sm:$0xff]
  %v306 = vld [vmem:[%s1 + $0x878] sm:$0xff]
  %v307 = vld [vmem:[%s1 + $0x880] sm:$0xff]
  %v308 = vld [vmem:[%s1 + $0x888] sm:$0xff]
  %v309 = vld [vmem:[%s1 + $0x890] sm:$0xff]
  %v310 = vld [vmem:[%s1 + $0x898] sm:$0xff]
  %v311 = vld [vmem:[%s1 + $0x8a0] sm:$0xff]
  %v312 = vld [vmem:[%s1 + $0x8a8] sm:$0xff]
  %v313 = vld [vmem:[%s1 + $0x8b0] sm:$0xff]
  %v314 = vld [vmem:[%s1 + $0x8b8] sm:$0xff]
  %v315 = vld [vmem:[%s1 + $0x8c0] sm:$0xff]
  %v316 = vld [vmem:[%s1 + $0x8c8] sm:$0xff]
  %v317 = vld [vmem:[%s1 + $0x8d0] sm:$0xff]
  %v318 = vld [vmem:[%s1 + $0x8d8] sm:$0xff]
  %v319 = vld [vmem:[%s1 + $0x8e0] sm:$0xff]
  %v320 = vld [vmem:[%s1 + $0x8e8] sm:$0xff]
  %v321 = vld [vmem:[%s1 + $0x8f0] sm:$0xff]
  %v322 = vld [vmem:[%s1 + $0x8f8] sm:$0xff]
  %v323 = vld [vmem:[%s1 + $0x900] sm:$0xff]
  %v324 = vld [vmem:[%s1 + $0x908] sm:$0xff]
  %v325 = vld [vmem:[%s1 + $0x910] sm:$0xff]
  %v326 = vld [vmem:[%s1 + $0x918] sm:$0xff]
  %v327 = vld [vmem:[%s1 + $0x920] sm:$0xff]
  %v328 = vld [vmem:[%s1 + $0x928] sm:$0xff]
  %v329 = vld [vmem:[%s1 + $0x930] sm:$0xff]
  %v330 = vld [vmem:[%s1 + $0x938] sm:$0xff]
  %v331 = vld [vmem:[%s1 + $0x940] sm:$0xff]
  %v332 = vld [vmem:[%s1 + $0x948] sm:$0xff]
  %v333 = vld [vmem:[%s1 + $0x950] sm:$0xff]
  %v334 = vld [vmem:[%s1 + $0x958] sm:$0xff]
  %v335 = vld [vmem:[%s1 + $0x960] sm:$0xff]
  %v336 = vld [vmem:[%s1 + $0x968] sm:$0xff]
  %v337 = vld [vmem:[%s1 + $0x970] sm:$0xff]
  %v338 = vld [vmem:[%s1 + $0x978] sm:$0xff]
  %v339 = vld [vmem:[%s1 + $0x980] sm:$0xff]
  %v340 = vld [vmem:[%s1 + $0x988] sm:$0xff]
  %v341 = vld [vmem:[%s1 + $0x990] sm:$0xff]
  %v342 = vld [vmem:[%s1 + $0x998] sm:$0xff]
  %v343 = vld [vmem:[%s1 + $0x9a0] sm:$0xff]
  %v344 = vld [vmem:[%s1 + $0x9a8] sm:$0xff]
  %v345 = vld [vmem:[%s1 + $0x9b0] sm:$0xff]
  %v346 = vld [vmem:[%s1 + $0x9b8] sm:$0xff]
  %v347 = vld [vmem:[%s1 + $0x9c0] sm:$0xff]
  %v348 = vld [vmem:[%s1 + $0x9c8] sm:$0xff]
  %v349 = vld [vmem:[%s1 + $0x9d0] sm:$0xff]
  %v350 = vld [vmem:[%s1 + $0x9d8] sm:$0xff]
  %v351 = vld [vmem:[%s1 + $0x9e0] sm:$0xff]
  %v352 = vld [vmem:[%s1 + $0x9e8] sm:$0xff]
  %v353 = vld [vmem:[%s1 + $0x9f0] sm:$0xff]
  %v354 = vld [vmem:[%s1 + $0x9f8] sm:$0xff]
  %v355 = vld [vmem:[%s1 + $0xa00] sm:$0xff]
  %v356 = vld [vmem:[%s1 + $0xa08] sm:$0xff]
  %v357 = vld [vmem:[%s1 + $0xa10] sm:$0xff]
  %v358 = vld [vmem:[%s1 + $0xa18] sm:$0xff]
  %v359 = vld [vmem:[%s1 + $0xa20] sm:$0xff]
  %v360 = vld [vmem:[%s1 + $0xa28] sm:$0xff]
  %v361 = vld [vmem:[%s1 + $0xa30] sm:$0xff]
  %v362 = vld [vmem:[%s1 + $0xa38] sm:$0xff]
  %v363 = vld [vmem:[%s1 + $0xa40] sm:$0xff]
  %v364 = vld [vmem:[%s1 + $0xa48] sm:$0xff]
  %v365 = vld [vmem:[%s1 + $0xa50] sm:$0xff]
  %v366 = vld [vmem:[%s1 + $0xa58] sm:$0xff]
  %v367 = vld [vmem:[%s1 + $0xa60] sm:$0xff]
  %v368 = vld [vmem:[%s1 + $0xa68] sm:$0xff]
  %v369 = vld [vmem:[%s1 + $0xa70] sm:$0xff]
  %v370 = vld [vmem:[%s1 + $0xa78] sm:$0xff]
  %v371 = vld [vmem:[%s1 + $0xa80] sm:$0xff]
  %v372 = vld [vmem:[%s1 + $0xa88] sm:$0xff]
  %v373 = vld [vmem:[%s1 + $0xa90] sm:$0xff]
  %v374 = vld [vmem:[%s1 + $0xa98] sm:$0xff]
  %v375 = vld [vmem:[%s1 + $0xaa0] sm:$0xff]
  %v376 = vld [vmem:[%s1 + $0xaa8] sm:$0xff]
  %v377 = vld [vmem:[%s1 + $0xab0] sm:$0xff]
  %v378 = vld [vmem:[%s1 + $0xab8] sm:$0xff]
  %v379 = vld [vmem:[%s1 + $0xac0] sm:$0xff]
  %v380 = vld [vmem:[%s1 + $0xac8] sm:$0xff]
  %v381 = vld [vmem:[%s1 + $0xad0] sm:$0xff]
  %v382 = vld [vmem:[%s1 + $0xad8] sm:$0xff]
  %v383 = vld [vmem:[%s1 + $0xae0] sm:$0xff]
  %v384 = vld [vmem:[%s1 + $0xae8] sm:$0xff]
  %v385 = vld [vmem:[%s1 + $0xaf0] sm:$0xff]
  %v386 = vld [vmem:[%s1 + $0xaf8] sm:$0xff]
  %v387 = vld [vmem:[%s1 + $0xb00] sm:$0xff]
  %v388 = vld [vmem:[%s1 + $0xb08] sm:$0xff]
  %v389 = vld [vmem:[%s1 + $0xb10] sm:$0xff]
  %v390 = vld [vmem:[%s1 + $0xb18] sm:$0xff]
  %v391 = vld [vmem:[%s1 + $0xb20] sm:$0xff]
  %v392 = vld [vmem:[%s1 + $0xb28] sm:$0xff]
  %v393 = vld [vmem:[%s1 + $0xb30] sm:$0xff]
  %v394 = vld [vmem:[%s1 + $0xb38] sm:$0xff]
  %v395 = vld [vmem:[%s1 + $0xb40] sm:$0xff]
  %v396 = vld [vmem:[%s1 + $0xb48] sm:$0xff]
  %v397 = vld [vmem:[%s1 + $0xb50] sm:$0xff]
  %v398 = vld [vmem:[%s1 + $0xb58] sm:$0xff]
  %v399 = vld [vmem:[%s1 + $0xb60] sm:$0xff]
  %v400 = vld [vmem:[%s1 + $0xb68] sm:$0xff]
  %v401 = vld [vmem:[%s1 + $0xb70] sm:$0xff]
  %v402 = vld [vmem:[%s1 + $0xb78] sm:$0xff]
  %v403 = vld [vmem:[%s1 + $0xb80] sm:$0xff]
  %v404 = vld [vmem:[%s1 + $0xb88] sm:$0xff]
  %v405 = vld [vmem:[%s1 + $0xb90] sm:$0xff]
  %v406 = vld [vmem:[%s1 + $0xb98] sm:$0xff]
  %v407 = vld [vmem:[%s1 + $0xba0] sm:$0xff]
  %v408 = vld [vmem:[%s1 + $0xba8] sm:$0xff]
  %v409 = vld [vmem:[%s1 + $0xbb0] sm:$0xff]
  %v410 = vld [vmem:[%s1 + $0xbb8] sm:$0xff]
  %v411 = vld [vmem:[%s1 + $0xbc0] sm:$0xff]
  %v412 = vld [vmem:[%s1 + $0xbc8] sm:$0xff]
  %v413 = vld [vmem:[%s1 + $0xbd0] sm:$0xff]
  %v414 = vld [vmem:[%s1 + $0xbd8] sm:$0xff]
  %v415 = vld [vmem:[%s1 + $0xbe0] sm:$0xff]
  %v416 = vld [vmem:[%s1 + $0xbe8] sm:$0xff]
  %v417 = vld [vmem:[%s1 + $0xbf0] sm:$0xff]
  %v418 = vld [vmem:[%s1 + $0xbf8] sm:$0xff]
  %v419 = vld [vmem:[%s1 + $0xc00] sm:$0xff]
  %v420 = vld [vmem:[%s1 + $0xc08] sm:$0xff]
  %v421 = vld [vmem:[%s1 + $0xc10] sm:$0xff]
  %v422 = vld [vmem:[%s1 + $0xc18] sm:$0xff]
  %v423 = vld [vmem:[%s1 + $0xc20] sm:$0xff]
  %v424 = vld [vmem:[%s1 + $0xc28] sm:$0xff]
  %v425 = vld [vmem:[%s1 + $0xc30] sm:$0xff]
  %v426 = vld [vmem:[%s1 + $0xc38] sm:$0xff]
  %v427 = vld [vmem:[%s1 + $0xc40] sm:$0xff]
  %v428 = vld [vmem:[%s1 + $0xc48] sm:$0xff]
  %v429 = vld [vmem:[%s1 + $0xc50] sm:$0xff]
  %v430 = vld [vmem:[%s1 + $0xc58] sm:$0xff]
  %v431 = vld [vmem:[%s1 + $0xc60] sm:$0xff]
  %v432 = vld [vmem:[%s1 + $0xc68] sm:$0xff]
  %v433 = vld [vmem:[%s1 + $0xc70] sm:$0xff]
  %v434 = vld [vmem:[%s1 + $0xc78] sm:$0xff]
  %v435 = vld [vmem:[%s1 + $0xc80] sm:$0xff]
  %v436 = vld [vmem:[%s1 + $0xc88] sm:$0xff]
  %v437 = vld [vmem:[%s1 + $0xc90] sm:$0xff]
  %v438 = vld [vmem:[%s1 + $0xc98] sm:$0xff]
  %v439 = vld [vmem:[%s1 + $0xca0] sm:$0xff]
  %v440 = vld [vmem:[%s1 + $0xca8] sm:$0xff]
  %v441 = vld [vmem:[%s1 + $0xcb0] sm:$0xff]
  %v442 = vld [vmem:[%s1 + $0xcb8] sm:$0xff]
  %v443 = vld [vmem:[%s1 + $0xcc0] sm:$0xff]
  %v444 = vld [vmem:[%s1 + $0xcc8] sm:$0xff]
  %v445 = vld [vmem:[%s1 + $0xcd0] sm:$0xff]
  %v446 = vld [vmem:[%s1 + $0xcd8] sm:$0xff]
  %v447 = vld [vmem:[%s1 + $0xce0] sm:$0xff]
  %v448 = vld [vmem:[%s1 + $0xce8] sm:$0xff]
  %v449 = vld [vmem:[%s1 + $0xcf0] sm:$0xff]
  %v450 = vld [vmem:[%s1 + $0xcf8] sm:$0xff]
  %v451 = vld [vmem:[%s1 + $0xd00] sm:$0xff]
  %v452 = vld [vmem:[%s1 + $0xd08] sm:$0xff]
  %v453 = vld [vmem:[%s1 + $0xd10] sm:$0xff]
  %v454 = vld [vmem:[%s1 + $0xd18] sm:$0xff]
  %v455 = vld [vmem:[%s1 + $0xd20] sm:$0xff]
  %v456 = vld [vmem:[%s1 + $0xd28] sm:$0xff]
  %v457 = vld [vmem:[%s1 + $0xd30] sm:$0xff]
  %v458 = vld [vmem:[%s1 + $0xd38] sm:$0xff]
  %v459 = vld [vmem:[%s1 + $0xd40] sm:$0xff]
  %v460 = vld [vmem:[%s1 + $0xd48] sm:$0xff]
  %v461 = vld [vmem:[%s1 + $0xd50] sm:$0xff]
  %v462 = vld [vmem:[%s1 + $0xd58] sm:$0xff]
  %v463 = vld [vmem:[%s1 + $0xd60] sm:$0xff]
  %v464 = vld [vmem:[%s1 + $0xd68] sm:$0xff]
  %v465 = vld [vmem:[%s1 + $0xd70] sm:$0xff]
  %v466 = vld [vmem:[%s1 + $0xd78] sm:$0xff]
  %v467 = vld [vmem:[%s1 + $0xd80] sm:$0xff]
  %v468 = vld [vmem:[%s1 + $0xd88] sm:$0xff]
  %v469 = vld [vmem:[%s1 + $0xd90] sm:$0xff]
  %v470 = vld [vmem:[%s1 + $0xd98] sm:$0xff]
  %v471 = vld [vmem:[%s1 + $0xda0] sm:$0xff]
  %v472 = vld [vmem:[%s1 + $0xda8] sm:$0xff]
  %v473 = vld [vmem:[%s1 + $0xdb0] sm:$0xff]
  %v474 = vld [vmem:[%s1 + $0xdb8] sm:$0xff]
  %v475 = vld [vmem:[%s1 + $0xdc0] sm:$0xff]
  %v476 = vld [vmem:[%s1 + $0xdc8] sm:$0xff]
  %v477 = vld [vmem:[%s1 + $0xdd0] sm:$0xff]
  %v478 = vld [vmem:[%s1 + $0xdd8] sm:$0xff]
  %v479 = vld [vmem:[%s1 + $0xde0] sm:$0xff]
  %v480 = vld [vmem:[%s1 + $0xde8] sm:$0xff]
  %v481 = vld [vmem:[%s1 + $0xdf0] sm:$0xff]
  %v482 = vld [vmem:[%s1 + $0xdf8] sm:$0xff]
  %v483 = vld [vmem:[%s1 + $0xe00] sm:$0xff]
  %v484 = vld [vmem:[%s1 + $0xe08] sm:$0xff]
  %v485 = vld [vmem:[%s1 + $0xe10] sm:$0xff]
  %v486 = vld [vmem:[%s1 + $0xe18] sm:$0xff]
  %v487 = vld [vmem:[%s1 + $0xe20] sm:$0xff]
  %v488 = vld [vmem:[%s1 + $0xe28] sm:$0xff]
  %v489 = vld [vmem:[%s1 + $0xe30] sm:$0xff]
  %v490 = vld [vmem:[%s1 + $0xe38] sm:$0xff]
  %v491 = vld [vmem:[%s1 + $0xe40] sm:$0xff]
  %v492 = vld [vmem:[%s1 + $0xe48] sm:$0xff]
  %v493 = vld [vmem:[%s1 + $0xe50] sm:$0xff]
  %v494 = vld [vmem:[%s1 + $0xe58] sm:$0xff]
  %v495 = vld [vmem:[%s1 + $0xe60] sm:$0xff]
  %v496 = vld [vmem:[%s1 + $0xe68] sm:$0xff]
  %v497 = vld [vmem:[%s1 + $0xe70] sm:$0xff]
  %v498 = vld [vmem:[%s1 + $0xe78] sm:$0xff]
  %v499 = vld [vmem:[%s1 + $0xe80] sm:$0xff]
  %v500 = vld [vmem:[%s1 + $0xe88] sm:$0xff]
  %v501 = vld [vmem:[%s1 + $0xe90] sm:$0xff]
  %v502 = vld [vmem:[%s1 + $0xe98] sm:$0xff]
  %v503 = vld [vmem:[%s1 + $0xea0] sm:$0xff]
  %v504 = vld [vmem:[%s1 + $0xea8] sm:$0xff]
  %v505 = vld [vmem:[%s1 + $0xeb0] sm:$0xff]
  %v506 = vld [vmem:[%s1 + $0xeb8] sm:$0xff]
  %v507 = vld [vmem:[%s1 + $0xec0] sm:$0xff]
  %v508 = vld [vmem:[%s1 + $0xec8] sm:$0xff]
  %v509 = vld [vmem:[%s1 + $0xed0] sm:$0xff]
  %v510 = vld [vmem:[%s1 + $0xed8] sm:$0xff]
  %v511 = vld [vmem:[%s1 + $0xee0] sm:$0xff]
  %v512 = vld [vmem:[%s1 + $0xee8] sm:$0xff]
  %v513 = vld [vmem:[%s1 + $0xef0] sm:$0xff]
  %v514 = vld [vmem:[%s1 + $0xef8] sm:$0xff]
  %v515 = vld [vmem:[%s1 + $0xf00] sm:$0xff]
  %v516 = vld [vmem:[%s1 + $0xf08] sm:$0xff]
  %v517 = vld [vmem:[%s1 + $0xf10] sm:$0xff]
  %v518 = vld [vmem:[%s1 + $0xf18] sm:$0xff]
  %v519 = vld [vmem:[%s1 + $0xf20] sm:$0xff]
  %v520 = vld [vmem:[%s1 + $0xf28] sm:$0xff]
  %v521 = vld [vmem:[%s1 + $0xf30] sm:$0xff]
  %v522 = vld [vmem:[%s1 + $0xf38] sm:$0xff]
  %v523 = vld [vmem:[%s1 + $0xf40] sm:$0xff]
  %v524 = vld [vmem:[%s1 + $0xf48] sm:$0xff]
  %v525 = vld [vmem:[%s1 + $0xf50] sm:$0xff]
  %v526 = vld [vmem:[%s1 + $0xf58] sm:$0xff]
  %v527 = vld [vmem:[%s1 + $0xf60] sm:$0xff]
  %v528 = vld [vmem:[%s1 + $0xf68] sm:$0xff]
  %v529 = vld [vmem:[%s1 + $0xf70] sm:$0xff]
  %v530 = vld [vmem:[%s1 + $0xf78] sm:$0xff]
  %v531 = vld [vmem:[%s1 + $0xf80] sm:$0xff]
  %v532 = vld [vmem:[%s1 + $0xf88] sm:$0xff]
  %v533 = vld [vmem:[%s1 + $0xf90] sm:$0xff]
  %v534 = vld [vmem:[%s1 + $0xf98] sm:$0xff]
  %v535 = vld [vmem:[%s1 + $0xfa0] sm:$0xff]
  %v536 = vld [vmem:[%s1 + $0xfa8] sm:$0xff]
  %v537 = vld [vmem:[%s1 + $0xfb0] sm:$0xff]
  %v538 = vld [vmem:[%s1 + $0xfb8] sm:$0xff]
  %v539 = vld [vmem:[%s1 + $0xfc0] sm:$0xff]
  %v540 = vld [vmem:[%s1 + $0xfc8] sm:$0xff]
  %v541 = vld [vmem:[%s1 + $0xfd0] sm:$0xff]
  %v542 = vld [vmem:[%s1 + $0xfd8] sm:$0xff]
  %v543 = vld [vmem:[%s1 + $0xfe0] sm:$0xff]
  %v544 = vld [vmem:[%s1 + $0xfe8] sm:$0xff]
  %v545 = vld [vmem:[%s1 + $0xff0] sm:$0xff]
  %v546 = vld [vmem:[%s1 + $0xff8] sm:$0xff]
  %v548 = vcombine.high %v34, %v34
  %v550 = vunpack.c.l.s4 1966171168
  %v551 = vunpack.c.0.s8 %v550
  %v552 = vlaneseq
  %v553 = vshrl.u32 %v552, 7
  %v554 = vsub.s32 %v551, %v553
  %v555 = vrot.slane %v34, %v554
  %v557 = vunpack.c.l.s4 1966171168
  %v558 = vunpack.c.0.s8 %v557
  %v559 = vlaneseq
  %v560 = vshrl.u32 %v559, 7
  %v561 = vsub.s32 %v558, %v560
  %v562 = vrot.slane %v548, %v561
  %v563 = vcombine.high %v555, %v555
  %v564 = vcombine.high %v562, %v562
  %v566 = vunpack.c.l.s4 1966171168
  %v567 = vunpack.c.0.s8 %v566
  %v568 = vlaneseq
  %v569 = vshrl.u32 %v568, 7
  %v570 = vsub.s32 %v567, %v569
  %v571 = vrot.slane %v555, %v570
  %v573 = vunpack.c.l.s4 1966171168
  %v574 = vunpack.c.0.s8 %v573
  %v575 = vlaneseq
  %v576 = vshrl.u32 %v575, 7
  %v577 = vsub.s32 %v574, %v576
  %v578 = vrot.slane %v562, %v577
  %v580 = vunpack.c.l.s4 1966171168
  %v581 = vunpack.c.0.s8 %v580
  %v582 = vlaneseq
  %v583 = vshrl.u32 %v582, 7
  %v584 = vsub.s32 %v581, %v583
  %v585 = vrot.slane %v563, %v584
  %v587 = vunpack.c.l.s4 1966171168
  %v588 = vunpack.c.0.s8 %v587
  %v589 = vlaneseq
  %v590 = vshrl.u32 %v589, 7
  %v591 = vsub.s32 %v588, %v590
  %v592 = vrot.slane %v564, %v591
  %v593 = vcombine.high %v571, %v571
  %v594 = vcombine.high %v578, %v578
  %v595 = vcombine.high %v585, %v585
  %v596 = vcombine.high %v592, %v592
  %v1117 = vunpack.c.l.b16 %v35
  %v1118 = vunpack.c.h.b16 %v35
  %v1119 = vunpack.c.l.b16 %v36
  %v1120 = vunpack.c.h.b16 %v36
  %v1121 = vunpack.c.l.b16 %v37
  %v1122 = vunpack.c.h.b16 %v37
  %v1123 = vunpack.c.l.b16 %v38
  %v1124 = vunpack.c.h.b16 %v38
  %v1125 = vunpack.c.l.b16 %v39
  %v1126 = vunpack.c.h.b16 %v39
  %v1127 = vunpack.c.l.b16 %v40
  %v1128 = vunpack.c.h.b16 %v40
  %v1129 = vunpack.c.l.b16 %v41
  %v1130 = vunpack.c.h.b16 %v41
  %v1131 = vunpack.c.l.b16 %v42
  %v1132 = vunpack.c.h.b16 %v42
  %v1133 = vunpack.c.l.b16 %v43
  %v1134 = vunpack.c.h.b16 %v43
  %v1135 = vunpack.c.l.b16 %v44
  %v1136 = vunpack.c.h.b16 %v44
  %v1137 = vunpack.c.l.b16 %v45
  %v1138 = vunpack.c.h.b16 %v45
  %v1139 = vunpack.c.l.b16 %v46
  %v1140 = vunpack.c.h.b16 %v46
  %v1141 = vunpack.c.l.b16 %v47
  %v1142 = vunpack.c.h.b16 %v47
  %v1143 = vunpack.c.l.b16 %v48
  %v1144 = vunpack.c.h.b16 %v48
  %v1145 = vunpack.c.l.b16 %v49
  %v1146 = vunpack.c.h.b16 %v49
  %v1147 = vunpack.c.l.b16 %v50
  %v1148 = vunpack.c.h.b16 %v50
  %v1149 = vunpack.c.l.b16 %v51
  %v1150 = vunpack.c.h.b16 %v51
  %v1151 = vunpack.c.l.b16 %v52
  %v1152 = vunpack.c.h.b16 %v52
  %v1153 = vunpack.c.l.b16 %v53
  %v1154 = vunpack.c.h.b16 %v53
  %v1155 = vunpack.c.l.b16 %v54
  %v1156 = vunpack.c.h.b16 %v54
  %v1157 = vunpack.c.l.b16 %v55
  %v1158 = vunpack.c.h.b16 %v55
  %v1159 = vunpack.c.l.b16 %v56
  %v1160 = vunpack.c.h.b16 %v56
  %v1161 = vunpack.c.l.b16 %v57
  %v1162 = vunpack.c.h.b16 %v57
  %v1163 = vunpack.c.l.b16 %v58
  %v1164 = vunpack.c.h.b16 %v58
  %v1165 = vunpack.c.l.b16 %v59
  %v1166 = vunpack.c.h.b16 %v59
  %v1167 = vunpack.c.l.b16 %v60
  %v1168 = vunpack.c.h.b16 %v60
  %v1169 = vunpack.c.l.b16 %v61
  %v1170 = vunpack.c.h.b16 %v61
  %v1171 = vunpack.c.l.b16 %v62
  %v1172 = vunpack.c.h.b16 %v62
  %v1173 = vunpack.c.l.b16 %v63
  %v1174 = vunpack.c.h.b16 %v63
  %v1175 = vunpack.c.l.b16 %v64
  %v1176 = vunpack.c.h.b16 %v64
  %v1177 = vunpack.c.l.b16 %v65
  %v1178 = vunpack.c.h.b16 %v65
  %v1179 = vunpack.c.l.b16 %v66
  %v1180 = vunpack.c.h.b16 %v66
  %v1181 = vunpack.c.l.b16 %v67
  %v1182 = vunpack.c.h.b16 %v67
  %v1183 = vunpack.c.l.b16 %v68
  %v1184 = vunpack.c.h.b16 %v68
  %v1185 = vunpack.c.l.b16 %v69
  %v1186 = vunpack.c.h.b16 %v69
  %v1187 = vunpack.c.l.b16 %v70
  %v1188 = vunpack.c.h.b16 %v70
  %v1189 = vunpack.c.l.b16 %v71
  %v1190 = vunpack.c.h.b16 %v71
  %v1191 = vunpack.c.l.b16 %v72
  %v1192 = vunpack.c.h.b16 %v72
  %v1193 = vunpack.c.l.b16 %v73
  %v1194 = vunpack.c.h.b16 %v73
  %v1195 = vunpack.c.l.b16 %v74
  %v1196 = vunpack.c.h.b16 %v74
  %v1197 = vunpack.c.l.b16 %v75
  %v1198 = vunpack.c.h.b16 %v75
  %v1199 = vunpack.c.l.b16 %v76
  %v1200 = vunpack.c.h.b16 %v76
  %v1201 = vunpack.c.l.b16 %v77
  %v1202 = vunpack.c.h.b16 %v77
  %v1203 = vunpack.c.l.b16 %v78
  %v1204 = vunpack.c.h.b16 %v78
  %v1205 = vunpack.c.l.b16 %v79
  %v1206 = vunpack.c.h.b16 %v79
  %v1207 = vunpack.c.l.b16 %v80
  %v1208 = vunpack.c.h.b16 %v80
  %v1209 = vunpack.c.l.b16 %v81
  %v1210 = vunpack.c.h.b16 %v81
  %v1211 = vunpack.c.l.b16 %v82
  %v1212 = vunpack.c.h.b16 %v82
  %v1213 = vunpack.c.l.b16 %v83
  %v1214 = vunpack.c.h.b16 %v83
  %v1215 = vunpack.c.l.b16 %v84
  %v1216 = vunpack.c.h.b16 %v84
  %v1217 = vunpack.c.l.b16 %v85
  %v1218 = vunpack.c.h.b16 %v85
  %v1219 = vunpack.c.l.b16 %v86
  %v1220 = vunpack.c.h.b16 %v86
  %v1221 = vunpack.c.l.b16 %v87
  %v1222 = vunpack.c.h.b16 %v87
  %v1223 = vunpack.c.l.b16 %v88
  %v1224 = vunpack.c.h.b16 %v88
  %v1225 = vunpack.c.l.b16 %v89
  %v1226 = vunpack.c.h.b16 %v89
  %v1227 = vunpack.c.l.b16 %v90
  %v1228 = vunpack.c.h.b16 %v90
  %v1229 = vunpack.c.l.b16 %v91
  %v1230 = vunpack.c.h.b16 %v91
  %v1231 = vunpack.c.l.b16 %v92
  %v1232 = vunpack.c.h.b16 %v92
  %v1233 = vunpack.c.l.b16 %v93
  %v1234 = vunpack.c.h.b16 %v93
  %v1235 = vunpack.c.l.b16 %v94
  %v1236 = vunpack.c.h.b16 %v94
  %v1237 = vunpack.c.l.b16 %v95
  %v1238 = vunpack.c.h.b16 %v95
  %v1239 = vunpack.c.l.b16 %v96
  %v1240 = vunpack.c.h.b16 %v96
  %v1241 = vunpack.c.l.b16 %v97
  %v1242 = vunpack.c.h.b16 %v97
  %v1243 = vunpack.c.l.b16 %v98
  %v1244 = vunpack.c.h.b16 %v98
  %v1245 = vunpack.c.l.b16 %v99
  %v1246 = vunpack.c.h.b16 %v99
  %v1247 = vunpack.c.l.b16 %v100
  %v1248 = vunpack.c.h.b16 %v100
  %v1249 = vunpack.c.l.b16 %v101
  %v1250 = vunpack.c.h.b16 %v101
  %v1251 = vunpack.c.l.b16 %v102
  %v1252 = vunpack.c.h.b16 %v102
  %v1253 = vunpack.c.l.b16 %v103
  %v1254 = vunpack.c.h.b16 %v103
  %v1255 = vunpack.c.l.b16 %v104
  %v1256 = vunpack.c.h.b16 %v104
  %v1257 = vunpack.c.l.b16 %v105
  %v1258 = vunpack.c.h.b16 %v105
  %v1259 = vunpack.c.l.b16 %v106
  %v1260 = vunpack.c.h.b16 %v106
  %v1261 = vunpack.c.l.b16 %v107
  %v1262 = vunpack.c.h.b16 %v107
  %v1263 = vunpack.c.l.b16 %v108
  %v1264 = vunpack.c.h.b16 %v108
  %v1265 = vunpack.c.l.b16 %v109
  %v1266 = vunpack.c.h.b16 %v109
  %v1267 = vunpack.c.l.b16 %v110
  %v1268 = vunpack.c.h.b16 %v110
  %v1269 = vunpack.c.l.b16 %v111
  %v1270 = vunpack.c.h.b16 %v111
  %v1271 = vunpack.c.l.b16 %v112
  %v1272 = vunpack.c.h.b16 %v112
  %v1273 = vunpack.c.l.b16 %v113
  %v1274 = vunpack.c.h.b16 %v113
  %v1275 = vunpack.c.l.b16 %v114
  %v1276 = vunpack.c.h.b16 %v114
  %v1277 = vunpack.c.l.b16 %v115
  %v1278 = vunpack.c.h.b16 %v115
  %v1279 = vunpack.c.l.b16 %v116
  %v1280 = vunpack.c.h.b16 %v116
  %v1281 = vunpack.c.l.b16 %v117
  %v1282 = vunpack.c.h.b16 %v117
  %v1283 = vunpack.c.l.b16 %v118
  %v1284 = vunpack.c.h.b16 %v118
  %v1285 = vunpack.c.l.b16 %v119
  %v1286 = vunpack.c.h.b16 %v119
  %v1287 = vunpack.c.l.b16 %v120
  %v1288 = vunpack.c.h.b16 %v120
  %v1289 = vunpack.c.l.b16 %v121
  %v1290 = vunpack.c.h.b16 %v121
  %v1291 = vunpack.c.l.b16 %v122
  %v1292 = vunpack.c.h.b16 %v122
  %v1293 = vunpack.c.l.b16 %v123
  %v1294 = vunpack.c.h.b16 %v123
  %v1295 = vunpack.c.l.b16 %v124
  %v1296 = vunpack.c.h.b16 %v124
  %v1297 = vunpack.c.l.b16 %v125
  %v1298 = vunpack.c.h.b16 %v125
  %v1299 = vunpack.c.l.b16 %v126
  %v1300 = vunpack.c.h.b16 %v126
  %v1301 = vunpack.c.l.b16 %v127
  %v1302 = vunpack.c.h.b16 %v127
  %v1303 = vunpack.c.l.b16 %v128
  %v1304 = vunpack.c.h.b16 %v128
  %v1305 = vunpack.c.l.b16 %v129
  %v1306 = vunpack.c.h.b16 %v129
  %v1307 = vunpack.c.l.b16 %v130
  %v1308 = vunpack.c.h.b16 %v130
  %v1309 = vunpack.c.l.b16 %v131
  %v1310 = vunpack.c.h.b16 %v131
  %v1311 = vunpack.c.l.b16 %v132
  %v1312 = vunpack.c.h.b16 %v132
  %v1313 = vunpack.c.l.b16 %v133
  %v1314 = vunpack.c.h.b16 %v133
  %v1315 = vunpack.c.l.b16 %v134
  %v1316 = vunpack.c.h.b16 %v134
  %v1317 = vunpack.c.l.b16 %v135
  %v1318 = vunpack.c.h.b16 %v135
  %v1319 = vunpack.c.l.b16 %v136
  %v1320 = vunpack.c.h.b16 %v136
  %v1321 = vunpack.c.l.b16 %v137
  %v1322 = vunpack.c.h.b16 %v137
  %v1323 = vunpack.c.l.b16 %v138
  %v1324 = vunpack.c.h.b16 %v138
  %v1325 = vunpack.c.l.b16 %v139
  %v1326 = vunpack.c.h.b16 %v139
  %v1327 = vunpack.c.l.b16 %v140
  %v1328 = vunpack.c.h.b16 %v140
  %v1329 = vunpack.c.l.b16 %v141
  %v1330 = vunpack.c.h.b16 %v141
  %v1331 = vunpack.c.l.b16 %v142
  %v1332 = vunpack.c.h.b16 %v142
  %v1333 = vunpack.c.l.b16 %v143
  %v1334 = vunpack.c.h.b16 %v143
  %v1335 = vunpack.c.l.b16 %v144
  %v1336 = vunpack.c.h.b16 %v144
  %v1337 = vunpack.c.l.b16 %v145
  %v1338 = vunpack.c.h.b16 %v145
  %v1339 = vunpack.c.l.b16 %v146
  %v1340 = vunpack.c.h.b16 %v146
  %v1341 = vunpack.c.l.b16 %v147
  %v1342 = vunpack.c.h.b16 %v147
  %v1343 = vunpack.c.l.b16 %v148
  %v1344 = vunpack.c.h.b16 %v148
  %v1345 = vunpack.c.l.b16 %v149
  %v1346 = vunpack.c.h.b16 %v149
  %v1347 = vunpack.c.l.b16 %v150
  %v1348 = vunpack.c.h.b16 %v150
  %v1349 = vunpack.c.l.b16 %v151
  %v1350 = vunpack.c.h.b16 %v151
  %v1351 = vunpack.c.l.b16 %v152
  %v1352 = vunpack.c.h.b16 %v152
  %v1353 = vunpack.c.l.b16 %v153
  %v1354 = vunpack.c.h.b16 %v153
  %v1355 = vunpack.c.l.b16 %v154
  %v1356 = vunpack.c.h.b16 %v154
  %v1357 = vunpack.c.l.b16 %v155
  %v1358 = vunpack.c.h.b16 %v155
  %v1359 = vunpack.c.l.b16 %v156
  %v1360 = vunpack.c.h.b16 %v156
  %v1361 = vunpack.c.l.b16 %v157
  %v1362 = vunpack.c.h.b16 %v157
  %v1363 = vunpack.c.l.b16 %v158
  %v1364 = vunpack.c.h.b16 %v158
  %v1365 = vunpack.c.l.b16 %v159
  %v1366 = vunpack.c.h.b16 %v159
  %v1367 = vunpack.c.l.b16 %v160
  %v1368 = vunpack.c.h.b16 %v160
  %v1369 = vunpack.c.l.b16 %v161
  %v1370 = vunpack.c.h.b16 %v161
  %v1371 = vunpack.c.l.b16 %v162
  %v1372 = vunpack.c.h.b16 %v162
  %v1373 = vunpack.c.l.b16 %v163
  %v1374 = vunpack.c.h.b16 %v163
  %v1375 = vunpack.c.l.b16 %v164
  %v1376 = vunpack.c.h.b16 %v164
  %v1377 = vunpack.c.l.b16 %v165
  %v1378 = vunpack.c.h.b16 %v165
  %v1379 = vunpack.c.l.b16 %v166
  %v1380 = vunpack.c.h.b16 %v166
  %v1381 = vunpack.c.l.b16 %v167
  %v1382 = vunpack.c.h.b16 %v167
  %v1383 = vunpack.c.l.b16 %v168
  %v1384 = vunpack.c.h.b16 %v168
  %v1385 = vunpack.c.l.b16 %v169
  %v1386 = vunpack.c.h.b16 %v169
  %v1387 = vunpack.c.l.b16 %v170
  %v1388 = vunpack.c.h.b16 %v170
  %v1389 = vunpack.c.l.b16 %v171
  %v1390 = vunpack.c.h.b16 %v171
  %v1391 = vunpack.c.l.b16 %v172
  %v1392 = vunpack.c.h.b16 %v172
  %v1393 = vunpack.c.l.b16 %v173
  %v1394 = vunpack.c.h.b16 %v173
  %v1395 = vunpack.c.l.b16 %v174
  %v1396 = vunpack.c.h.b16 %v174
  %v1397 = vunpack.c.l.b16 %v175
  %v1398 = vunpack.c.h.b16 %v175
  %v1399 = vunpack.c.l.b16 %v176
  %v1400 = vunpack.c.h.b16 %v176
  %v1401 = vunpack.c.l.b16 %v177
  %v1402 = vunpack.c.h.b16 %v177
  %v1403 = vunpack.c.l.b16 %v178
  %v1404 = vunpack.c.h.b16 %v178
  %v1405 = vunpack.c.l.b16 %v179
  %v1406 = vunpack.c.h.b16 %v179
  %v1407 = vunpack.c.l.b16 %v180
  %v1408 = vunpack.c.h.b16 %v180
  %v1409 = vunpack.c.l.b16 %v181
  %v1410 = vunpack.c.h.b16 %v181
  %v1411 = vunpack.c.l.b16 %v182
  %v1412 = vunpack.c.h.b16 %v182
  %v1413 = vunpack.c.l.b16 %v183
  %v1414 = vunpack.c.h.b16 %v183
  %v1415 = vunpack.c.l.b16 %v184
  %v1416 = vunpack.c.h.b16 %v184
  %v1417 = vunpack.c.l.b16 %v185
  %v1418 = vunpack.c.h.b16 %v185
  %v1419 = vunpack.c.l.b16 %v186
  %v1420 = vunpack.c.h.b16 %v186
  %v1421 = vunpack.c.l.b16 %v187
  %v1422 = vunpack.c.h.b16 %v187
  %v1423 = vunpack.c.l.b16 %v188
  %v1424 = vunpack.c.h.b16 %v188
  %v1425 = vunpack.c.l.b16 %v189
  %v1426 = vunpack.c.h.b16 %v189
  %v1427 = vunpack.c.l.b16 %v190
  %v1428 = vunpack.c.h.b16 %v190
  %v1429 = vunpack.c.l.b16 %v191
  %v1430 = vunpack.c.h.b16 %v191
  %v1431 = vunpack.c.l.b16 %v192
  %v1432 = vunpack.c.h.b16 %v192
  %v1433 = vunpack.c.l.b16 %v193
  %v1434 = vunpack.c.h.b16 %v193
  %v1435 = vunpack.c.l.b16 %v194
  %v1436 = vunpack.c.h.b16 %v194
  %v1437 = vunpack.c.l.b16 %v195
  %v1438 = vunpack.c.h.b16 %v195
  %v1439 = vunpack.c.l.b16 %v196
  %v1440 = vunpack.c.h.b16 %v196
  %v1441 = vunpack.c.l.b16 %v197
  %v1442 = vunpack.c.h.b16 %v197
  %v1443 = vunpack.c.l.b16 %v198
  %v1444 = vunpack.c.h.b16 %v198
  %v1445 = vunpack.c.l.b16 %v199
  %v1446 = vunpack.c.h.b16 %v199
  %v1447 = vunpack.c.l.b16 %v200
  %v1448 = vunpack.c.h.b16 %v200
  %v1449 = vunpack.c.l.b16 %v201
  %v1450 = vunpack.c.h.b16 %v201
  %v1451 = vunpack.c.l.b16 %v202
  %v1452 = vunpack.c.h.b16 %v202
  %v1453 = vunpack.c.l.b16 %v203
  %v1454 = vunpack.c.h.b16 %v203
  %v1455 = vunpack.c.l.b16 %v204
  %v1456 = vunpack.c.h.b16 %v204
  %v1457 = vunpack.c.l.b16 %v205
  %v1458 = vunpack.c.h.b16 %v205
  %v1459 = vunpack.c.l.b16 %v206
  %v1460 = vunpack.c.h.b16 %v206
  %v1461 = vunpack.c.l.b16 %v207
  %v1462 = vunpack.c.h.b16 %v207
  %v1463 = vunpack.c.l.b16 %v208
  %v1464 = vunpack.c.h.b16 %v208
  %v1465 = vunpack.c.l.b16 %v209
  %v1466 = vunpack.c.h.b16 %v209
  %v1467 = vunpack.c.l.b16 %v210
  %v1468 = vunpack.c.h.b16 %v210
  %v1469 = vunpack.c.l.b16 %v211
  %v1470 = vunpack.c.h.b16 %v211
  %v1471 = vunpack.c.l.b16 %v212
  %v1472 = vunpack.c.h.b16 %v212
  %v1473 = vunpack.c.l.b16 %v213
  %v1474 = vunpack.c.h.b16 %v213
  %v1475 = vunpack.c.l.b16 %v214
  %v1476 = vunpack.c.h.b16 %v214
  %v1477 = vunpack.c.l.b16 %v215
  %v1478 = vunpack.c.h.b16 %v215
  %v1479 = vunpack.c.l.b16 %v216
  %v1480 = vunpack.c.h.b16 %v216
  %v1481 = vunpack.c.l.b16 %v217
  %v1482 = vunpack.c.h.b16 %v217
  %v1483 = vunpack.c.l.b16 %v218
  %v1484 = vunpack.c.h.b16 %v218
  %v1485 = vunpack.c.l.b16 %v219
  %v1486 = vunpack.c.h.b16 %v219
  %v1487 = vunpack.c.l.b16 %v220
  %v1488 = vunpack.c.h.b16 %v220
  %v1489 = vunpack.c.l.b16 %v221
  %v1490 = vunpack.c.h.b16 %v221
  %v1491 = vunpack.c.l.b16 %v222
  %v1492 = vunpack.c.h.b16 %v222
  %v1493 = vunpack.c.l.b16 %v223
  %v1494 = vunpack.c.h.b16 %v223
  %v1495 = vunpack.c.l.b16 %v224
  %v1496 = vunpack.c.h.b16 %v224
  %v1497 = vunpack.c.l.b16 %v225
  %v1498 = vunpack.c.h.b16 %v225
  %v1499 = vunpack.c.l.b16 %v226
  %v1500 = vunpack.c.h.b16 %v226
  %v1501 = vunpack.c.l.b16 %v227
  %v1502 = vunpack.c.h.b16 %v227
  %v1503 = vunpack.c.l.b16 %v228
  %v1504 = vunpack.c.h.b16 %v228
  %v1505 = vunpack.c.l.b16 %v229
  %v1506 = vunpack.c.h.b16 %v229
  %v1507 = vunpack.c.l.b16 %v230
  %v1508 = vunpack.c.h.b16 %v230
  %v1509 = vunpack.c.l.b16 %v231
  %v1510 = vunpack.c.h.b16 %v231
  %v1511 = vunpack.c.l.b16 %v232
  %v1512 = vunpack.c.h.b16 %v232
  %v1513 = vunpack.c.l.b16 %v233
  %v1514 = vunpack.c.h.b16 %v233
  %v1515 = vunpack.c.l.b16 %v234
  %v1516 = vunpack.c.h.b16 %v234
  %v1517 = vunpack.c.l.b16 %v235
  %v1518 = vunpack.c.h.b16 %v235
  %v1519 = vunpack.c.l.b16 %v236
  %v1520 = vunpack.c.h.b16 %v236
  %v1521 = vunpack.c.l.b16 %v237
  %v1522 = vunpack.c.h.b16 %v237
  %v1523 = vunpack.c.l.b16 %v238
  %v1524 = vunpack.c.h.b16 %v238
  %v1525 = vunpack.c.l.b16 %v239
  %v1526 = vunpack.c.h.b16 %v239
  %v1527 = vunpack.c.l.b16 %v240
  %v1528 = vunpack.c.h.b16 %v240
  %v1529 = vunpack.c.l.b16 %v241
  %v1530 = vunpack.c.h.b16 %v241
  %v1531 = vunpack.c.l.b16 %v242
  %v1532 = vunpack.c.h.b16 %v242
  %v1533 = vunpack.c.l.b16 %v243
  %v1534 = vunpack.c.h.b16 %v243
  %v1535 = vunpack.c.l.b16 %v244
  %v1536 = vunpack.c.h.b16 %v244
  %v1537 = vunpack.c.l.b16 %v245
  %v1538 = vunpack.c.h.b16 %v245
  %v1539 = vunpack.c.l.b16 %v246
  %v1540 = vunpack.c.h.b16 %v246
  %v1541 = vunpack.c.l.b16 %v247
  %v1542 = vunpack.c.h.b16 %v247
  %v1543 = vunpack.c.l.b16 %v248
  %v1544 = vunpack.c.h.b16 %v248
  %v1545 = vunpack.c.l.b16 %v249
  %v1546 = vunpack.c.h.b16 %v249
  %v1547 = vunpack.c.l.b16 %v250
  %v1548 = vunpack.c.h.b16 %v250
  %v1549 = vunpack.c.l.b16 %v251
  %v1550 = vunpack.c.h.b16 %v251
  %v1551 = vunpack.c.l.b16 %v252
  %v1552 = vunpack.c.h.b16 %v252
  %v1553 = vunpack.c.l.b16 %v253
  %v1554 = vunpack.c.h.b16 %v253
  %v1555 = vunpack.c.l.b16 %v254
  %v1556 = vunpack.c.h.b16 %v254
  %v1557 = vunpack.c.l.b16 %v255
  %v1558 = vunpack.c.h.b16 %v255
  %v1559 = vunpack.c.l.b16 %v256
  %v1560 = vunpack.c.h.b16 %v256
  %v1561 = vunpack.c.l.b16 %v257
  %v1562 = vunpack.c.h.b16 %v257
  %v1563 = vunpack.c.l.b16 %v258
  %v1564 = vunpack.c.h.b16 %v258
  %v1565 = vunpack.c.l.b16 %v259
  %v1566 = vunpack.c.h.b16 %v259
  %v1567 = vunpack.c.l.b16 %v260
  %v1568 = vunpack.c.h.b16 %v260
  %v1569 = vunpack.c.l.b16 %v261
  %v1570 = vunpack.c.h.b16 %v261
  %v1571 = vunpack.c.l.b16 %v262
  %v1572 = vunpack.c.h.b16 %v262
  %v1573 = vunpack.c.l.b16 %v263
  %v1574 = vunpack.c.h.b16 %v263
  %v1575 = vunpack.c.l.b16 %v264
  %v1576 = vunpack.c.h.b16 %v264
  %v1577 = vunpack.c.l.b16 %v265
  %v1578 = vunpack.c.h.b16 %v265
  %v1579 = vunpack.c.l.b16 %v266
  %v1580 = vunpack.c.h.b16 %v266
  %v1581 = vunpack.c.l.b16 %v267
  %v1582 = vunpack.c.h.b16 %v267
  %v1583 = vunpack.c.l.b16 %v268
  %v1584 = vunpack.c.h.b16 %v268
  %v1585 = vunpack.c.l.b16 %v269
  %v1586 = vunpack.c.h.b16 %v269
  %v1587 = vunpack.c.l.b16 %v270
  %v1588 = vunpack.c.h.b16 %v270
  %v1589 = vunpack.c.l.b16 %v271
  %v1590 = vunpack.c.h.b16 %v271
  %v1591 = vunpack.c.l.b16 %v272
  %v1592 = vunpack.c.h.b16 %v272
  %v1593 = vunpack.c.l.b16 %v273
  %v1594 = vunpack.c.h.b16 %v273
  %v1595 = vunpack.c.l.b16 %v274
  %v1596 = vunpack.c.h.b16 %v274
  %v1597 = vunpack.c.l.b16 %v275
  %v1598 = vunpack.c.h.b16 %v275
  %v1599 = vunpack.c.l.b16 %v276
  %v1600 = vunpack.c.h.b16 %v276
  %v1601 = vunpack.c.l.b16 %v277
  %v1602 = vunpack.c.h.b16 %v277
  %v1603 = vunpack.c.l.b16 %v278
  %v1604 = vunpack.c.h.b16 %v278
  %v1605 = vunpack.c.l.b16 %v279
  %v1606 = vunpack.c.h.b16 %v279
  %v1607 = vunpack.c.l.b16 %v280
  %v1608 = vunpack.c.h.b16 %v280
  %v1609 = vunpack.c.l.b16 %v281
  %v1610 = vunpack.c.h.b16 %v281
  %v1611 = vunpack.c.l.b16 %v282
  %v1612 = vunpack.c.h.b16 %v282
  %v1613 = vunpack.c.l.b16 %v283
  %v1614 = vunpack.c.h.b16 %v283
  %v1615 = vunpack.c.l.b16 %v284
  %v1616 = vunpack.c.h.b16 %v284
  %v1617 = vunpack.c.l.b16 %v285
  %v1618 = vunpack.c.h.b16 %v285
  %v1619 = vunpack.c.l.b16 %v286
  %v1620 = vunpack.c.h.b16 %v286
  %v1621 = vunpack.c.l.b16 %v287
  %v1622 = vunpack.c.h.b16 %v287
  %v1623 = vunpack.c.l.b16 %v288
  %v1624 = vunpack.c.h.b16 %v288
  %v1625 = vunpack.c.l.b16 %v289
  %v1626 = vunpack.c.h.b16 %v289
  %v1627 = vunpack.c.l.b16 %v290
  %v1628 = vunpack.c.h.b16 %v290
  %v1629 = vunpack.c.l.b16 %v291
  %v1630 = vunpack.c.h.b16 %v291
  %v1631 = vunpack.c.l.b16 %v292
  %v1632 = vunpack.c.h.b16 %v292
  %v1633 = vunpack.c.l.b16 %v293
  %v1634 = vunpack.c.h.b16 %v293
  %v1635 = vunpack.c.l.b16 %v294
  %v1636 = vunpack.c.h.b16 %v294
  %v1637 = vunpack.c.l.b16 %v295
  %v1638 = vunpack.c.h.b16 %v295
  %v1639 = vunpack.c.l.b16 %v296
  %v1640 = vunpack.c.h.b16 %v296
  %v1641 = vunpack.c.l.b16 %v297
  %v1642 = vunpack.c.h.b16 %v297
  %v1643 = vunpack.c.l.b16 %v298
  %v1644 = vunpack.c.h.b16 %v298
  %v1645 = vunpack.c.l.b16 %v299
  %v1646 = vunpack.c.h.b16 %v299
  %v1647 = vunpack.c.l.b16 %v300
  %v1648 = vunpack.c.h.b16 %v300
  %v1649 = vunpack.c.l.b16 %v301
  %v1650 = vunpack.c.h.b16 %v301
  %v1651 = vunpack.c.l.b16 %v302
  %v1652 = vunpack.c.h.b16 %v302
  %v1653 = vunpack.c.l.b16 %v303
  %v1654 = vunpack.c.h.b16 %v303
  %v1655 = vunpack.c.l.b16 %v304
  %v1656 = vunpack.c.h.b16 %v304
  %v1657 = vunpack.c.l.b16 %v305
  %v1658 = vunpack.c.h.b16 %v305
  %v1659 = vunpack.c.l.b16 %v306
  %v1660 = vunpack.c.h.b16 %v306
  %v1661 = vunpack.c.l.b16 %v307
  %v1662 = vunpack.c.h.b16 %v307
  %v1663 = vunpack.c.l.b16 %v308
  %v1664 = vunpack.c.h.b16 %v308
  %v1665 = vunpack.c.l.b16 %v309
  %v1666 = vunpack.c.h.b16 %v309
  %v1667 = vunpack.c.l.b16 %v310
  %v1668 = vunpack.c.h.b16 %v310
  %v1669 = vunpack.c.l.b16 %v311
  %v1670 = vunpack.c.h.b16 %v311
  %v1671 = vunpack.c.l.b16 %v312
  %v1672 = vunpack.c.h.b16 %v312
  %v1673 = vunpack.c.l.b16 %v313
  %v1674 = vunpack.c.h.b16 %v313
  %v1675 = vunpack.c.l.b16 %v314
  %v1676 = vunpack.c.h.b16 %v314
  %v1677 = vunpack.c.l.b16 %v315
  %v1678 = vunpack.c.h.b16 %v315
  %v1679 = vunpack.c.l.b16 %v316
  %v1680 = vunpack.c.h.b16 %v316
  %v1681 = vunpack.c.l.b16 %v317
  %v1682 = vunpack.c.h.b16 %v317
  %v1683 = vunpack.c.l.b16 %v318
  %v1684 = vunpack.c.h.b16 %v318
  %v1685 = vunpack.c.l.b16 %v319
  %v1686 = vunpack.c.h.b16 %v319
  %v1687 = vunpack.c.l.b16 %v320
  %v1688 = vunpack.c.h.b16 %v320
  %v1689 = vunpack.c.l.b16 %v321
  %v1690 = vunpack.c.h.b16 %v321
  %v1691 = vunpack.c.l.b16 %v322
  %v1692 = vunpack.c.h.b16 %v322
  %v1693 = vunpack.c.l.b16 %v323
  %v1694 = vunpack.c.h.b16 %v323
  %v1695 = vunpack.c.l.b16 %v324
  %v1696 = vunpack.c.h.b16 %v324
  %v1697 = vunpack.c.l.b16 %v325
  %v1698 = vunpack.c.h.b16 %v325
  %v1699 = vunpack.c.l.b16 %v326
  %v1700 = vunpack.c.h.b16 %v326
  %v1701 = vunpack.c.l.b16 %v327
  %v1702 = vunpack.c.h.b16 %v327
  %v1703 = vunpack.c.l.b16 %v328
  %v1704 = vunpack.c.h.b16 %v328
  %v1705 = vunpack.c.l.b16 %v329
  %v1706 = vunpack.c.h.b16 %v329
  %v1707 = vunpack.c.l.b16 %v330
  %v1708 = vunpack.c.h.b16 %v330
  %v1709 = vunpack.c.l.b16 %v331
  %v1710 = vunpack.c.h.b16 %v331
  %v1711 = vunpack.c.l.b16 %v332
  %v1712 = vunpack.c.h.b16 %v332
  %v1713 = vunpack.c.l.b16 %v333
  %v1714 = vunpack.c.h.b16 %v333
  %v1715 = vunpack.c.l.b16 %v334
  %v1716 = vunpack.c.h.b16 %v334
  %v1717 = vunpack.c.l.b16 %v335
  %v1718 = vunpack.c.h.b16 %v335
  %v1719 = vunpack.c.l.b16 %v336
  %v1720 = vunpack.c.h.b16 %v336
  %v1721 = vunpack.c.l.b16 %v337
  %v1722 = vunpack.c.h.b16 %v337
  %v1723 = vunpack.c.l.b16 %v338
  %v1724 = vunpack.c.h.b16 %v338
  %v1725 = vunpack.c.l.b16 %v339
  %v1726 = vunpack.c.h.b16 %v339
  %v1727 = vunpack.c.l.b16 %v340
  %v1728 = vunpack.c.h.b16 %v340
  %v1729 = vunpack.c.l.b16 %v341
  %v1730 = vunpack.c.h.b16 %v341
  %v1731 = vunpack.c.l.b16 %v342
  %v1732 = vunpack.c.h.b16 %v342
  %v1733 = vunpack.c.l.b16 %v343
  %v1734 = vunpack.c.h.b16 %v343
  %v1735 = vunpack.c.l.b16 %v344
  %v1736 = vunpack.c.h.b16 %v344
  %v1737 = vunpack.c.l.b16 %v345
  %v1738 = vunpack.c.h.b16 %v345
  %v1739 = vunpack.c.l.b16 %v346
  %v1740 = vunpack.c.h.b16 %v346
  %v1741 = vunpack.c.l.b16 %v347
  %v1742 = vunpack.c.h.b16 %v347
  %v1743 = vunpack.c.l.b16 %v348
  %v1744 = vunpack.c.h.b16 %v348
  %v1745 = vunpack.c.l.b16 %v349
  %v1746 = vunpack.c.h.b16 %v349
  %v1747 = vunpack.c.l.b16 %v350
  %v1748 = vunpack.c.h.b16 %v350
  %v1749 = vunpack.c.l.b16 %v351
  %v1750 = vunpack.c.h.b16 %v351
  %v1751 = vunpack.c.l.b16 %v352
  %v1752 = vunpack.c.h.b16 %v352
  %v1753 = vunpack.c.l.b16 %v353
  %v1754 = vunpack.c.h.b16 %v353
  %v1755 = vunpack.c.l.b16 %v354
  %v1756 = vunpack.c.h.b16 %v354
  %v1757 = vunpack.c.l.b16 %v355
  %v1758 = vunpack.c.h.b16 %v355
  %v1759 = vunpack.c.l.b16 %v356
  %v1760 = vunpack.c.h.b16 %v356
  %v1761 = vunpack.c.l.b16 %v357
  %v1762 = vunpack.c.h.b16 %v357
  %v1763 = vunpack.c.l.b16 %v358
  %v1764 = vunpack.c.h.b16 %v358
  %v1765 = vunpack.c.l.b16 %v359
  %v1766 = vunpack.c.h.b16 %v359
  %v1767 = vunpack.c.l.b16 %v360
  %v1768 = vunpack.c.h.b16 %v360
  %v1769 = vunpack.c.l.b16 %v361
  %v1770 = vunpack.c.h.b16 %v361
  %v1771 = vunpack.c.l.b16 %v362
  %v1772 = vunpack.c.h.b16 %v362
  %v1773 = vunpack.c.l.b16 %v363
  %v1774 = vunpack.c.h.b16 %v363
  %v1775 = vunpack.c.l.b16 %v364
  %v1776 = vunpack.c.h.b16 %v364
  %v1777 = vunpack.c.l.b16 %v365
  %v1778 = vunpack.c.h.b16 %v365
  %v1779 = vunpack.c.l.b16 %v366
  %v1780 = vunpack.c.h.b16 %v366
  %v1781 = vunpack.c.l.b16 %v367
  %v1782 = vunpack.c.h.b16 %v367
  %v1783 = vunpack.c.l.b16 %v368
  %v1784 = vunpack.c.h.b16 %v368
  %v1785 = vunpack.c.l.b16 %v369
  %v1786 = vunpack.c.h.b16 %v369
  %v1787 = vunpack.c.l.b16 %v370
  %v1788 = vunpack.c.h.b16 %v370
  %v1789 = vunpack.c.l.b16 %v371
  %v1790 = vunpack.c.h.b16 %v371
  %v1791 = vunpack.c.l.b16 %v372
  %v1792 = vunpack.c.h.b16 %v372
  %v1793 = vunpack.c.l.b16 %v373
  %v1794 = vunpack.c.h.b16 %v373
  %v1795 = vunpack.c.l.b16 %v374
  %v1796 = vunpack.c.h.b16 %v374
  %v1797 = vunpack.c.l.b16 %v375
  %v1798 = vunpack.c.h.b16 %v375
  %v1799 = vunpack.c.l.b16 %v376
  %v1800 = vunpack.c.h.b16 %v376
  %v1801 = vunpack.c.l.b16 %v377
  %v1802 = vunpack.c.h.b16 %v377
  %v1803 = vunpack.c.l.b16 %v378
  %v1804 = vunpack.c.h.b16 %v378
  %v1805 = vunpack.c.l.b16 %v379
  %v1806 = vunpack.c.h.b16 %v379
  %v1807 = vunpack.c.l.b16 %v380
  %v1808 = vunpack.c.h.b16 %v380
  %v1809 = vunpack.c.l.b16 %v381
  %v1810 = vunpack.c.h.b16 %v381
  %v1811 = vunpack.c.l.b16 %v382
  %v1812 = vunpack.c.h.b16 %v382
  %v1813 = vunpack.c.l.b16 %v383
  %v1814 = vunpack.c.h.b16 %v383
  %v1815 = vunpack.c.l.b16 %v384
  %v1816 = vunpack.c.h.b16 %v384
  %v1817 = vunpack.c.l.b16 %v385
  %v1818 = vunpack.c.h.b16 %v385
  %v1819 = vunpack.c.l.b16 %v386
  %v1820 = vunpack.c.h.b16 %v386
  %v1821 = vunpack.c.l.b16 %v387
  %v1822 = vunpack.c.h.b16 %v387
  %v1823 = vunpack.c.l.b16 %v388
  %v1824 = vunpack.c.h.b16 %v388
  %v1825 = vunpack.c.l.b16 %v389
  %v1826 = vunpack.c.h.b16 %v389
  %v1827 = vunpack.c.l.b16 %v390
  %v1828 = vunpack.c.h.b16 %v390
  %v1829 = vunpack.c.l.b16 %v391
  %v1830 = vunpack.c.h.b16 %v391
  %v1831 = vunpack.c.l.b16 %v392
  %v1832 = vunpack.c.h.b16 %v392
  %v1833 = vunpack.c.l.b16 %v393
  %v1834 = vunpack.c.h.b16 %v393
  %v1835 = vunpack.c.l.b16 %v394
  %v1836 = vunpack.c.h.b16 %v394
  %v1837 = vunpack.c.l.b16 %v395
  %v1838 = vunpack.c.h.b16 %v395
  %v1839 = vunpack.c.l.b16 %v396
  %v1840 = vunpack.c.h.b16 %v396
  %v1841 = vunpack.c.l.b16 %v397
  %v1842 = vunpack.c.h.b16 %v397
  %v1843 = vunpack.c.l.b16 %v398
  %v1844 = vunpack.c.h.b16 %v398
  %v1845 = vunpack.c.l.b16 %v399
  %v1846 = vunpack.c.h.b16 %v399
  %v1847 = vunpack.c.l.b16 %v400
  %v1848 = vunpack.c.h.b16 %v400
  %v1849 = vunpack.c.l.b16 %v401
  %v1850 = vunpack.c.h.b16 %v401
  %v1851 = vunpack.c.l.b16 %v402
  %v1852 = vunpack.c.h.b16 %v402
  %v1853 = vunpack.c.l.b16 %v403
  %v1854 = vunpack.c.h.b16 %v403
  %v1855 = vunpack.c.l.b16 %v404
  %v1856 = vunpack.c.h.b16 %v404
  %v1857 = vunpack.c.l.b16 %v405
  %v1858 = vunpack.c.h.b16 %v405
  %v1859 = vunpack.c.l.b16 %v406
  %v1860 = vunpack.c.h.b16 %v406
  %v1861 = vunpack.c.l.b16 %v407
  %v1862 = vunpack.c.h.b16 %v407
  %v1863 = vunpack.c.l.b16 %v408
  %v1864 = vunpack.c.h.b16 %v408
  %v1865 = vunpack.c.l.b16 %v409
  %v1866 = vunpack.c.h.b16 %v409
  %v1867 = vunpack.c.l.b16 %v410
  %v1868 = vunpack.c.h.b16 %v410
  %v1869 = vunpack.c.l.b16 %v411
  %v1870 = vunpack.c.h.b16 %v411
  %v1871 = vunpack.c.l.b16 %v412
  %v1872 = vunpack.c.h.b16 %v412
  %v1873 = vunpack.c.l.b16 %v413
  %v1874 = vunpack.c.h.b16 %v413
  %v1875 = vunpack.c.l.b16 %v414
  %v1876 = vunpack.c.h.b16 %v414
  %v1877 = vunpack.c.l.b16 %v415
  %v1878 = vunpack.c.h.b16 %v415
  %v1879 = vunpack.c.l.b16 %v416
  %v1880 = vunpack.c.h.b16 %v416
  %v1881 = vunpack.c.l.b16 %v417
  %v1882 = vunpack.c.h.b16 %v417
  %v1883 = vunpack.c.l.b16 %v418
  %v1884 = vunpack.c.h.b16 %v418
  %v1885 = vunpack.c.l.b16 %v419
  %v1886 = vunpack.c.h.b16 %v419
  %v1887 = vunpack.c.l.b16 %v420
  %v1888 = vunpack.c.h.b16 %v420
  %v1889 = vunpack.c.l.b16 %v421
  %v1890 = vunpack.c.h.b16 %v421
  %v1891 = vunpack.c.l.b16 %v422
  %v1892 = vunpack.c.h.b16 %v422
  %v1893 = vunpack.c.l.b16 %v423
  %v1894 = vunpack.c.h.b16 %v423
  %v1895 = vunpack.c.l.b16 %v424
  %v1896 = vunpack.c.h.b16 %v424
  %v1897 = vunpack.c.l.b16 %v425
  %v1898 = vunpack.c.h.b16 %v425
  %v1899 = vunpack.c.l.b16 %v426
  %v1900 = vunpack.c.h.b16 %v426
  %v1901 = vunpack.c.l.b16 %v427
  %v1902 = vunpack.c.h.b16 %v427
  %v1903 = vunpack.c.l.b16 %v428
  %v1904 = vunpack.c.h.b16 %v428
  %v1905 = vunpack.c.l.b16 %v429
  %v1906 = vunpack.c.h.b16 %v429
  %v1907 = vunpack.c.l.b16 %v430
  %v1908 = vunpack.c.h.b16 %v430
  %v1909 = vunpack.c.l.b16 %v431
  %v1910 = vunpack.c.h.b16 %v431
  %v1911 = vunpack.c.l.b16 %v432
  %v1912 = vunpack.c.h.b16 %v432
  %v1913 = vunpack.c.l.b16 %v433
  %v1914 = vunpack.c.h.b16 %v433
  %v1915 = vunpack.c.l.b16 %v434
  %v1916 = vunpack.c.h.b16 %v434
  %v1917 = vunpack.c.l.b16 %v435
  %v1918 = vunpack.c.h.b16 %v435
  %v1919 = vunpack.c.l.b16 %v436
  %v1920 = vunpack.c.h.b16 %v436
  %v1921 = vunpack.c.l.b16 %v437
  %v1922 = vunpack.c.h.b16 %v437
  %v1923 = vunpack.c.l.b16 %v438
  %v1924 = vunpack.c.h.b16 %v438
  %v1925 = vunpack.c.l.b16 %v439
  %v1926 = vunpack.c.h.b16 %v439
  %v1927 = vunpack.c.l.b16 %v440
  %v1928 = vunpack.c.h.b16 %v440
  %v1929 = vunpack.c.l.b16 %v441
  %v1930 = vunpack.c.h.b16 %v441
  %v1931 = vunpack.c.l.b16 %v442
  %v1932 = vunpack.c.h.b16 %v442
  %v1933 = vunpack.c.l.b16 %v443
  %v1934 = vunpack.c.h.b16 %v443
  %v1935 = vunpack.c.l.b16 %v444
  %v1936 = vunpack.c.h.b16 %v444
  %v1937 = vunpack.c.l.b16 %v445
  %v1938 = vunpack.c.h.b16 %v445
  %v1939 = vunpack.c.l.b16 %v446
  %v1940 = vunpack.c.h.b16 %v446
  %v1941 = vunpack.c.l.b16 %v447
  %v1942 = vunpack.c.h.b16 %v447
  %v1943 = vunpack.c.l.b16 %v448
  %v1944 = vunpack.c.h.b16 %v448
  %v1945 = vunpack.c.l.b16 %v449
  %v1946 = vunpack.c.h.b16 %v449
  %v1947 = vunpack.c.l.b16 %v450
  %v1948 = vunpack.c.h.b16 %v450
  %v1949 = vunpack.c.l.b16 %v451
  %v1950 = vunpack.c.h.b16 %v451
  %v1951 = vunpack.c.l.b16 %v452
  %v1952 = vunpack.c.h.b16 %v452
  %v1953 = vunpack.c.l.b16 %v453
  %v1954 = vunpack.c.h.b16 %v453
  %v1955 = vunpack.c.l.b16 %v454
  %v1956 = vunpack.c.h.b16 %v454
  %v1957 = vunpack.c.l.b16 %v455
  %v1958 = vunpack.c.h.b16 %v455
  %v1959 = vunpack.c.l.b16 %v456
  %v1960 = vunpack.c.h.b16 %v456
  %v1961 = vunpack.c.l.b16 %v457
  %v1962 = vunpack.c.h.b16 %v457
  %v1963 = vunpack.c.l.b16 %v458
  %v1964 = vunpack.c.h.b16 %v458
  %v1965 = vunpack.c.l.b16 %v459
  %v1966 = vunpack.c.h.b16 %v459
  %v1967 = vunpack.c.l.b16 %v460
  %v1968 = vunpack.c.h.b16 %v460
  %v1969 = vunpack.c.l.b16 %v461
  %v1970 = vunpack.c.h.b16 %v461
  %v1971 = vunpack.c.l.b16 %v462
  %v1972 = vunpack.c.h.b16 %v462
  %v1973 = vunpack.c.l.b16 %v463
  %v1974 = vunpack.c.h.b16 %v463
  %v1975 = vunpack.c.l.b16 %v464
  %v1976 = vunpack.c.h.b16 %v464
  %v1977 = vunpack.c.l.b16 %v465
  %v1978 = vunpack.c.h.b16 %v465
  %v1979 = vunpack.c.l.b16 %v466
  %v1980 = vunpack.c.h.b16 %v466
  %v1981 = vunpack.c.l.b16 %v467
  %v1982 = vunpack.c.h.b16 %v467
  %v1983 = vunpack.c.l.b16 %v468
  %v1984 = vunpack.c.h.b16 %v468
  %v1985 = vunpack.c.l.b16 %v469
  %v1986 = vunpack.c.h.b16 %v469
  %v1987 = vunpack.c.l.b16 %v470
  %v1988 = vunpack.c.h.b16 %v470
  %v1989 = vunpack.c.l.b16 %v471
  %v1990 = vunpack.c.h.b16 %v471
  %v1991 = vunpack.c.l.b16 %v472
  %v1992 = vunpack.c.h.b16 %v472
  %v1993 = vunpack.c.l.b16 %v473
  %v1994 = vunpack.c.h.b16 %v473
  %v1995 = vunpack.c.l.b16 %v474
  %v1996 = vunpack.c.h.b16 %v474
  %v1997 = vunpack.c.l.b16 %v475
  %v1998 = vunpack.c.h.b16 %v475
  %v1999 = vunpack.c.l.b16 %v476
  %v2000 = vunpack.c.h.b16 %v476
  %v2001 = vunpack.c.l.b16 %v477
  %v2002 = vunpack.c.h.b16 %v477
  %v2003 = vunpack.c.l.b16 %v478
  %v2004 = vunpack.c.h.b16 %v478
  %v2005 = vunpack.c.l.b16 %v479
  %v2006 = vunpack.c.h.b16 %v479
  %v2007 = vunpack.c.l.b16 %v480
  %v2008 = vunpack.c.h.b16 %v480
  %v2009 = vunpack.c.l.b16 %v481
  %v2010 = vunpack.c.h.b16 %v481
  %v2011 = vunpack.c.l.b16 %v482
  %v2012 = vunpack.c.h.b16 %v482
  %v2013 = vunpack.c.l.b16 %v483
  %v2014 = vunpack.c.h.b16 %v483
  %v2015 = vunpack.c.l.b16 %v484
  %v2016 = vunpack.c.h.b16 %v484
  %v2017 = vunpack.c.l.b16 %v485
  %v2018 = vunpack.c.h.b16 %v485
  %v2019 = vunpack.c.l.b16 %v486
  %v2020 = vunpack.c.h.b16 %v486
  %v2021 = vunpack.c.l.b16 %v487
  %v2022 = vunpack.c.h.b16 %v487
  %v2023 = vunpack.c.l.b16 %v488
  %v2024 = vunpack.c.h.b16 %v488
  %v2025 = vunpack.c.l.b16 %v489
  %v2026 = vunpack.c.h.b16 %v489
  %v2027 = vunpack.c.l.b16 %v490
  %v2028 = vunpack.c.h.b16 %v490
  %v2029 = vunpack.c.l.b16 %v491
  %v2030 = vunpack.c.h.b16 %v491
  %v2031 = vunpack.c.l.b16 %v492
  %v2032 = vunpack.c.h.b16 %v492
  %v2033 = vunpack.c.l.b16 %v493
  %v2034 = vunpack.c.h.b16 %v493
  %v2035 = vunpack.c.l.b16 %v494
  %v2036 = vunpack.c.h.b16 %v494
  %v2037 = vunpack.c.l.b16 %v495
  %v2038 = vunpack.c.h.b16 %v495
  %v2039 = vunpack.c.l.b16 %v496
  %v2040 = vunpack.c.h.b16 %v496
  %v2041 = vunpack.c.l.b16 %v497
  %v2042 = vunpack.c.h.b16 %v497
  %v2043 = vunpack.c.l.b16 %v498
  %v2044 = vunpack.c.h.b16 %v498
  %v2045 = vunpack.c.l.b16 %v499
  %v2046 = vunpack.c.h.b16 %v499
  %v2047 = vunpack.c.l.b16 %v500
  %v2048 = vunpack.c.h.b16 %v500
  %v2049 = vunpack.c.l.b16 %v501
  %v2050 = vunpack.c.h.b16 %v501
  %v2051 = vunpack.c.l.b16 %v502
  %v2052 = vunpack.c.h.b16 %v502
  %v2053 = vunpack.c.l.b16 %v503
  %v2054 = vunpack.c.h.b16 %v503
  %v2055 = vunpack.c.l.b16 %v504
  %v2056 = vunpack.c.h.b16 %v504
  %v2057 = vunpack.c.l.b16 %v505
  %v2058 = vunpack.c.h.b16 %v505
  %v2059 = vunpack.c.l.b16 %v506
  %v2060 = vunpack.c.h.b16 %v506
  %v2061 = vunpack.c.l.b16 %v507
  %v2062 = vunpack.c.h.b16 %v507
  %v2063 = vunpack.c.l.b16 %v508
  %v2064 = vunpack.c.h.b16 %v508
  %v2065 = vunpack.c.l.b16 %v509
  %v2066 = vunpack.c.h.b16 %v509
  %v2067 = vunpack.c.l.b16 %v510
  %v2068 = vunpack.c.h.b16 %v510
  %v2069 = vunpack.c.l.b16 %v511
  %v2070 = vunpack.c.h.b16 %v511
  %v2071 = vunpack.c.l.b16 %v512
  %v2072 = vunpack.c.h.b16 %v512
  %v2073 = vunpack.c.l.b16 %v513
  %v2074 = vunpack.c.h.b16 %v513
  %v2075 = vunpack.c.l.b16 %v514
  %v2076 = vunpack.c.h.b16 %v514
  %v2077 = vunpack.c.l.b16 %v515
  %v2078 = vunpack.c.h.b16 %v515
  %v2079 = vunpack.c.l.b16 %v516
  %v2080 = vunpack.c.h.b16 %v516
  %v2081 = vunpack.c.l.b16 %v517
  %v2082 = vunpack.c.h.b16 %v517
  %v2083 = vunpack.c.l.b16 %v518
  %v2084 = vunpack.c.h.b16 %v518
  %v2085 = vunpack.c.l.b16 %v519
  %v2086 = vunpack.c.h.b16 %v519
  %v2087 = vunpack.c.l.b16 %v520
  %v2088 = vunpack.c.h.b16 %v520
  %v2089 = vunpack.c.l.b16 %v521
  %v2090 = vunpack.c.h.b16 %v521
  %v2091 = vunpack.c.l.b16 %v522
  %v2092 = vunpack.c.h.b16 %v522
  %v2093 = vunpack.c.l.b16 %v523
  %v2094 = vunpack.c.h.b16 %v523
  %v2095 = vunpack.c.l.b16 %v524
  %v2096 = vunpack.c.h.b16 %v524
  %v2097 = vunpack.c.l.b16 %v525
  %v2098 = vunpack.c.h.b16 %v525
  %v2099 = vunpack.c.l.b16 %v526
  %v2100 = vunpack.c.h.b16 %v526
  %v2101 = vunpack.c.l.b16 %v527
  %v2102 = vunpack.c.h.b16 %v527
  %v2103 = vunpack.c.l.b16 %v528
  %v2104 = vunpack.c.h.b16 %v528
  %v2105 = vunpack.c.l.b16 %v529
  %v2106 = vunpack.c.h.b16 %v529
  %v2107 = vunpack.c.l.b16 %v530
  %v2108 = vunpack.c.h.b16 %v530
  %v2109 = vunpack.c.l.b16 %v531
  %v2110 = vunpack.c.h.b16 %v531
  %v2111 = vunpack.c.l.b16 %v532
  %v2112 = vunpack.c.h.b16 %v532
  %v2113 = vunpack.c.l.b16 %v533
  %v2114 = vunpack.c.h.b16 %v533
  %v2115 = vunpack.c.l.b16 %v534
  %v2116 = vunpack.c.h.b16 %v534
  %v2117 = vunpack.c.l.b16 %v535
  %v2118 = vunpack.c.h.b16 %v535
  %v2119 = vunpack.c.l.b16 %v536
  %v2120 = vunpack.c.h.b16 %v536
  %v2121 = vunpack.c.l.b16 %v537
  %v2122 = vunpack.c.h.b16 %v537
  %v2123 = vunpack.c.l.b16 %v538
  %v2124 = vunpack.c.h.b16 %v538
  %v2125 = vunpack.c.l.b16 %v539
  %v2126 = vunpack.c.h.b16 %v539
  %v2127 = vunpack.c.l.b16 %v540
  %v2128 = vunpack.c.h.b16 %v540
  %v2129 = vunpack.c.l.b16 %v541
  %v2130 = vunpack.c.h.b16 %v541
  %v2131 = vunpack.c.l.b16 %v542
  %v2132 = vunpack.c.h.b16 %v542
  %v2133 = vunpack.c.l.b16 %v543
  %v2134 = vunpack.c.h.b16 %v543
  %v2135 = vunpack.c.l.b16 %v544
  %v2136 = vunpack.c.h.b16 %v544
  %v2137 = vunpack.c.l.b16 %v545
  %v2138 = vunpack.c.h.b16 %v545
  %v2139 = vunpack.c.l.b16 %v546
  %v2140 = vunpack.c.h.b16 %v546
  %v2141 = vpack.c.b16 %v1125, %v1117
  %v2142 = vpack.c.b16 %v1126, %v1118
  %v2143 = vpack.c.b16 %v1127, %v1119
  %v2144 = vpack.c.b16 %v1128, %v1120
  %v2145 = vpack.c.b16 %v1129, %v1121
  %v2146 = vpack.c.b16 %v1130, %v1122
  %v2147 = vpack.c.b16 %v1131, %v1123
  %v2148 = vpack.c.b16 %v1132, %v1124
  %v2149 = vpack.c.b16 %v1141, %v1133
  %v2150 = vpack.c.b16 %v1142, %v1134
  %v2151 = vpack.c.b16 %v1143, %v1135
  %v2152 = vpack.c.b16 %v1144, %v1136
  %v2153 = vpack.c.b16 %v1145, %v1137
  %v2154 = vpack.c.b16 %v1146, %v1138
  %v2155 = vpack.c.b16 %v1147, %v1139
  %v2156 = vpack.c.b16 %v1148, %v1140
  %v2157 = vpack.c.b16 %v1157, %v1149
  %v2158 = vpack.c.b16 %v1158, %v1150
  %v2159 = vpack.c.b16 %v1159, %v1151
  %v2160 = vpack.c.b16 %v1160, %v1152
  %v2161 = vpack.c.b16 %v1161, %v1153
  %v2162 = vpack.c.b16 %v1162, %v1154
  %v2163 = vpack.c.b16 %v1163, %v1155
  %v2164 = vpack.c.b16 %v1164, %v1156
  %v2165 = vpack.c.b16 %v1173, %v1165
  %v2166 = vpack.c.b16 %v1174, %v1166
  %v2167 = vpack.c.b16 %v1175, %v1167
  %v2168 = vpack.c.b16 %v1176, %v1168
  %v2169 = vpack.c.b16 %v1177, %v1169
  %v2170 = vpack.c.b16 %v1178, %v1170
  %v2171 = vpack.c.b16 %v1179, %v1171
  %v2172 = vpack.c.b16 %v1180, %v1172
  %v2173 = vpack.c.b16 %v1189, %v1181
  %v2174 = vpack.c.b16 %v1190, %v1182
  %v2175 = vpack.c.b16 %v1191, %v1183
  %v2176 = vpack.c.b16 %v1192, %v1184
  %v2177 = vpack.c.b16 %v1193, %v1185
  %v2178 = vpack.c.b16 %v1194, %v1186
  %v2179 = vpack.c.b16 %v1195, %v1187
  %v2180 = vpack.c.b16 %v1196, %v1188
  %v2181 = vpack.c.b16 %v1205, %v1197
  %v2182 = vpack.c.b16 %v1206, %v1198
  %v2183 = vpack.c.b16 %v1207, %v1199
  %v2184 = vpack.c.b16 %v1208, %v1200
  %v2185 = vpack.c.b16 %v1209, %v1201
  %v2186 = vpack.c.b16 %v1210, %v1202
  %v2187 = vpack.c.b16 %v1211, %v1203
  %v2188 = vpack.c.b16 %v1212, %v1204
  %v2189 = vpack.c.b16 %v1221, %v1213
  %v2190 = vpack.c.b16 %v1222, %v1214
  %v2191 = vpack.c.b16 %v1223, %v1215
  %v2192 = vpack.c.b16 %v1224, %v1216
  %v2193 = vpack.c.b16 %v1225, %v1217
  %v2194 = vpack.c.b16 %v1226, %v1218
  %v2195 = vpack.c.b16 %v1227, %v1219
  %v2196 = vpack.c.b16 %v1228, %v1220
  %v2197 = vpack.c.b16 %v1237, %v1229
  %v2198 = vpack.c.b16 %v1238, %v1230
  %v2199 = vpack.c.b16 %v1239, %v1231
  %v2200 = vpack.c.b16 %v1240, %v1232
  %v2201 = vpack.c.b16 %v1241, %v1233
  %v2202 = vpack.c.b16 %v1242, %v1234
  %v2203 = vpack.c.b16 %v1243, %v1235
  %v2204 = vpack.c.b16 %v1244, %v1236
  %v2205 = vpack.c.b16 %v1253, %v1245
  %v2206 = vpack.c.b16 %v1254, %v1246
  %v2207 = vpack.c.b16 %v1255, %v1247
  %v2208 = vpack.c.b16 %v1256, %v1248
  %v2209 = vpack.c.b16 %v1257, %v1249
  %v2210 = vpack.c.b16 %v1258, %v1250
  %v2211 = vpack.c.b16 %v1259, %v1251
  %v2212 = vpack.c.b16 %v1260, %v1252
  %v2213 = vpack.c.b16 %v1269, %v1261
  %v2214 = vpack.c.b16 %v1270, %v1262
  %v2215 = vpack.c.b16 %v1271, %v1263
  %v2216 = vpack.c.b16 %v1272, %v1264
  %v2217 = vpack.c.b16 %v1273, %v1265
  %v2218 = vpack.c.b16 %v1274, %v1266
  %v2219 = vpack.c.b16 %v1275, %v1267
  %v2220 = vpack.c.b16 %v1276, %v1268
  %v2221 = vpack.c.b16 %v1285, %v1277
  %v2222 = vpack.c.b16 %v1286, %v1278
  %v2223 = vpack.c.b16 %v1287, %v1279
  %v2224 = vpack.c.b16 %v1288, %v1280
  %v2225 = vpack.c.b16 %v1289, %v1281
  %v2226 = vpack.c.b16 %v1290, %v1282
  %v2227 = vpack.c.b16 %v1291, %v1283
  %v2228 = vpack.c.b16 %v1292, %v1284
  %v2229 = vpack.c.b16 %v1301, %v1293
  %v2230 = vpack.c.b16 %v1302, %v1294
  %v2231 = vpack.c.b16 %v1303, %v1295
  %v2232 = vpack.c.b16 %v1304, %v1296
  %v2233 = vpack.c.b16 %v1305, %v1297
  %v2234 = vpack.c.b16 %v1306, %v1298
  %v2235 = vpack.c.b16 %v1307, %v1299
  %v2236 = vpack.c.b16 %v1308, %v1300
  %v2237 = vpack.c.b16 %v1317, %v1309
  %v2238 = vpack.c.b16 %v1318, %v1310
  %v2239 = vpack.c.b16 %v1319, %v1311
  %v2240 = vpack.c.b16 %v1320, %v1312
  %v2241 = vpack.c.b16 %v1321, %v1313
  %v2242 = vpack.c.b16 %v1322, %v1314
  %v2243 = vpack.c.b16 %v1323, %v1315
  %v2244 = vpack.c.b16 %v1324, %v1316
  %v2245 = vpack.c.b16 %v1333, %v1325
  %v2246 = vpack.c.b16 %v1334, %v1326
  %v2247 = vpack.c.b16 %v1335, %v1327
  %v2248 = vpack.c.b16 %v1336, %v1328
  %v2249 = vpack.c.b16 %v1337, %v1329
  %v2250 = vpack.c.b16 %v1338, %v1330
  %v2251 = vpack.c.b16 %v1339, %v1331
  %v2252 = vpack.c.b16 %v1340, %v1332
  %v2253 = vpack.c.b16 %v1349, %v1341
  %v2254 = vpack.c.b16 %v1350, %v1342
  %v2255 = vpack.c.b16 %v1351, %v1343
  %v2256 = vpack.c.b16 %v1352, %v1344
  %v2257 = vpack.c.b16 %v1353, %v1345
  %v2258 = vpack.c.b16 %v1354, %v1346
  %v2259 = vpack.c.b16 %v1355, %v1347
  %v2260 = vpack.c.b16 %v1356, %v1348
  %v2261 = vpack.c.b16 %v1365, %v1357
  %v2262 = vpack.c.b16 %v1366, %v1358
  %v2263 = vpack.c.b16 %v1367, %v1359
  %v2264 = vpack.c.b16 %v1368, %v1360
  %v2265 = vpack.c.b16 %v1369, %v1361
  %v2266 = vpack.c.b16 %v1370, %v1362
  %v2267 = vpack.c.b16 %v1371, %v1363
  %v2268 = vpack.c.b16 %v1372, %v1364
  %v2269 = vpack.c.b16 %v1381, %v1373
  %v2270 = vpack.c.b16 %v1382, %v1374
  %v2271 = vpack.c.b16 %v1383, %v1375
  %v2272 = vpack.c.b16 %v1384, %v1376
  %v2273 = vpack.c.b16 %v1385, %v1377
  %v2274 = vpack.c.b16 %v1386, %v1378
  %v2275 = vpack.c.b16 %v1387, %v1379
  %v2276 = vpack.c.b16 %v1388, %v1380
  %v2277 = vpack.c.b16 %v1397, %v1389
  %v2278 = vpack.c.b16 %v1398, %v1390
  %v2279 = vpack.c.b16 %v1399, %v1391
  %v2280 = vpack.c.b16 %v1400, %v1392
  %v2281 = vpack.c.b16 %v1401, %v1393
  %v2282 = vpack.c.b16 %v1402, %v1394
  %v2283 = vpack.c.b16 %v1403, %v1395
  %v2284 = vpack.c.b16 %v1404, %v1396
  %v2285 = vpack.c.b16 %v1413, %v1405
  %v2286 = vpack.c.b16 %v1414, %v1406
  %v2287 = vpack.c.b16 %v1415, %v1407
  %v2288 = vpack.c.b16 %v1416, %v1408
  %v2289 = vpack.c.b16 %v1417, %v1409
  %v2290 = vpack.c.b16 %v1418, %v1410
  %v2291 = vpack.c.b16 %v1419, %v1411
  %v2292 = vpack.c.b16 %v1420, %v1412
  %v2293 = vpack.c.b16 %v1429, %v1421
  %v2294 = vpack.c.b16 %v1430, %v1422
  %v2295 = vpack.c.b16 %v1431, %v1423
  %v2296 = vpack.c.b16 %v1432, %v1424
  %v2297 = vpack.c.b16 %v1433, %v1425
  %v2298 = vpack.c.b16 %v1434, %v1426
  %v2299 = vpack.c.b16 %v1435, %v1427
  %v2300 = vpack.c.b16 %v1436, %v1428
  %v2301 = vpack.c.b16 %v1445, %v1437
  %v2302 = vpack.c.b16 %v1446, %v1438
  %v2303 = vpack.c.b16 %v1447, %v1439
  %v2304 = vpack.c.b16 %v1448, %v1440
  %v2305 = vpack.c.b16 %v1449, %v1441
  %v2306 = vpack.c.b16 %v1450, %v1442
  %v2307 = vpack.c.b16 %v1451, %v1443
  %v2308 = vpack.c.b16 %v1452, %v1444
  %v2309 = vpack.c.b16 %v1461, %v1453
  %v2310 = vpack.c.b16 %v1462, %v1454
  %v2311 = vpack.c.b16 %v1463, %v1455
  %v2312 = vpack.c.b16 %v1464, %v1456
  %v2313 = vpack.c.b16 %v1465, %v1457
  %v2314 = vpack.c.b16 %v1466, %v1458
  %v2315 = vpack.c.b16 %v1467, %v1459
  %v2316 = vpack.c.b16 %v1468, %v1460
  %v2317 = vpack.c.b16 %v1477, %v1469
  %v2318 = vpack.c.b16 %v1478, %v1470
  %v2319 = vpack.c.b16 %v1479, %v1471
  %v2320 = vpack.c.b16 %v1480, %v1472
  %v2321 = vpack.c.b16 %v1481, %v1473
  %v2322 = vpack.c.b16 %v1482, %v1474
  %v2323 = vpack.c.b16 %v1483, %v1475
  %v2324 = vpack.c.b16 %v1484, %v1476
  %v2325 = vpack.c.b16 %v1493, %v1485
  %v2326 = vpack.c.b16 %v1494, %v1486
  %v2327 = vpack.c.b16 %v1495, %v1487
  %v2328 = vpack.c.b16 %v1496, %v1488
  %v2329 = vpack.c.b16 %v1497, %v1489
  %v2330 = vpack.c.b16 %v1498, %v1490
  %v2331 = vpack.c.b16 %v1499, %v1491
  %v2332 = vpack.c.b16 %v1500, %v1492
  %v2333 = vpack.c.b16 %v1509, %v1501
  %v2334 = vpack.c.b16 %v1510, %v1502
  %v2335 = vpack.c.b16 %v1511, %v1503
  %v2336 = vpack.c.b16 %v1512, %v1504
  %v2337 = vpack.c.b16 %v1513, %v1505
  %v2338 = vpack.c.b16 %v1514, %v1506
  %v2339 = vpack.c.b16 %v1515, %v1507
  %v2340 = vpack.c.b16 %v1516, %v1508
  %v2341 = vpack.c.b16 %v1525, %v1517
  %v2342 = vpack.c.b16 %v1526, %v1518
  %v2343 = vpack.c.b16 %v1527, %v1519
  %v2344 = vpack.c.b16 %v1528, %v1520
  %v2345 = vpack.c.b16 %v1529, %v1521
  %v2346 = vpack.c.b16 %v1530, %v1522
  %v2347 = vpack.c.b16 %v1531, %v1523
  %v2348 = vpack.c.b16 %v1532, %v1524
  %v2349 = vpack.c.b16 %v1541, %v1533
  %v2350 = vpack.c.b16 %v1542, %v1534
  %v2351 = vpack.c.b16 %v1543, %v1535
  %v2352 = vpack.c.b16 %v1544, %v1536
  %v2353 = vpack.c.b16 %v1545, %v1537
  %v2354 = vpack.c.b16 %v1546, %v1538
  %v2355 = vpack.c.b16 %v1547, %v1539
  %v2356 = vpack.c.b16 %v1548, %v1540
  %v2357 = vpack.c.b16 %v1557, %v1549
  %v2358 = vpack.c.b16 %v1558, %v1550
  %v2359 = vpack.c.b16 %v1559, %v1551
  %v2360 = vpack.c.b16 %v1560, %v1552
  %v2361 = vpack.c.b16 %v1561, %v1553
  %v2362 = vpack.c.b16 %v1562, %v1554
  %v2363 = vpack.c.b16 %v1563, %v1555
  %v2364 = vpack.c.b16 %v1564, %v1556
  %v2365 = vpack.c.b16 %v1573, %v1565
  %v2366 = vpack.c.b16 %v1574, %v1566
  %v2367 = vpack.c.b16 %v1575, %v1567
  %v2368 = vpack.c.b16 %v1576, %v1568
  %v2369 = vpack.c.b16 %v1577, %v1569
  %v2370 = vpack.c.b16 %v1578, %v1570
  %v2371 = vpack.c.b16 %v1579, %v1571
  %v2372 = vpack.c.b16 %v1580, %v1572
  %v2373 = vpack.c.b16 %v1589, %v1581
  %v2374 = vpack.c.b16 %v1590, %v1582
  %v2375 = vpack.c.b16 %v1591, %v1583
  %v2376 = vpack.c.b16 %v1592, %v1584
  %v2377 = vpack.c.b16 %v1593, %v1585
  %v2378 = vpack.c.b16 %v1594, %v1586
  %v2379 = vpack.c.b16 %v1595, %v1587
  %v2380 = vpack.c.b16 %v1596, %v1588
  %v2381 = vpack.c.b16 %v1605, %v1597
  %v2382 = vpack.c.b16 %v1606, %v1598
  %v2383 = vpack.c.b16 %v1607, %v1599
  %v2384 = vpack.c.b16 %v1608, %v1600
  %v2385 = vpack.c.b16 %v1609, %v1601
  %v2386 = vpack.c.b16 %v1610, %v1602
  %v2387 = vpack.c.b16 %v1611, %v1603
  %v2388 = vpack.c.b16 %v1612, %v1604
  %v2389 = vpack.c.b16 %v1621, %v1613
  %v2390 = vpack.c.b16 %v1622, %v1614
  %v2391 = vpack.c.b16 %v1623, %v1615
  %v2392 = vpack.c.b16 %v1624, %v1616
  %v2393 = vpack.c.b16 %v1625, %v1617
  %v2394 = vpack.c.b16 %v1626, %v1618
  %v2395 = vpack.c.b16 %v1627, %v1619
  %v2396 = vpack.c.b16 %v1628, %v1620
  %v2397 = vpack.c.b16 %v1637, %v1629
  %v2398 = vpack.c.b16 %v1638, %v1630
  %v2399 = vpack.c.b16 %v1639, %v1631
  %v2400 = vpack.c.b16 %v1640, %v1632
  %v2401 = vpack.c.b16 %v1641, %v1633
  %v2402 = vpack.c.b16 %v1642, %v1634
  %v2403 = vpack.c.b16 %v1643, %v1635
  %v2404 = vpack.c.b16 %v1644, %v1636
  %v2405 = vpack.c.b16 %v1653, %v1645
  %v2406 = vpack.c.b16 %v1654, %v1646
  %v2407 = vpack.c.b16 %v1655, %v1647
  %v2408 = vpack.c.b16 %v1656, %v1648
  %v2409 = vpack.c.b16 %v1657, %v1649
  %v2410 = vpack.c.b16 %v1658, %v1650
  %v2411 = vpack.c.b16 %v1659, %v1651
  %v2412 = vpack.c.b16 %v1660, %v1652
  %v2413 = vpack.c.b16 %v1669, %v1661
  %v2414 = vpack.c.b16 %v1670, %v1662
  %v2415 = vpack.c.b16 %v1671, %v1663
  %v2416 = vpack.c.b16 %v1672, %v1664
  %v2417 = vpack.c.b16 %v1673, %v1665
  %v2418 = vpack.c.b16 %v1674, %v1666
  %v2419 = vpack.c.b16 %v1675, %v1667
  %v2420 = vpack.c.b16 %v1676, %v1668
  %v2421 = vpack.c.b16 %v1685, %v1677
  %v2422 = vpack.c.b16 %v1686, %v1678
  %v2423 = vpack.c.b16 %v1687, %v1679
  %v2424 = vpack.c.b16 %v1688, %v1680
  %v2425 = vpack.c.b16 %v1689, %v1681
  %v2426 = vpack.c.b16 %v1690, %v1682
  %v2427 = vpack.c.b16 %v1691, %v1683
  %v2428 = vpack.c.b16 %v1692, %v1684
  %v2429 = vpack.c.b16 %v1701, %v1693
  %v2430 = vpack.c.b16 %v1702, %v1694
  %v2431 = vpack.c.b16 %v1703, %v1695
  %v2432 = vpack.c.b16 %v1704, %v1696
  %v2433 = vpack.c.b16 %v1705, %v1697
  %v2434 = vpack.c.b16 %v1706, %v1698
  %v2435 = vpack.c.b16 %v1707, %v1699
  %v2436 = vpack.c.b16 %v1708, %v1700
  %v2437 = vpack.c.b16 %v1717, %v1709
  %v2438 = vpack.c.b16 %v1718, %v1710
  %v2439 = vpack.c.b16 %v1719, %v1711
  %v2440 = vpack.c.b16 %v1720, %v1712
  %v2441 = vpack.c.b16 %v1721, %v1713
  %v2442 = vpack.c.b16 %v1722, %v1714
  %v2443 = vpack.c.b16 %v1723, %v1715
  %v2444 = vpack.c.b16 %v1724, %v1716
  %v2445 = vpack.c.b16 %v1733, %v1725
  %v2446 = vpack.c.b16 %v1734, %v1726
  %v2447 = vpack.c.b16 %v1735, %v1727
  %v2448 = vpack.c.b16 %v1736, %v1728
  %v2449 = vpack.c.b16 %v1737, %v1729
  %v2450 = vpack.c.b16 %v1738, %v1730
  %v2451 = vpack.c.b16 %v1739, %v1731
  %v2452 = vpack.c.b16 %v1740, %v1732
  %v2453 = vpack.c.b16 %v1749, %v1741
  %v2454 = vpack.c.b16 %v1750, %v1742
  %v2455 = vpack.c.b16 %v1751, %v1743
  %v2456 = vpack.c.b16 %v1752, %v1744
  %v2457 = vpack.c.b16 %v1753, %v1745
  %v2458 = vpack.c.b16 %v1754, %v1746
  %v2459 = vpack.c.b16 %v1755, %v1747
  %v2460 = vpack.c.b16 %v1756, %v1748
  %v2461 = vpack.c.b16 %v1765, %v1757
  %v2462 = vpack.c.b16 %v1766, %v1758
  %v2463 = vpack.c.b16 %v1767, %v1759
  %v2464 = vpack.c.b16 %v1768, %v1760
  %v2465 = vpack.c.b16 %v1769, %v1761
  %v2466 = vpack.c.b16 %v1770, %v1762
  %v2467 = vpack.c.b16 %v1771, %v1763
  %v2468 = vpack.c.b16 %v1772, %v1764
  %v2469 = vpack.c.b16 %v1781, %v1773
  %v2470 = vpack.c.b16 %v1782, %v1774
  %v2471 = vpack.c.b16 %v1783, %v1775
  %v2472 = vpack.c.b16 %v1784, %v1776
  %v2473 = vpack.c.b16 %v1785, %v1777
  %v2474 = vpack.c.b16 %v1786, %v1778
  %v2475 = vpack.c.b16 %v1787, %v1779
  %v2476 = vpack.c.b16 %v1788, %v1780
  %v2477 = vpack.c.b16 %v1797, %v1789
  %v2478 = vpack.c.b16 %v1798, %v1790
  %v2479 = vpack.c.b16 %v1799, %v1791
  %v2480 = vpack.c.b16 %v1800, %v1792
  %v2481 = vpack.c.b16 %v1801, %v1793
  %v2482 = vpack.c.b16 %v1802, %v1794
  %v2483 = vpack.c.b16 %v1803, %v1795
  %v2484 = vpack.c.b16 %v1804, %v1796
  %v2485 = vpack.c.b16 %v1813, %v1805
  %v2486 = vpack.c.b16 %v1814, %v1806
  %v2487 = vpack.c.b16 %v1815, %v1807
  %v2488 = vpack.c.b16 %v1816, %v1808
  %v2489 = vpack.c.b16 %v1817, %v1809
  %v2490 = vpack.c.b16 %v1818, %v1810
  %v2491 = vpack.c.b16 %v1819, %v1811
  %v2492 = vpack.c.b16 %v1820, %v1812
  %v2493 = vpack.c.b16 %v1829, %v1821
  %v2494 = vpack.c.b16 %v1830, %v1822
  %v2495 = vpack.c.b16 %v1831, %v1823
  %v2496 = vpack.c.b16 %v1832, %v1824
  %v2497 = vpack.c.b16 %v1833, %v1825
  %v2498 = vpack.c.b16 %v1834, %v1826
  %v2499 = vpack.c.b16 %v1835, %v1827
  %v2500 = vpack.c.b16 %v1836, %v1828
  %v2501 = vpack.c.b16 %v1845, %v1837
  %v2502 = vpack.c.b16 %v1846, %v1838
  %v2503 = vpack.c.b16 %v1847, %v1839
  %v2504 = vpack.c.b16 %v1848, %v1840
  %v2505 = vpack.c.b16 %v1849, %v1841
  %v2506 = vpack.c.b16 %v1850, %v1842
  %v2507 = vpack.c.b16 %v1851, %v1843
  %v2508 = vpack.c.b16 %v1852, %v1844
  %v2509 = vpack.c.b16 %v1861, %v1853
  %v2510 = vpack.c.b16 %v1862, %v1854
  %v2511 = vpack.c.b16 %v1863, %v1855
  %v2512 = vpack.c.b16 %v1864, %v1856
  %v2513 = vpack.c.b16 %v1865, %v1857
  %v2514 = vpack.c.b16 %v1866, %v1858
  %v2515 = vpack.c.b16 %v1867, %v1859
  %v2516 = vpack.c.b16 %v1868, %v1860
  %v2517 = vpack.c.b16 %v1877, %v1869
  %v2518 = vpack.c.b16 %v1878, %v1870
  %v2519 = vpack.c.b16 %v1879, %v1871
  %v2520 = vpack.c.b16 %v1880, %v1872
  %v2521 = vpack.c.b16 %v1881, %v1873
  %v2522 = vpack.c.b16 %v1882, %v1874
  %v2523 = vpack.c.b16 %v1883, %v1875
  %v2524 = vpack.c.b16 %v1884, %v1876
  %v2525 = vpack.c.b16 %v1893, %v1885
  %v2526 = vpack.c.b16 %v1894, %v1886
  %v2527 = vpack.c.b16 %v1895, %v1887
  %v2528 = vpack.c.b16 %v1896, %v1888
  %v2529 = vpack.c.b16 %v1897, %v1889
  %v2530 = vpack.c.b16 %v1898, %v1890
  %v2531 = vpack.c.b16 %v1899, %v1891
  %v2532 = vpack.c.b16 %v1900, %v1892
  %v2533 = vpack.c.b16 %v1909, %v1901
  %v2534 = vpack.c.b16 %v1910, %v1902
  %v2535 = vpack.c.b16 %v1911, %v1903
  %v2536 = vpack.c.b16 %v1912, %v1904
  %v2537 = vpack.c.b16 %v1913, %v1905
  %v2538 = vpack.c.b16 %v1914, %v1906
  %v2539 = vpack.c.b16 %v1915, %v1907
  %v2540 = vpack.c.b16 %v1916, %v1908
  %v2541 = vpack.c.b16 %v1925, %v1917
  %v2542 = vpack.c.b16 %v1926, %v1918
  %v2543 = vpack.c.b16 %v1927, %v1919
  %v2544 = vpack.c.b16 %v1928, %v1920
  %v2545 = vpack.c.b16 %v1929, %v1921
  %v2546 = vpack.c.b16 %v1930, %v1922
  %v2547 = vpack.c.b16 %v1931, %v1923
  %v2548 = vpack.c.b16 %v1932, %v1924
  %v2549 = vpack.c.b16 %v1941, %v1933
  %v2550 = vpack.c.b16 %v1942, %v1934
  %v2551 = vpack.c.b16 %v1943, %v1935
  %v2552 = vpack.c.b16 %v1944, %v1936
  %v2553 = vpack.c.b16 %v1945, %v1937
  %v2554 = vpack.c.b16 %v1946, %v1938
  %v2555 = vpack.c.b16 %v1947, %v1939
  %v2556 = vpack.c.b16 %v1948, %v1940
  %v2557 = vpack.c.b16 %v1957, %v1949
  %v2558 = vpack.c.b16 %v1958, %v1950
  %v2559 = vpack.c.b16 %v1959, %v1951
  %v2560 = vpack.c.b16 %v1960, %v1952
  %v2561 = vpack.c.b16 %v1961, %v1953
  %v2562 = vpack.c.b16 %v1962, %v1954
  %v2563 = vpack.c.b16 %v1963, %v1955
  %v2564 = vpack.c.b16 %v1964, %v1956
  %v2565 = vpack.c.b16 %v1973, %v1965
  %v2566 = vpack.c.b16 %v1974, %v1966
  %v2567 = vpack.c.b16 %v1975, %v1967
  %v2568 = vpack.c.b16 %v1976, %v1968
  %v2569 = vpack.c.b16 %v1977, %v1969
  %v2570 = vpack.c.b16 %v1978, %v1970
  %v2571 = vpack.c.b16 %v1979, %v1971
  %v2572 = vpack.c.b16 %v1980, %v1972
  %v2573 = vpack.c.b16 %v1989, %v1981
  %v2574 = vpack.c.b16 %v1990, %v1982
  %v2575 = vpack.c.b16 %v1991, %v1983
  %v2576 = vpack.c.b16 %v1992, %v1984
  %v2577 = vpack.c.b16 %v1993, %v1985
  %v2578 = vpack.c.b16 %v1994, %v1986
  %v2579 = vpack.c.b16 %v1995, %v1987
  %v2580 = vpack.c.b16 %v1996, %v1988
  %v2581 = vpack.c.b16 %v2005, %v1997
  %v2582 = vpack.c.b16 %v2006, %v1998
  %v2583 = vpack.c.b16 %v2007, %v1999
  %v2584 = vpack.c.b16 %v2008, %v2000
  %v2585 = vpack.c.b16 %v2009, %v2001
  %v2586 = vpack.c.b16 %v2010, %v2002
  %v2587 = vpack.c.b16 %v2011, %v2003
  %v2588 = vpack.c.b16 %v2012, %v2004
  %v2589 = vpack.c.b16 %v2021, %v2013
  %v2590 = vpack.c.b16 %v2022, %v2014
  %v2591 = vpack.c.b16 %v2023, %v2015
  %v2592 = vpack.c.b16 %v2024, %v2016
  %v2593 = vpack.c.b16 %v2025, %v2017
  %v2594 = vpack.c.b16 %v2026, %v2018
  %v2595 = vpack.c.b16 %v2027, %v2019
  %v2596 = vpack.c.b16 %v2028, %v2020
  %v2597 = vpack.c.b16 %v2037, %v2029
  %v2598 = vpack.c.b16 %v2038, %v2030
  %v2599 = vpack.c.b16 %v2039, %v2031
  %v2600 = vpack.c.b16 %v2040, %v2032
  %v2601 = vpack.c.b16 %v2041, %v2033
  %v2602 = vpack.c.b16 %v2042, %v2034
  %v2603 = vpack.c.b16 %v2043, %v2035
  %v2604 = vpack.c.b16 %v2044, %v2036
  %v2605 = vpack.c.b16 %v2053, %v2045
  %v2606 = vpack.c.b16 %v2054, %v2046
  %v2607 = vpack.c.b16 %v2055, %v2047
  %v2608 = vpack.c.b16 %v2056, %v2048
  %v2609 = vpack.c.b16 %v2057, %v2049
  %v2610 = vpack.c.b16 %v2058, %v2050
  %v2611 = vpack.c.b16 %v2059, %v2051
  %v2612 = vpack.c.b16 %v2060, %v2052
  %v2613 = vpack.c.b16 %v2069, %v2061
  %v2614 = vpack.c.b16 %v2070, %v2062
  %v2615 = vpack.c.b16 %v2071, %v2063
  %v2616 = vpack.c.b16 %v2072, %v2064
  %v2617 = vpack.c.b16 %v2073, %v2065
  %v2618 = vpack.c.b16 %v2074, %v2066
  %v2619 = vpack.c.b16 %v2075, %v2067
  %v2620 = vpack.c.b16 %v2076, %v2068
  %v2621 = vpack.c.b16 %v2085, %v2077
  %v2622 = vpack.c.b16 %v2086, %v2078
  %v2623 = vpack.c.b16 %v2087, %v2079
  %v2624 = vpack.c.b16 %v2088, %v2080
  %v2625 = vpack.c.b16 %v2089, %v2081
  %v2626 = vpack.c.b16 %v2090, %v2082
  %v2627 = vpack.c.b16 %v2091, %v2083
  %v2628 = vpack.c.b16 %v2092, %v2084
  %v2629 = vpack.c.b16 %v2101, %v2093
  %v2630 = vpack.c.b16 %v2102, %v2094
  %v2631 = vpack.c.b16 %v2103, %v2095
  %v2632 = vpack.c.b16 %v2104, %v2096
  %v2633 = vpack.c.b16 %v2105, %v2097
  %v2634 = vpack.c.b16 %v2106, %v2098
  %v2635 = vpack.c.b16 %v2107, %v2099
  %v2636 = vpack.c.b16 %v2108, %v2100
  %v2637 = vpack.c.b16 %v2117, %v2109
  %v2638 = vpack.c.b16 %v2118, %v2110
  %v2639 = vpack.c.b16 %v2119, %v2111
  %v2640 = vpack.c.b16 %v2120, %v2112
  %v2641 = vpack.c.b16 %v2121, %v2113
  %v2642 = vpack.c.b16 %v2122, %v2114
  %v2643 = vpack.c.b16 %v2123, %v2115
  %v2644 = vpack.c.b16 %v2124, %v2116
  %v2645 = vpack.c.b16 %v2133, %v2125
  %v2646 = vpack.c.b16 %v2134, %v2126
  %v2647 = vpack.c.b16 %v2135, %v2127
  %v2648 = vpack.c.b16 %v2136, %v2128
  %v2649 = vpack.c.b16 %v2137, %v2129
  %v2650 = vpack.c.b16 %v2138, %v2130
  %v2651 = vpack.c.b16 %v2139, %v2131
  %v2652 = vpack.c.b16 %v2140, %v2132
  %3165 = vmatprep.subr.bf16.mxu0 %v2142
  %3166 = vmatpush1.bf16.msra.mxu0 %v2141
  %3167 = vmatprep.subr.bf16.mxu0 %v2150
  %3168 = vmatpush1.bf16.msra.mxu0 %v2149
  %3169 = vmatprep.subr.bf16.mxu0 %v2158
  %3170 = vmatpush1.bf16.msra.mxu0 %v2157
  %3171 = vmatprep.subr.bf16.mxu0 %v2166
  %3172 = vmatpush1.bf16.msra.mxu0 %v2165
  %3173 = vmatprep.subr.bf16.mxu0 %v2174
  %3174 = vmatpush1.bf16.msra.mxu0 %v2173
  %3175 = vmatprep.subr.bf16.mxu0 %v2182
  %3176 = vmatpush1.bf16.msra.mxu0 %v2181
  %3177 = vmatprep.subr.bf16.mxu0 %v2190
  %3178 = vmatpush1.bf16.msra.mxu0 %v2189
  %3179 = vmatprep.subr.bf16.mxu0 %v2198
  %3180 = vmatpush1.bf16.msra.mxu0 %v2197
  %3181 = vmatprep.subr.bf16.mxu0 %v2206
  %3182 = vmatpush1.bf16.msra.mxu0 %v2205
  %3183 = vmatprep.subr.bf16.mxu0 %v2214
  %3184 = vmatpush1.bf16.msra.mxu0 %v2213
  %3185 = vmatprep.subr.bf16.mxu0 %v2222
  %3186 = vmatpush1.bf16.msra.mxu0 %v2221
  %3187 = vmatprep.subr.bf16.mxu0 %v2230
  %3188 = vmatpush1.bf16.msra.mxu0 %v2229
  %3189 = vmatprep.subr.bf16.mxu0 %v2238
  %3190 = vmatpush1.bf16.msra.mxu0 %v2237
  %3191 = vmatprep.subr.bf16.mxu0 %v2246
  %3192 = vmatpush1.bf16.msra.mxu0 %v2245
  %3193 = vmatprep.subr.bf16.mxu0 %v2254
  %3194 = vmatpush1.bf16.msra.mxu0 %v2253
  %3195 = vmatprep.subr.bf16.mxu0 %v2262
  %3196 = vmatpush1.bf16.msra.mxu0 %v2261
  %3197 = vmatprep.mubr.bf16.mxu0 %v585
  %3198 = vmatmul.mubr.bf16.gmra.mrb[0].mxu0 %v571
  %v3199 = vpop.f32.mrb[0].mxu0
  %v3200 = vadd.f32 0.0, %v3199
  %v3201 = vpop.f32.mrb[0].mxu0
  %v3202 = vadd.f32 0.0, %v3201
  %v3203 = vpop.f32.mrb[0].mxu0
  %v3204 = vpop.f32.mrb[0].mxu0
  %3205 = vdwg.mxu0
  %3206 = vmatprep.subr.bf16.mxu0 %v2270
  %3207 = vmatpush1.bf16.msra.mxu0 %v2269
  %3208 = vmatprep.subr.bf16.mxu0 %v2278
  %3209 = vmatpush1.bf16.msra.mxu0 %v2277
  %3210 = vmatprep.subr.bf16.mxu0 %v2286
  %3211 = vmatpush1.bf16.msra.mxu0 %v2285
  %3212 = vmatprep.subr.bf16.mxu0 %v2294
  %3213 = vmatpush1.bf16.msra.mxu0 %v2293
  %3214 = vmatprep.subr.bf16.mxu0 %v2302
  %3215 = vmatpush1.bf16.msra.mxu0 %v2301
  %3216 = vmatprep.subr.bf16.mxu0 %v2310
  %3217 = vmatpush1.bf16.msra.mxu0 %v2309
  %3218 = vmatprep.subr.bf16.mxu0 %v2318
  %3219 = vmatpush1.bf16.msra.mxu0 %v2317
  %3220 = vmatprep.subr.bf16.mxu0 %v2326
  %3221 = vmatpush1.bf16.msra.mxu0 %v2325
  %3222 = vmatprep.subr.bf16.mxu0 %v2334
  %3223 = vmatpush1.bf16.msra.mxu0 %v2333
  %3224 = vmatprep.subr.bf16.mxu0 %v2342
  %3225 = vmatpush1.bf16.msra.mxu0 %v2341
  %3226 = vmatprep.subr.bf16.mxu0 %v2350
  %3227 = vmatpush1.bf16.msra.mxu0 %v2349
  %3228 = vmatprep.subr.bf16.mxu0 %v2358
  %3229 = vmatpush1.bf16.msra.mxu0 %v2357
  %3230 = vmatprep.subr.bf16.mxu0 %v2366
  %3231 = vmatpush1.bf16.msra.mxu0 %v2365
  %3232 = vmatprep.subr.bf16.mxu0 %v2374
  %3233 = vmatpush1.bf16.msra.mxu0 %v2373
  %3234 = vmatprep.subr.bf16.mxu0 %v2382
  %3235 = vmatpush1.bf16.msra.mxu0 %v2381
  %3236 = vmatprep.subr.bf16.mxu0 %v2390
  %3237 = vmatpush1.bf16.msra.mxu0 %v2389
  %3238 = vmatprep.mubr.bf16.mxu0 %v595
  %3239 = vmatmul.mubr.bf16.gmra.mrb[0].mxu0 %v593
  %v3240 = vpop.f32.mrb[0].mxu0
  %v3241 = vadd.f32 %v3200, %v3240
  %v3242 = vpop.f32.mrb[0].mxu0
  %v3243 = vadd.f32 %v3202, %v3242
  %v3244 = vpop.f32.mrb[0].mxu0
  %v3245 = vpop.f32.mrb[0].mxu0
  %3246 = vdwg.mxu0
  %3247 = vmatprep.subr.bf16.mxu0 %v2398
  %3248 = vmatpush1.bf16.msra.mxu0 %v2397
  %3249 = vmatprep.subr.bf16.mxu0 %v2406
  %3250 = vmatpush1.bf16.msra.mxu0 %v2405
  %3251 = vmatprep.subr.bf16.mxu0 %v2414
  %3252 = vmatpush1.bf16.msra.mxu0 %v2413
  %3253 = vmatprep.subr.bf16.mxu0 %v2422
  %3254 = vmatpush1.bf16.msra.mxu0 %v2421
  %3255 = vmatprep.subr.bf16.mxu0 %v2430
  %3256 = vmatpush1.bf16.msra.mxu0 %v2429
  %3257 = vmatprep.subr.bf16.mxu0 %v2438
  %3258 = vmatpush1.bf16.msra.mxu0 %v2437
  %3259 = vmatprep.subr.bf16.mxu0 %v2446
  %3260 = vmatpush1.bf16.msra.mxu0 %v2445
  %3261 = vmatprep.subr.bf16.mxu0 %v2454
  %3262 = vmatpush1.bf16.msra.mxu0 %v2453
  %3263 = vmatprep.subr.bf16.mxu0 %v2462
  %3264 = vmatpush1.bf16.msra.mxu0 %v2461
  %3265 = vmatprep.subr.bf16.mxu0 %v2470
  %3266 = vmatpush1.bf16.msra.mxu0 %v2469
  %3267 = vmatprep.subr.bf16.mxu0 %v2478
  %3268 = vmatpush1.bf16.msra.mxu0 %v2477
  %3269 = vmatprep.subr.bf16.mxu0 %v2486
  %3270 = vmatpush1.bf16.msra.mxu0 %v2485
  %3271 = vmatprep.subr.bf16.mxu0 %v2494
  %3272 = vmatpush1.bf16.msra.mxu0 %v2493
  %3273 = vmatprep.subr.bf16.mxu0 %v2502
  %3274 = vmatpush1.bf16.msra.mxu0 %v2501
  %3275 = vmatprep.subr.bf16.mxu0 %v2510
  %3276 = vmatpush1.bf16.msra.mxu0 %v2509
  %3277 = vmatprep.subr.bf16.mxu0 %v2518
  %3278 = vmatpush1.bf16.msra.mxu0 %v2517
  %3279 = vmatprep.mubr.bf16.mxu0 %v592
  %3280 = vmatmul.mubr.bf16.gmra.mrb[0].mxu0 %v578
  %v3281 = vpop.f32.mrb[0].mxu0
  %v3282 = vadd.f32 %v3241, %v3281
  %v3283 = vpop.f32.mrb[0].mxu0
  %v3284 = vadd.f32 %v3243, %v3283
  %v3285 = vpop.f32.mrb[0].mxu0
  %v3286 = vpop.f32.mrb[0].mxu0
  %3287 = vdwg.mxu0
  %3288 = vmatprep.subr.bf16.mxu0 %v2526
  %3289 = vmatpush1.bf16.msra.mxu0 %v2525
  %3290 = vmatprep.subr.bf16.mxu0 %v2534
  %3291 = vmatpush1.bf16.msra.mxu0 %v2533
  %3292 = vmatprep.subr.bf16.mxu0 %v2542
  %3293 = vmatpush1.bf16.msra.mxu0 %v2541
  %3294 = vmatprep.subr.bf16.mxu0 %v2550
  %3295 = vmatpush1.bf16.msra.mxu0 %v2549
  %3296 = vmatprep.subr.bf16.mxu0 %v2558
  %3297 = vmatpush1.bf16.msra.mxu0 %v2557
  %3298 = vmatprep.subr.bf16.mxu0 %v2566
  %3299 = vmatpush1.bf16.msra.mxu0 %v2565
  %3300 = vmatprep.subr.bf16.mxu0 %v2574
  %3301 = vmatpush1.bf16.msra.mxu0 %v2573
  %3302 = vmatprep.subr.bf16.mxu0 %v2582
  %3303 = vmatpush1.bf16.msra.mxu0 %v2581
  %3304 = vmatprep.subr.bf16.mxu0 %v2590
  %3305 = vmatpush1.bf16.msra.mxu0 %v2589
  %3306 = vmatprep.subr.bf16.mxu0 %v2598
  %3307 = vmatpush1.bf16.msra.mxu0 %v2597
  %3308 = vmatprep.subr.bf16.mxu0 %v2606
  %3309 = vmatpush1.bf16.msra.mxu0 %v2605
  %3310 = vmatprep.subr.bf16.mxu0 %v2614
  %3311 = vmatpush1.bf16.msra.mxu0 %v2613
  %3312 = vmatprep.subr.bf16.mxu0 %v2622
  %3313 = vmatpush1.bf16.msra.mxu0 %v2621
  %3314 = vmatprep.subr.bf16.mxu0 %v2630
  %3315 = vmatpush1.bf16.msra.mxu0 %v2629
  %3316 = vmatprep.subr.bf16.mxu0 %v2638
  %3317 = vmatpush1.bf16.msra.mxu0 %v2637
  %3318 = vmatprep.subr.bf16.mxu0 %v2646
  %3319 = vmatpush1.bf16.msra.mxu0 %v2645
  %3320 = vmatprep.mubr.bf16.mxu0 %v596
  %3321 = vmatmul.mubr.bf16.gmra.mrb[0].mxu0 %v594
  %v3322 = vpop.f32.mrb[0].mxu0
  %v3323 = vadd.f32 %v3282, %v3322
  %v3324 = vpop.f32.mrb[0].mxu0
  %v3325 = vadd.f32 %v3284, %v3324
  %v3326 = vpop.f32.mrb[0].mxu0
  %v3327 = vpop.f32.mrb[0].mxu0
  %3328 = vdwg.mxu0
  %3329 = vmatprep.subr.bf16.mxu0 %v2144
  %3330 = vmatpush1.bf16.msra.mxu0 %v2143
  %3331 = vmatprep.subr.bf16.mxu0 %v2152
  %3332 = vmatpush1.bf16.msra.mxu0 %v2151
  %3333 = vmatprep.subr.bf16.mxu0 %v2160
  %3334 = vmatpush1.bf16.msra.mxu0 %v2159
  %3335 = vmatprep.subr.bf16.mxu0 %v2168
  %3336 = vmatpush1.bf16.msra.mxu0 %v2167
  %3337 = vmatprep.subr.bf16.mxu0 %v2176
  %3338 = vmatpush1.bf16.msra.mxu0 %v2175
  %3339 = vmatprep.subr.bf16.mxu0 %v2184
  %3340 = vmatpush1.bf16.msra.mxu0 %v2183
  %3341 = vmatprep.subr.bf16.mxu0 %v2192
  %3342 = vmatpush1.bf16.msra.mxu0 %v2191
  %3343 = vmatprep.subr.bf16.mxu0 %v2200
  %3344 = vmatpush1.bf16.msra.mxu0 %v2199
  %3345 = vmatprep.subr.bf16.mxu0 %v2208
  %3346 = vmatpush1.bf16.msra.mxu0 %v2207
  %3347 = vmatprep.subr.bf16.mxu0 %v2216
  %3348 = vmatpush1.bf16.msra.mxu0 %v2215
  %3349 = vmatprep.subr.bf16.mxu0 %v2224
  %3350 = vmatpush1.bf16.msra.mxu0 %v2223
  %3351 = vmatprep.subr.bf16.mxu0 %v2232
  %3352 = vmatpush1.bf16.msra.mxu0 %v2231
  %3353 = vmatprep.subr.bf16.mxu0 %v2240
  %3354 = vmatpush1.bf16.msra.mxu0 %v2239
  %3355 = vmatprep.subr.bf16.mxu0 %v2248
  %3356 = vmatpush1.bf16.msra.mxu0 %v2247
  %3357 = vmatprep.subr.bf16.mxu0 %v2256
  %3358 = vmatpush1.bf16.msra.mxu0 %v2255
  %3359 = vmatprep.subr.bf16.mxu0 %v2264
  %3360 = vmatpush1.bf16.msra.mxu0 %v2263
  %3361 = vmatprep.mubr.bf16.mxu0 %v585
  %3362 = vmatmul.mubr.bf16.gmra.mrb[0].mxu0 %v571
  %v3363 = vpop.f32.mrb[0].mxu0
  %v3364 = vadd.f32 0.0, %v3363
  %v3365 = vpop.f32.mrb[0].mxu0
  %v3366 = vadd.f32 0.0, %v3365
  %v3367 = vpop.f32.mrb[0].mxu0
  %v3368 = vpop.f32.mrb[0].mxu0
  %3369 = vdwg.mxu0
  %3370 = vmatprep.subr.bf16.mxu0 %v2272
  %3371 = vmatpush1.bf16.msra.mxu0 %v2271
  %3372 = vmatprep.subr.bf16.mxu0 %v2280
  %3373 = vmatpush1.bf16.msra.mxu0 %v2279
  %3374 = vmatprep.subr.bf16.mxu0 %v2288
  %3375 = vmatpush1.bf16.msra.mxu0 %v2287
  %3376 = vmatprep.subr.bf16.mxu0 %v2296
  %3377 = vmatpush1.bf16.msra.mxu0 %v2295
  %3378 = vmatprep.subr.bf16.mxu0 %v2304
  %3379 = vmatpush1.bf16.msra.mxu0 %v2303
  %3380 = vmatprep.subr.bf16.mxu0 %v2312
  %3381 = vmatpush1.bf16.msra.mxu0 %v2311
  %3382 = vmatprep.subr.bf16.mxu0 %v2320
  %3383 = vmatpush1.bf16.msra.mxu0 %v2319
  %3384 = vmatprep.subr.bf16.mxu0 %v2328
  %3385 = vmatpush1.bf16.msra.mxu0 %v2327
  %3386 = vmatprep.subr.bf16.mxu0 %v2336
  %3387 = vmatpush1.bf16.msra.mxu0 %v2335
  %3388 = vmatprep.subr.bf16.mxu0 %v2344
  %3389 = vmatpush1.bf16.msra.mxu0 %v2343
  %3390 = vmatprep.subr.bf16.mxu0 %v2352
  %3391 = vmatpush1.bf16.msra.mxu0 %v2351
  %3392 = vmatprep.subr.bf16.mxu0 %v2360
  %3393 = vmatpush1.bf16.msra.mxu0 %v2359
  %3394 = vmatprep.subr.bf16.mxu0 %v2368
  %3395 = vmatpush1.bf16.msra.mxu0 %v2367
  %3396 = vmatprep.subr.bf16.mxu0 %v2376
  %3397 = vmatpush1.bf16.msra.mxu0 %v2375
  %3398 = vmatprep.subr.bf16.mxu0 %v2384
  %3399 = vmatpush1.bf16.msra.mxu0 %v2383
  %3400 = vmatprep.subr.bf16.mxu0 %v2392
  %3401 = vmatpush1.bf16.msra.mxu0 %v2391
  %3402 = vmatprep.mubr.bf16.mxu0 %v595
  %3403 = vmatmul.mubr.bf16.gmra.mrb[0].mxu0 %v593
  %v3404 = vpop.f32.mrb[0].mxu0
  %v3405 = vadd.f32 %v3364, %v3404
  %v3406 = vpop.f32.mrb[0].mxu0
  %v3407 = vadd.f32 %v3366, %v3406
  %v3408 = vpop.f32.mrb[0].mxu0
  %v3409 = vpop.f32.mrb[0].mxu0
  %3410 = vdwg.mxu0
  %3411 = vmatprep.subr.bf16.mxu0 %v2400
  %3412 = vmatpush1.bf16.msra.mxu0 %v2399
  %3413 = vmatprep.subr.bf16.mxu0 %v2408
  %3414 = vmatpush1.bf16.msra.mxu0 %v2407
  %3415 = vmatprep.subr.bf16.mxu0 %v2416
  %3416 = vmatpush1.bf16.msra.mxu0 %v2415
  %3417 = vmatprep.subr.bf16.mxu0 %v2424
  %3418 = vmatpush1.bf16.msra.mxu0 %v2423
  %3419 = vmatprep.subr.bf16.mxu0 %v2432
  %3420 = vmatpush1.bf16.msra.mxu0 %v2431
  %3421 = vmatprep.subr.bf16.mxu0 %v2440
  %3422 = vmatpush1.bf16.msra.mxu0 %v2439
  %3423 = vmatprep.subr.bf16.mxu0 %v2448
  %3424 = vmatpush1.bf16.msra.mxu0 %v2447
  %3425 = vmatprep.subr.bf16.mxu0 %v2456
  %3426 = vmatpush1.bf16.msra.mxu0 %v2455
  %3427 = vmatprep.subr.bf16.mxu0 %v2464
  %3428 = vmatpush1.bf16.msra.mxu0 %v2463
  %3429 = vmatprep.subr.bf16.mxu0 %v2472
  %3430 = vmatpush1.bf16.msra.mxu0 %v2471
  %3431 = vmatprep.subr.bf16.mxu0 %v2480
  %3432 = vmatpush1.bf16.msra.mxu0 %v2479
  %3433 = vmatprep.subr.bf16.mxu0 %v2488
  %3434 = vmatpush1.bf16.msra.mxu0 %v2487
  %3435 = vmatprep.subr.bf16.mxu0 %v2496
  %3436 = vmatpush1.bf16.msra.mxu0 %v2495
  %3437 = vmatprep.subr.bf16.mxu0 %v2504
  %3438 = vmatpush1.bf16.msra.mxu0 %v2503
  %3439 = vmatprep.subr.bf16.mxu0 %v2512
  %3440 = vmatpush1.bf16.msra.mxu0 %v2511
  %3441 = vmatprep.subr.bf16.mxu0 %v2520
  %3442 = vmatpush1.bf16.msra.mxu0 %v2519
  %3443 = vmatprep.mubr.bf16.mxu0 %v592
  %3444 = vmatmul.mubr.bf16.gmra.mrb[0].mxu0 %v578
  %v3445 = vpop.f32.mrb[0].mxu0
  %v3446 = vadd.f32 %v3405, %v3445
  %v3447 = vpop.f32.mrb[0].mxu0
  %v3448 = vadd.f32 %v3407, %v3447
  %v3449 = vpop.f32.mrb[0].mxu0
  %v3450 = vpop.f32.mrb[0].mxu0
  %3451 = vdwg.mxu0
  %3452 = vmatprep.subr.bf16.mxu0 %v2528
  %3453 = vmatpush1.bf16.msra.mxu0 %v2527
  %3454 = vmatprep.subr.bf16.mxu0 %v2536
  %3455 = vmatpush1.bf16.msra.mxu0 %v2535
  %3456 = vmatprep.subr.bf16.mxu0 %v2544
  %3457 = vmatpush1.bf16.msra.mxu0 %v2543
  %3458 = vmatprep.subr.bf16.mxu0 %v2552
  %3459 = vmatpush1.bf16.msra.mxu0 %v2551
  %3460 = vmatprep.subr.bf16.mxu0 %v2560
  %3461 = vmatpush1.bf16.msra.mxu0 %v2559
  %3462 = vmatprep.subr.bf16.mxu0 %v2568
  %3463 = vmatpush1.bf16.msra.mxu0 %v2567
  %3464 = vmatprep.subr.bf16.mxu0 %v2576
  %3465 = vmatpush1.bf16.msra.mxu0 %v2575
  %3466 = vmatprep.subr.bf16.mxu0 %v2584
  %3467 = vmatpush1.bf16.msra.mxu0 %v2583
  %3468 = vmatprep.subr.bf16.mxu0 %v2592
  %3469 = vmatpush1.bf16.msra.mxu0 %v2591
  %3470 = vmatprep.subr.bf16.mxu0 %v2600
  %3471 = vmatpush1.bf16.msra.mxu0 %v2599
  %3472 = vmatprep.subr.bf16.mxu0 %v2608
  %3473 = vmatpush1.bf16.msra.mxu0 %v2607
  %3474 = vmatprep.subr.bf16.mxu0 %v2616
  %3475 = vmatpush1.bf16.msra.mxu0 %v2615
  %3476 = vmatprep.subr.bf16.mxu0 %v2624
  %3477 = vmatpush1.bf16.msra.mxu0 %v2623
  %3478 = vmatprep.subr.bf16.mxu0 %v2632
  %3479 = vmatpush1.bf16.msra.mxu0 %v2631
  %3480 = vmatprep.subr.bf16.mxu0 %v2640
  %3481 = vmatpush1.bf16.msra.mxu0 %v2639
  %3482 = vmatprep.subr.bf16.mxu0 %v2648
  %3483 = vmatpush1.bf16.msra.mxu0 %v2647
  %3484 = vmatprep.mubr.bf16.mxu0 %v596
  %3485 = vmatmul.mubr.bf16.gmra.mrb[0].mxu0 %v594
  %v3486 = vpop.f32.mrb[0].mxu0
  %v3487 = vadd.f32 %v3446, %v3486
  %v3488 = vpop.f32.mrb[0].mxu0
  %v3489 = vadd.f32 %v3448, %v3488
  %v3490 = vpop.f32.mrb[0].mxu0
  %v3491 = vpop.f32.mrb[0].mxu0
  %3492 = vdwg.mxu0
  %3493 = vmatprep.subr.bf16.mxu0 %v2146
  %3494 = vmatpush1.bf16.msra.mxu0 %v2145
  %3495 = vmatprep.subr.bf16.mxu0 %v2154
  %3496 = vmatpush1.bf16.msra.mxu0 %v2153
  %3497 = vmatprep.subr.bf16.mxu0 %v2162
  %3498 = vmatpush1.bf16.msra.mxu0 %v2161
  %3499 = vmatprep.subr.bf16.mxu0 %v2170
  %3500 = vmatpush1.bf16.msra.mxu0 %v2169
  %3501 = vmatprep.subr.bf16.mxu0 %v2178
  %3502 = vmatpush1.bf16.msra.mxu0 %v2177
  %3503 = vmatprep.subr.bf16.mxu0 %v2186
  %3504 = vmatpush1.bf16.msra.mxu0 %v2185
  %3505 = vmatprep.subr.bf16.mxu0 %v2194
  %3506 = vmatpush1.bf16.msra.mxu0 %v2193
  %3507 = vmatprep.subr.bf16.mxu0 %v2202
  %3508 = vmatpush1.bf16.msra.mxu0 %v2201
  %3509 = vmatprep.subr.bf16.mxu0 %v2210
  %3510 = vmatpush1.bf16.msra.mxu0 %v2209
  %3511 = vmatprep.subr.bf16.mxu0 %v2218
  %3512 = vmatpush1.bf16.msra.mxu0 %v2217
  %3513 = vmatprep.subr.bf16.mxu0 %v2226
  %3514 = vmatpush1.bf16.msra.mxu0 %v2225
  %3515 = vmatprep.subr.bf16.mxu0 %v2234
  %3516 = vmatpush1.bf16.msra.mxu0 %v2233
  %3517 = vmatprep.subr.bf16.mxu0 %v2242
  %3518 = vmatpush1.bf16.msra.mxu0 %v2241
  %3519 = vmatprep.subr.bf16.mxu0 %v2250
  %3520 = vmatpush1.bf16.msra.mxu0 %v2249
  %3521 = vmatprep.subr.bf16.mxu0 %v2258
  %3522 = vmatpush1.bf16.msra.mxu0 %v2257
  %3523 = vmatprep.subr.bf16.mxu0 %v2266
  %3524 = vmatpush1.bf16.msra.mxu0 %v2265
  %3525 = vmatprep.mubr.bf16.mxu0 %v585
  %3526 = vmatmul.mubr.bf16.gmra.mrb[0].mxu0 %v571
  %v3527 = vpop.f32.mrb[0].mxu0
  %v3528 = vadd.f32 0.0, %v3527
  %v3529 = vpop.f32.mrb[0].mxu0
  %v3530 = vadd.f32 0.0, %v3529
  %v3531 = vpop.f32.mrb[0].mxu0
  %v3532 = vpop.f32.mrb[0].mxu0
  %3533 = vdwg.mxu0
  %3534 = vmatprep.subr.bf16.mxu0 %v2274
  %3535 = vmatpush1.bf16.msra.mxu0 %v2273
  %3536 = vmatprep.subr.bf16.mxu0 %v2282
  %3537 = vmatpush1.bf16.msra.mxu0 %v2281
  %3538 = vmatprep.subr.bf16.mxu0 %v2290
  %3539 = vmatpush1.bf16.msra.mxu0 %v2289
  %3540 = vmatprep.subr.bf16.mxu0 %v2298
  %3541 = vmatpush1.bf16.msra.mxu0 %v2297
  %3542 = vmatprep.subr.bf16.mxu0 %v2306
  %3543 = vmatpush1.bf16.msra.mxu0 %v2305
  %3544 = vmatprep.subr.bf16.mxu0 %v2314
  %3545 = vmatpush1.bf16.msra.mxu0 %v2313
  %3546 = vmatprep.subr.bf16.mxu0 %v2322
  %3547 = vmatpush1.bf16.msra.mxu0 %v2321
  %3548 = vmatprep.subr.bf16.mxu0 %v2330
  %3549 = vmatpush1.bf16.msra.mxu0 %v2329
  %3550 = vmatprep.subr.bf16.mxu0 %v2338
  %3551 = vmatpush1.bf16.msra.mxu0 %v2337
  %3552 = vmatprep.subr.bf16.mxu0 %v2346
  %3553 = vmatpush1.bf16.msra.mxu0 %v2345
  %3554 = vmatprep.subr.bf16.mxu0 %v2354
  %3555 = vmatpush1.bf16.msra.mxu0 %v2353
  %3556 = vmatprep.subr.bf16.mxu0 %v2362
  %3557 = vmatpush1.bf16.msra.mxu0 %v2361
  %3558 = vmatprep.subr.bf16.mxu0 %v2370
  %3559 = vmatpush1.bf16.msra.mxu0 %v2369
  %3560 = vmatprep.subr.bf16.mxu0 %v2378
  %3561 = vmatpush1.bf16.msra.mxu0 %v2377
  %3562 = vmatprep.subr.bf16.mxu0 %v2386
  %3563 = vmatpush1.bf16.msra.mxu0 %v2385
  %3564 = vmatprep.subr.bf16.mxu0 %v2394
  %3565 = vmatpush1.bf16.msra.mxu0 %v2393
  %3566 = vmatprep.mubr.bf16.mxu0 %v595
  %3567 = vmatmul.mubr.bf16.gmra.mrb[0].mxu0 %v593
  %v3568 = vpop.f32.mrb[0].mxu0
  %v3569 = vadd.f32 %v3528, %v3568
  %v3570 = vpop.f32.mrb[0].mxu0
  %v3571 = vadd.f32 %v3530, %v3570
  %v3572 = vpop.f32.mrb[0].mxu0
  %v3573 = vpop.f32.mrb[0].mxu0
  %3574 = vdwg.mxu0
  %3575 = vmatprep.subr.bf16.mxu0 %v2402
  %3576 = vmatpush1.bf16.msra.mxu0 %v2401
  %3577 = vmatprep.subr.bf16.mxu0 %v2410
  %3578 = vmatpush1.bf16.msra.mxu0 %v2409
  %3579 = vmatprep.subr.bf16.mxu0 %v2418
  %3580 = vmatpush1.bf16.msra.mxu0 %v2417
  %3581 = vmatprep.subr.bf16.mxu0 %v2426
  %3582 = vmatpush1.bf16.msra.mxu0 %v2425
  %3583 = vmatprep.subr.bf16.mxu0 %v2434
  %3584 = vmatpush1.bf16.msra.mxu0 %v2433
  %3585 = vmatprep.subr.bf16.mxu0 %v2442
  %3586 = vmatpush1.bf16.msra.mxu0 %v2441
  %3587 = vmatprep.subr.bf16.mxu0 %v2450
  %3588 = vmatpush1.bf16.msra.mxu0 %v2449
  %3589 = vmatprep.subr.bf16.mxu0 %v2458
  %3590 = vmatpush1.bf16.msra.mxu0 %v2457
  %3591 = vmatprep.subr.bf16.mxu0 %v2466
  %3592 = vmatpush1.bf16.msra.mxu0 %v2465
  %3593 = vmatprep.subr.bf16.mxu0 %v2474
  %3594 = vmatpush1.bf16.msra.mxu0 %v2473
  %3595 = vmatprep.subr.bf16.mxu0 %v2482
  %3596 = vmatpush1.bf16.msra.mxu0 %v2481
  %3597 = vmatprep.subr.bf16.mxu0 %v2490
  %3598 = vmatpush1.bf16.msra.mxu0 %v2489
  %3599 = vmatprep.subr.bf16.mxu0 %v2498
  %3600 = vmatpush1.bf16.msra.mxu0 %v2497
  %3601 = vmatprep.subr.bf16.mxu0 %v2506
  %3602 = vmatpush1.bf16.msra.mxu0 %v2505
  %3603 = vmatprep.subr.bf16.mxu0 %v2514
  %3604 = vmatpush1.bf16.msra.mxu0 %v2513
  %3605 = vmatprep.subr.bf16.mxu0 %v2522
  %3606 = vmatpush1.bf16.msra.mxu0 %v2521
  %3607 = vmatprep.mubr.bf16.mxu0 %v592
  %3608 = vmatmul.mubr.bf16.gmra.mrb[0].mxu0 %v578
  %v3609 = vpop.f32.mrb[0].mxu0
  %v3610 = vadd.f32 %v3569, %v3609
  %v3611 = vpop.f32.mrb[0].mxu0
  %v3612 = vadd.f32 %v3571, %v3611
  %v3613 = vpop.f32.mrb[0].mxu0
  %v3614 = vpop.f32.mrb[0].mxu0
  %3615 = vdwg.mxu0
  %3616 = vmatprep.subr.bf16.mxu0 %v2530
  %3617 = vmatpush1.bf16.msra.mxu0 %v2529
  %3618 = vmatprep.subr.bf16.mxu0 %v2538
  %3619 = vmatpush1.bf16.msra.mxu0 %v2537
  %3620 = vmatprep.subr.bf16.mxu0 %v2546
  %3621 = vmatpush1.bf16.msra.mxu0 %v2545
  %3622 = vmatprep.subr.bf16.mxu0 %v2554
  %3623 = vmatpush1.bf16.msra.mxu0 %v2553
  %3624 = vmatprep.subr.bf16.mxu0 %v2562
  %3625 = vmatpush1.bf16.msra.mxu0 %v2561
  %3626 = vmatprep.subr.bf16.mxu0 %v2570
  %3627 = vmatpush1.bf16.msra.mxu0 %v2569
  %3628 = vmatprep.subr.bf16.mxu0 %v2578
  %3629 = vmatpush1.bf16.msra.mxu0 %v2577
  %3630 = vmatprep.subr.bf16.mxu0 %v2586
  %3631 = vmatpush1.bf16.msra.mxu0 %v2585
  %3632 = vmatprep.subr.bf16.mxu0 %v2594
  %3633 = vmatpush1.bf16.msra.mxu0 %v2593
  %3634 = vmatprep.subr.bf16.mxu0 %v2602
  %3635 = vmatpush1.bf16.msra.mxu0 %v2601
  %3636 = vmatprep.subr.bf16.mxu0 %v2610
  %3637 = vmatpush1.bf16.msra.mxu0 %v2609
  %3638 = vmatprep.subr.bf16.mxu0 %v2618
  %3639 = vmatpush1.bf16.msra.mxu0 %v2617
  %3640 = vmatprep.subr.bf16.mxu0 %v2626
  %3641 = vmatpush1.bf16.msra.mxu0 %v2625
  %3642 = vmatprep.subr.bf16.mxu0 %v2634
  %3643 = vmatpush1.bf16.msra.mxu0 %v2633
  %3644 = vmatprep.subr.bf16.mxu0 %v2642
  %3645 = vmatpush1.bf16.msra.mxu0 %v2641
  %3646 = vmatprep.subr.bf16.mxu0 %v2650
  %3647 = vmatpush1.bf16.msra.mxu0 %v2649
  %3648 = vmatprep.mubr.bf16.mxu0 %v596
  %3649 = vmatmul.mubr.bf16.gmra.mrb[0].mxu0 %v594
  %v3650 = vpop.f32.mrb[0].mxu0
  %v3651 = vadd.f32 %v3610, %v3650
  %v3652 = vpop.f32.mrb[0].mxu0
  %v3653 = vadd.f32 %v3612, %v3652
  %v3654 = vpop.f32.mrb[0].mxu0
  %v3655 = vpop.f32.mrb[0].mxu0
  %3656 = vdwg.mxu0
  %3657 = vmatprep.subr.bf16.mxu0 %v2148
  %3658 = vmatpush1.bf16.msra.mxu0 %v2147
  %3659 = vmatprep.subr.bf16.mxu0 %v2156
  %3660 = vmatpush1.bf16.msra.mxu0 %v2155
  %3661 = vmatprep.subr.bf16.mxu0 %v2164
  %3662 = vmatpush1.bf16.msra.mxu0 %v2163
  %3663 = vmatprep.subr.bf16.mxu0 %v2172
  %3664 = vmatpush1.bf16.msra.mxu0 %v2171
  %3665 = vmatprep.subr.bf16.mxu0 %v2180
  %3666 = vmatpush1.bf16.msra.mxu0 %v2179
  %3667 = vmatprep.subr.bf16.mxu0 %v2188
  %3668 = vmatpush1.bf16.msra.mxu0 %v2187
  %3669 = vmatprep.subr.bf16.mxu0 %v2196
  %3670 = vmatpush1.bf16.msra.mxu0 %v2195
  %3671 = vmatprep.subr.bf16.mxu0 %v2204
  %3672 = vmatpush1.bf16.msra.mxu0 %v2203
  %3673 = vmatprep.subr.bf16.mxu0 %v2212
  %3674 = vmatpush1.bf16.msra.mxu0 %v2211
  %3675 = vmatprep.subr.bf16.mxu0 %v2220
  %3676 = vmatpush1.bf16.msra.mxu0 %v2219
  %3677 = vmatprep.subr.bf16.mxu0 %v2228
  %3678 = vmatpush1.bf16.msra.mxu0 %v2227
  %3679 = vmatprep.subr.bf16.mxu0 %v2236
  %3680 = vmatpush1.bf16.msra.mxu0 %v2235
  %3681 = vmatprep.subr.bf16.mxu0 %v2244
  %3682 = vmatpush1.bf16.msra.mxu0 %v2243
  %3683 = vmatprep.subr.bf16.mxu0 %v2252
  %3684 = vmatpush1.bf16.msra.mxu0 %v2251
  %3685 = vmatprep.subr.bf16.mxu0 %v2260
  %3686 = vmatpush1.bf16.msra.mxu0 %v2259
  %3687 = vmatprep.subr.bf16.mxu0 %v2268
  %3688 = vmatpush1.bf16.msra.mxu0 %v2267
  %3689 = vmatprep.mubr.bf16.mxu0 %v585
  %3690 = vmatmul.mubr.bf16.gmra.mrb[0].mxu0 %v571
  %v3691 = vpop.f32.mrb[0].mxu0
  %v3692 = vadd.f32 0.0, %v3691
  %v3693 = vpop.f32.mrb[0].mxu0
  %v3694 = vadd.f32 0.0, %v3693
  %v3695 = vpop.f32.mrb[0].mxu0
  %v3696 = vpop.f32.mrb[0].mxu0
  %3697 = vdwg.mxu0
  %3698 = vmatprep.subr.bf16.mxu0 %v2276
  %3699 = vmatpush1.bf16.msra.mxu0 %v2275
  %3700 = vmatprep.subr.bf16.mxu0 %v2284
  %3701 = vmatpush1.bf16.msra.mxu0 %v2283
  %3702 = vmatprep.subr.bf16.mxu0 %v2292
  %3703 = vmatpush1.bf16.msra.mxu0 %v2291
  %3704 = vmatprep.subr.bf16.mxu0 %v2300
  %3705 = vmatpush1.bf16.msra.mxu0 %v2299
  %3706 = vmatprep.subr.bf16.mxu0 %v2308
  %3707 = vmatpush1.bf16.msra.mxu0 %v2307
  %3708 = vmatprep.subr.bf16.mxu0 %v2316
  %3709 = vmatpush1.bf16.msra.mxu0 %v2315
  %3710 = vmatprep.subr.bf16.mxu0 %v2324
  %3711 = vmatpush1.bf16.msra.mxu0 %v2323
  %3712 = vmatprep.subr.bf16.mxu0 %v2332
  %3713 = vmatpush1.bf16.msra.mxu0 %v2331
  %3714 = vmatprep.subr.bf16.mxu0 %v2340
  %3715 = vmatpush1.bf16.msra.mxu0 %v2339
  %3716 = vmatprep.subr.bf16.mxu0 %v2348
  %3717 = vmatpush1.bf16.msra.mxu0 %v2347
  %3718 = vmatprep.subr.bf16.mxu0 %v2356
  %3719 = vmatpush1.bf16.msra.mxu0 %v2355
  %3720 = vmatprep.subr.bf16.mxu0 %v2364
  %3721 = vmatpush1.bf16.msra.mxu0 %v2363
  %3722 = vmatprep.subr.bf16.mxu0 %v2372
  %3723 = vmatpush1.bf16.msra.mxu0 %v2371
  %3724 = vmatprep.subr.bf16.mxu0 %v2380
  %3725 = vmatpush1.bf16.msra.mxu0 %v2379
  %3726 = vmatprep.subr.bf16.mxu0 %v2388
  %3727 = vmatpush1.bf16.msra.mxu0 %v2387
  %3728 = vmatprep.subr.bf16.mxu0 %v2396
  %3729 = vmatpush1.bf16.msra.mxu0 %v2395
  %3730 = vmatprep.mubr.bf16.mxu0 %v595
  %3731 = vmatmul.mubr.bf16.gmra.mrb[0].mxu0 %v593
  %v3732 = vpop.f32.mrb[0].mxu0
  %v3733 = vadd.f32 %v3692, %v3732
  %v3734 = vpop.f32.mrb[0].mxu0
  %v3735 = vadd.f32 %v3694, %v3734
  %v3736 = vpop.f32.mrb[0].mxu0
  %v3737 = vpop.f32.mrb[0].mxu0
  %3738 = vdwg.mxu0
  %3739 = vmatprep.subr.bf16.mxu0 %v2404
  %3740 = vmatpush1.bf16.msra.mxu0 %v2403
  %3741 = vmatprep.subr.bf16.mxu0 %v2412
  %3742 = vmatpush1.bf16.msra.mxu0 %v2411
  %3743 = vmatprep.subr.bf16.mxu0 %v2420
  %3744 = vmatpush1.bf16.msra.mxu0 %v2419
  %3745 = vmatprep.subr.bf16.mxu0 %v2428
  %3746 = vmatpush1.bf16.msra.mxu0 %v2427
  %3747 = vmatprep.subr.bf16.mxu0 %v2436
  %3748 = vmatpush1.bf16.msra.mxu0 %v2435
  %3749 = vmatprep.subr.bf16.mxu0 %v2444
  %3750 = vmatpush1.bf16.msra.mxu0 %v2443
  %3751 = vmatprep.subr.bf16.mxu0 %v2452
  %3752 = vmatpush1.bf16.msra.mxu0 %v2451
  %3753 = vmatprep.subr.bf16.mxu0 %v2460
  %3754 = vmatpush1.bf16.msra.mxu0 %v2459
  %3755 = vmatprep.subr.bf16.mxu0 %v2468
  %3756 = vmatpush1.bf16.msra.mxu0 %v2467
  %3757 = vmatprep.subr.bf16.mxu0 %v2476
  %3758 = vmatpush1.bf16.msra.mxu0 %v2475
  %3759 = vmatprep.subr.bf16.mxu0 %v2484
  %3760 = vmatpush1.bf16.msra.mxu0 %v2483
  %3761 = vmatprep.subr.bf16.mxu0 %v2492
  %3762 = vmatpush1.bf16.msra.mxu0 %v2491
  %3763 = vmatprep.subr.bf16.mxu0 %v2500
  %3764 = vmatpush1.bf16.msra.mxu0 %v2499
  %3765 = vmatprep.subr.bf16.mxu0 %v2508
  %3766 = vmatpush1.bf16.msra.mxu0 %v2507
  %3767 = vmatprep.subr.bf16.mxu0 %v2516
  %3768 = vmatpush1.bf16.msra.mxu0 %v2515
  %3769 = vmatprep.subr.bf16.mxu0 %v2524
  %3770 = vmatpush1.bf16.msra.mxu0 %v2523
  %3771 = vmatprep.mubr.bf16.mxu0 %v592
  %3772 = vmatmul.mubr.bf16.gmra.mrb[0].mxu0 %v578
  %v3773 = vpop.f32.mrb[0].mxu0
  %v3774 = vadd.f32 %v3733, %v3773
  %v3775 = vpop.f32.mrb[0].mxu0
  %v3776 = vadd.f32 %v3735, %v3775
  %v3777 = vpop.f32.mrb[0].mxu0
  %v3778 = vpop.f32.mrb[0].mxu0
  %3779 = vdwg.mxu0
  %3780 = vmatprep.subr.bf16.mxu0 %v2532
  %3781 = vmatpush1.bf16.msra.mxu0 %v2531
  %3782 = vmatprep.subr.bf16.mxu0 %v2540
  %3783 = vmatpush1.bf16.msra.mxu0 %v2539
  %3784 = vmatprep.subr.bf16.mxu0 %v2548
  %3785 = vmatpush1.bf16.msra.mxu0 %v2547
  %3786 = vmatprep.subr.bf16.mxu0 %v2556
  %3787 = vmatpush1.bf16.msra.mxu0 %v2555
  %3788 = vmatprep.subr.bf16.mxu0 %v2564
  %3789 = vmatpush1.bf16.msra.mxu0 %v2563
  %3790 = vmatprep.subr.bf16.mxu0 %v2572
  %3791 = vmatpush1.bf16.msra.mxu0 %v2571
  %3792 = vmatprep.subr.bf16.mxu0 %v2580
  %3793 = vmatpush1.bf16.msra.mxu0 %v2579
  %3794 = vmatprep.subr.bf16.mxu0 %v2588
  %3795 = vmatpush1.bf16.msra.mxu0 %v2587
  %3796 = vmatprep.subr.bf16.mxu0 %v2596
  %3797 = vmatpush1.bf16.msra.mxu0 %v2595
  %3798 = vmatprep.subr.bf16.mxu0 %v2604
  %3799 = vmatpush1.bf16.msra.mxu0 %v2603
  %3800 = vmatprep.subr.bf16.mxu0 %v2612
  %3801 = vmatpush1.bf16.msra.mxu0 %v2611
  %3802 = vmatprep.subr.bf16.mxu0 %v2620
  %3803 = vmatpush1.bf16.msra.mxu0 %v2619
  %3804 = vmatprep.subr.bf16.mxu0 %v2628
  %3805 = vmatpush1.bf16.msra.mxu0 %v2627
  %3806 = vmatprep.subr.bf16.mxu0 %v2636
  %3807 = vmatpush1.bf16.msra.mxu0 %v2635
  %3808 = vmatprep.subr.bf16.mxu0 %v2644
  %3809 = vmatpush1.bf16.msra.mxu0 %v2643
  %3810 = vmatprep.subr.bf16.mxu0 %v2652
  %3811 = vmatpush1.bf16.msra.mxu0 %v2651
  %3812 = vmatprep.mubr.bf16.mxu0 %v596
  %3813 = vmatmul.mubr.bf16.gmra.mrb[0].mxu0 %v594
  %v3814 = vpop.f32.mrb[0].mxu0
  %v3815 = vadd.f32 %v3774, %v3814
  %v3816 = vpop.f32.mrb[0].mxu0
  %v3817 = vadd.f32 %v3776, %v3816
  %v3818 = vpop.f32.mrb[0].mxu0
  %v3819 = vpop.f32.mrb[0].mxu0
  %3820 = vdwg.mxu0
  %v3829 = vcombine.low %v3323, %v3325
  %v3830 = vcombine.low %v3487, %v3489
  %v3832 = vunpack.c.l.s4 1983009808
  %v3833 = vunpack.c.0.s8 %v3832
  %v3834 = vlaneseq
  %v3835 = vshrl.u32 %v3834, 7
  %v3836 = vsub.s32 %v3833, %v3835
  %v3837 = vrot.slane %v3829, %v3836
  %v3839 = vunpack.c.l.s4 1983009808
  %v3840 = vunpack.c.0.s8 %v3839
  %v3841 = vlaneseq
  %v3842 = vshrl.u32 %v3841, 7
  %v3843 = vsub.s32 %v3840, %v3842
  %v3844 = vrot.slane %v3830, %v3843
  %v3845 = vcombine.low %v3837, %v3844
  %v3846 = vcombine.low %v3651, %v3653
  %v3847 = vcombine.low %v3815, %v3817
  %v3849 = vunpack.c.l.s4 1983009808
  %v3850 = vunpack.c.0.s8 %v3849
  %v3851 = vlaneseq
  %v3852 = vshrl.u32 %v3851, 7
  %v3853 = vsub.s32 %v3850, %v3852
  %v3854 = vrot.slane %v3846, %v3853
  %v3856 = vunpack.c.l.s4 1983009808
  %v3857 = vunpack.c.0.s8 %v3856
  %v3858 = vlaneseq
  %v3859 = vshrl.u32 %v3858, 7
  %v3860 = vsub.s32 %v3857, %v3859
  %v3861 = vrot.slane %v3847, %v3860
  %v3862 = vcombine.low %v3854, %v3861
  %v3865 = vadd.f32 %v32, %v3845
  %v3866 = vadd.f32 %v33, %v3862
  %3867 = vst [vmem:[#allocation2] sm:$0xff] %v3865
  %3868 = vst [vmem:[#allocation2 + $0x8] sm:$0xff] %v3866
  // Predicated region
  $region34: #{projection_forward.1} parent=0 // pred_check
    %p3869 = pneg %p26
  $region35: #{projection_forward.1} parent=0 // pred_check_branch
    %3871 = sbr.rel (%p3869) target = $region37
  $region36: #{projection_forward.1} parent=0 // pred_region
    %v3872 = vld [vmem:[#allocation2] sm:$0xff]
    %v3873 = vld [vmem:[#allocation2 + $0x8] sm:$0xff]
    %v3876 = vcombine.high %v3872, %v3872
    %v3878 = vunpack.c.l.s4 1983009808
    %v3879 = vunpack.c.0.s8 %v3878
    %v3880 = vlaneseq
    %v3881 = vshrl.u32 %v3880, 7
    %v3882 = vsub.s32 %v3879, %v3881
    %v3883 = vrot.slane %v3872, %v3882
    %v3885 = vunpack.c.l.s4 1983009808
    %v3886 = vunpack.c.0.s8 %v3885
    %v3887 = vlaneseq
    %v3888 = vshrl.u32 %v3887, 7
    %v3889 = vsub.s32 %v3886, %v3888
    %v3890 = vrot.slane %v3876, %v3889
    %v3891 = vcombine.high %v3883, %v3883
    %v3892 = vcombine.high %v3890, %v3890
    %v3893 = vcombine.high %v3873, %v3873
    %v3895 = vunpack.c.l.s4 1983009808
    %v3896 = vunpack.c.0.s8 %v3895
    %v3897 = vlaneseq
    %v3898 = vshrl.u32 %v3897, 7
    %v3899 = vsub.s32 %v3896, %v3898
    %v3900 = vrot.slane %v3873, %v3899
    %v3902 = vunpack.c.l.s4 1983009808
    %v3903 = vunpack.c.0.s8 %v3902
    %v3904 = vlaneseq
    %v3905 = vshrl.u32 %v3904, 7
    %v3906 = vsub.s32 %v3903, %v3905
    %v3907 = vrot.slane %v3893, %v3906
    %v3908 = vcombine.high %v3900, %v3900
    %v3909 = vcombine.high %v3907, %v3907
    %vm3918 = vcmask 1041408
    %v3919 = vsel %vm3918, %v3883, 0.0
    %v3920 = vrot.slane %v3919, 4
    %v3921 = vadd.f32 %v3919, %v3920
    %v3922 = vrot.slane %v3921, 2
    %v3923 = vadd.f32 %v3921, %v3922
    %v3924 = vrot.slane %v3923, 1
    %v3925 = vadd.f32 %v3923, %v3924
    %v3926 = vsel %vm3918, %v3891, 0.0
    %v3927 = vrot.slane %v3926, 4
    %v3928 = vadd.f32 %v3926, %v3927
    %v3929 = vrot.slane %v3928, 2
    %v3930 = vadd.f32 %v3928, %v3929
    %v3931 = vrot.slane %v3930, 1
    %v3932 = vadd.f32 %v3930, %v3931
    %v3933 = vsel %vm3918, %v3890, 0.0
    %v3934 = vrot.slane %v3933, 4
    %v3935 = vadd.f32 %v3933, %v3934
    %v3936 = vrot.slane %v3935, 2
    %v3937 = vadd.f32 %v3935, %v3936
    %v3938 = vrot.slane %v3937, 1
    %v3939 = vadd.f32 %v3937, %v3938
    %v3940 = vsel %vm3918, %v3892, 0.0
    %v3941 = vrot.slane %v3940, 4
    %v3942 = vadd.f32 %v3940, %v3941
    %v3943 = vrot.slane %v3942, 2
    %v3944 = vadd.f32 %v3942, %v3943
    %v3945 = vrot.slane %v3944, 1
    %v3946 = vadd.f32 %v3944, %v3945
    %v3947 = vsel %vm3918, %v3900, 0.0
    %v3948 = vrot.slane %v3947, 4
    %v3949 = vadd.f32 %v3947, %v3948
    %v3950 = vrot.slane %v3949, 2
    %v3951 = vadd.f32 %v3949, %v3950
    %v3952 = vrot.slane %v3951, 1
    %v3953 = vadd.f32 %v3951, %v3952
    %v3954 = vsel %vm3918, %v3908, 0.0
    %v3955 = vrot.slane %v3954, 4
    %v3956 = vadd.f32 %v3954, %v3955
    %v3957 = vrot.slane %v3956, 2
    %v3958 = vadd.f32 %v3956, %v3957
    %v3959 = vrot.slane %v3958, 1
    %v3960 = vadd.f32 %v3958, %v3959
    %v3961 = vsel %vm3918, %v3907, 0.0
    %v3962 = vrot.slane %v3961, 4
    %v3963 = vadd.f32 %v3961, %v3962
    %v3964 = vrot.slane %v3963, 2
    %v3965 = vadd.f32 %v3963, %v3964
    %v3966 = vrot.slane %v3965, 1
    %v3967 = vadd.f32 %v3965, %v3966
    %v3968 = vsel %vm3918, %v3909, 0.0
    %v3969 = vrot.slane %v3968, 4
    %v3970 = vadd.f32 %v3968, %v3969
    %v3971 = vrot.slane %v3970, 2
    %v3972 = vadd.f32 %v3970, %v3971
    %v3973 = vrot.slane %v3972, 1
    %v3974 = vadd.f32 %v3972, %v3973
    %v3975 = vrcp.pop 2.0
    %v3976 = vmul.f32 %v3925, %v3975
    %v3977 = vmul.f32 %v3932, %v3975
    %v3978 = vmul.f32 %v3939, %v3975
    %v3979 = vmul.f32 %v3946, %v3975
    %v3980 = vmul.f32 %v3953, %v3975
    %v3981 = vmul.f32 %v3960, %v3975
    %v3982 = vmul.f32 %v3967, %v3975
    %v3983 = vmul.f32 %v3974, %v3975
    %v3992 = vcombine.low %v3976, %v3977
    %v3993 = vcombine.low %v3978, %v3979
    %v3995 = vunpack.c.l.s4 1983009808
    %v3996 = vunpack.c.0.s8 %v3995
    %v3997 = vlaneseq
    %v3998 = vshrl.u32 %v3997, 7
    %v3999 = vsub.s32 %v3996, %v3998
    %v4000 = vrot.slane %v3992, %v3999
    %v4002 = vunpack.c.l.s4 1983009808
    %v4003 = vunpack.c.0.s8 %v4002
    %v4004 = vlaneseq
    %v4005 = vshrl.u32 %v4004, 7
    %v4006 = vsub.s32 %v4003, %v4005
    %v4007 = vrot.slane %v3993, %v4006
    %v4008 = vcombine.low %v4000, %v4007
    %v4009 = vcombine.low %v3980, %v3981
    %v4010 = vcombine.low %v3982, %v3983
    %v4012 = vunpack.c.l.s4 1983009808
    %v4013 = vunpack.c.0.s8 %v4012
    %v4014 = vlaneseq
    %v4015 = vshrl.u32 %v4014, 7
    %v4016 = vsub.s32 %v4013, %v4015
    %v4017 = vrot.slane %v4009, %v4016
    %v4019 = vunpack.c.l.s4 1983009808
    %v4020 = vunpack.c.0.s8 %v4019
    %v4021 = vlaneseq
    %v4022 = vshrl.u32 %v4021, 7
    %v4023 = vsub.s32 %v4020, %v4022
    %v4024 = vrot.slane %v4010, %v4023
    %v4025 = vcombine.low %v4017, %v4024
    %v4028 = vsub.f32 %v3872, %v4008
    %v4029 = vsub.f32 %v3873, %v4025
    %v4030 = vmul.f32 %v4028, %v4028
    %v4031 = vmul.f32 %v4029, %v4029
    %v4034 = vcombine.high %v4030, %v4030
    %v4036 = vunpack.c.l.s4 1983009808
    %v4037 = vunpack.c.0.s8 %v4036
    %v4038 = vlaneseq
    %v4039 = vshrl.u32 %v4038, 7
    %v4040 = vsub.s32 %v4037, %v4039
    %v4041 = vrot.slane %v4030, %v4040
    %v4043 = vunpack.c.l.s4 1983009808
    %v4044 = vunpack.c.0.s8 %v4043
    %v4045 = vlaneseq
    %v4046 = vshrl.u32 %v4045, 7
    %v4047 = vsub.s32 %v4044, %v4046
    %v4048 = vrot.slane %v4034, %v4047
    %v4049 = vcombine.high %v4041, %v4041
    %v4050 = vcombine.high %v4048, %v4048
    %v4051 = vcombine.high %v4031, %v4031
    %v4053 = vunpack.c.l.s4 1983009808
    %v4054 = vunpack.c.0.s8 %v4053
    %v4055 = vlaneseq
    %v4056 = vshrl.u32 %v4055, 7
    %v4057 = vsub.s32 %v4054, %v4056
    %v4058 = vrot.slane %v4031, %v4057
    %v4060 = vunpack.c.l.s4 1983009808
    %v4061 = vunpack.c.0.s8 %v4060
    %v4062 = vlaneseq
    %v4063 = vshrl.u32 %v4062, 7
    %v4064 = vsub.s32 %v4061, %v4063
    %v4065 = vrot.slane %v4051, %v4064
    %v4066 = vcombine.high %v4058, %v4058
    %v4067 = vcombine.high %v4065, %v4065
    %v4076 = vsel %vm3918, %v4041, 0.0
    %v4077 = vrot.slane %v4076, 4
    %v4078 = vadd.f32 %v4076, %v4077
    %v4079 = vrot.slane %v4078, 2
    %v4080 = vadd.f32 %v4078, %v4079
    %v4081 = vrot.slane %v4080, 1
    %v4082 = vadd.f32 %v4080, %v4081
    %v4083 = vsel %vm3918, %v4049, 0.0
    %v4084 = vrot.slane %v4083, 4
    %v4085 = vadd.f32 %v4083, %v4084
    %v4086 = vrot.slane %v4085, 2
    %v4087 = vadd.f32 %v4085, %v4086
    %v4088 = vrot.slane %v4087, 1
    %v4089 = vadd.f32 %v4087, %v4088
    %v4090 = vsel %vm3918, %v4048, 0.0
    %v4091 = vrot.slane %v4090, 4
    %v4092 = vadd.f32 %v4090, %v4091
    %v4093 = vrot.slane %v4092, 2
    %v4094 = vadd.f32 %v4092, %v4093
    %v4095 = vrot.slane %v4094, 1
    %v4096 = vadd.f32 %v4094, %v4095
    %v4097 = vsel %vm3918, %v4050, 0.0
    %v4098 = vrot.slane %v4097, 4
    %v4099 = vadd.f32 %v4097, %v4098
    %v4100 = vrot.slane %v4099, 2
    %v4101 = vadd.f32 %v4099, %v4100
    %v4102 = vrot.slane %v4101, 1
    %v4103 = vadd.f32 %v4101, %v4102
    %v4104 = vsel %vm3918, %v4058, 0.0
    %v4105 = vrot.slane %v4104, 4
    %v4106 = vadd.f32 %v4104, %v4105
    %v4107 = vrot.slane %v4106, 2
    %v4108 = vadd.f32 %v4106, %v4107
    %v4109 = vrot.slane %v4108, 1
    %v4110 = vadd.f32 %v4108, %v4109
    %v4111 = vsel %vm3918, %v4066, 0.0
    %v4112 = vrot.slane %v4111, 4
    %v4113 = vadd.f32 %v4111, %v4112
    %v4114 = vrot.slane %v4113, 2
    %v4115 = vadd.f32 %v4113, %v4114
    %v4116 = vrot.slane %v4115, 1
    %v4117 = vadd.f32 %v4115, %v4116
    %v4118 = vsel %vm3918, %v4065, 0.0
    %v4119 = vrot.slane %v4118, 4
    %v4120 = vadd.f32 %v4118, %v4119
    %v4121 = vrot.slane %v4120, 2
    %v4122 = vadd.f32 %v4120, %v4121
    %v4123 = vrot.slane %v4122, 1
    %v4124 = vadd.f32 %v4122, %v4123
    %v4125 = vsel %vm3918, %v4067, 0.0
    %v4126 = vrot.slane %v4125, 4
    %v4127 = vadd.f32 %v4125, %v4126
    %v4128 = vrot.slane %v4127, 2
    %v4129 = vadd.f32 %v4127, %v4128
    %v4130 = vrot.slane %v4129, 1
    %v4131 = vadd.f32 %v4129, %v4130
    %v4132 = vmul.f32 %v4082, %v3975
    %v4133 = vmul.f32 %v4089, %v3975
    %v4134 = vmul.f32 %v4096, %v3975
    %v4135 = vmul.f32 %v4103, %v3975
    %v4136 = vmul.f32 %v4110, %v3975
    %v4137 = vmul.f32 %v4117, %v3975
    %v4138 = vmul.f32 %v4124, %v3975
    %v4139 = vmul.f32 %v4131, %v3975
    %v4140 = vadd.f32 %v4132, 1e-05
    %v4141 = vadd.f32 %v4133, 1e-05
    %v4142 = vadd.f32 %v4134, 1e-05
    %v4143 = vadd.f32 %v4135, 1e-05
    %v4144 = vadd.f32 %v4136, 1e-05
    %v4145 = vadd.f32 %v4137, 1e-05
    %v4146 = vadd.f32 %v4138, 1e-05
    %v4147 = vadd.f32 %v4139, 1e-05
    %v4148 = vrsqrt.pop %v4140
    %v4149 = vrsqrt.pop %v4141
    %v4150 = vrsqrt.pop %v4142
    %v4151 = vrsqrt.pop %v4143
    %v4152 = vrsqrt.pop %v4144
    %v4153 = vrsqrt.pop %v4145
    %v4154 = vrsqrt.pop %v4146
    %v4155 = vrsqrt.pop %v4147
    %v4164 = vcombine.low %v4148, %v4149
    %v4165 = vcombine.low %v4150, %v4151
    %v4167 = vunpack.c.l.s4 1983009808
    %v4168 = vunpack.c.0.s8 %v4167
    %v4169 = vlaneseq
    %v4170 = vshrl.u32 %v4169, 7
    %v4171 = vsub.s32 %v4168, %v4170
    %v4172 = vrot.slane %v4164, %v4171
    %v4174 = vunpack.c.l.s4 1983009808
    %v4175 = vunpack.c.0.s8 %v4174
    %v4176 = vlaneseq
    %v4177 = vshrl.u32 %v4176, 7
    %v4178 = vsub.s32 %v4175, %v4177
    %v4179 = vrot.slane %v4165, %v4178
    %v4180 = vcombine.low %v4172, %v4179
    %v4181 = vcombine.low %v4152, %v4153
    %v4182 = vcombine.low %v4154, %v4155
    %v4184 = vunpack.c.l.s4 1983009808
    %v4185 = vunpack.c.0.s8 %v4184
    %v4186 = vlaneseq
    %v4187 = vshrl.u32 %v4186, 7
    %v4188 = vsub.s32 %v4185, %v4187
    %v4189 = vrot.slane %v4181, %v4188
    %v4191 = vunpack.c.l.s4 1983009808
    %v4192 = vunpack.c.0.s8 %v4191
    %v4193 = vlaneseq
    %v4194 = vshrl.u32 %v4193, 7
    %v4195 = vsub.s32 %v4192, %v4194
    %v4196 = vrot.slane %v4182, %v4195
    %v4197 = vcombine.low %v4189, %v4196
    %v4200 = vmul.f32 %v4028, %v4180
    %v4201 = vmul.f32 %v4029, %v4197
    %v4202 = vld [vmem:[%s2] sm:$0xff]
    %v4204 = vlaneseq
    %v4205 = vshrl.u32 %v4204, 7
    %v4206 = vsub.s32 0, %v4205
    %v4207 = vrot.slane %v4202, %v4206
    %v4208 = vlaneseq
    %v4209 = vshrl.u32 %v4208, 7
    %v4210 = vsub.s32 1, %v4209
    %v4211 = vrot.slane %v4202, %v4210
    %v4212 = vlaneseq
    %v4213 = vshrl.u32 %v4212, 7
    %v4214 = vsub.s32 2, %v4213
    %v4215 = vrot.slane %v4202, %v4214
    %v4216 = vlaneseq
    %v4217 = vshrl.u32 %v4216, 7
    %v4218 = vsub.s32 3, %v4217
    %v4219 = vrot.slane %v4202, %v4218
    %v4220 = vlaneseq
    %v4221 = vshrl.u32 %v4220, 7
    %v4222 = vsub.s32 4, %v4221
    %v4223 = vrot.slane %v4202, %v4222
    %v4224 = vlaneseq
    %v4225 = vshrl.u32 %v4224, 7
    %v4226 = vsub.s32 5, %v4225
    %v4227 = vrot.slane %v4202, %v4226
    %v4228 = vlaneseq
    %v4229 = vshrl.u32 %v4228, 7
    %v4230 = vsub.s32 6, %v4229
    %v4231 = vrot.slane %v4202, %v4230
    %v4232 = vlaneseq
    %v4233 = vshrl.u32 %v4232, 7
    %v4234 = vsub.s32 7, %v4233
    %v4235 = vrot.slane %v4202, %v4234
    %v4236 = vcombine.low %v4207, %v4211
    %v4237 = vcombine.low %v4215, %v4219
    %v4239 = vunpack.c.l.s4 1983009808
    %v4240 = vunpack.c.0.s8 %v4239
    %v4241 = vlaneseq
    %v4242 = vshrl.u32 %v4241, 7
    %v4243 = vsub.s32 %v4240, %v4242
    %v4244 = vrot.slane %v4236, %v4243
    %v4246 = vunpack.c.l.s4 1983009808
    %v4247 = vunpack.c.0.s8 %v4246
    %v4248 = vlaneseq
    %v4249 = vshrl.u32 %v4248, 7
    %v4250 = vsub.s32 %v4247, %v4249
    %v4251 = vrot.slane %v4237, %v4250
    %v4252 = vcombine.low %v4244, %v4251
    %v4253 = vcombine.low %v4223, %v4227
    %v4254 = vcombine.low %v4231, %v4235
    %v4256 = vunpack.c.l.s4 1983009808
    %v4257 = vunpack.c.0.s8 %v4256
    %v4258 = vlaneseq
    %v4259 = vshrl.u32 %v4258, 7
    %v4260 = vsub.s32 %v4257, %v4259
    %v4261 = vrot.slane %v4253, %v4260
    %v4263 = vunpack.c.l.s4 1983009808
    %v4264 = vunpack.c.0.s8 %v4263
    %v4265 = vlaneseq
    %v4266 = vshrl.u32 %v4265, 7
    %v4267 = vsub.s32 %v4264, %v4266
    %v4268 = vrot.slane %v4254, %v4267
    %v4269 = vcombine.low %v4261, %v4268
    %v4272 = vmul.f32 %v4200, %v4252
    %v4273 = vmul.f32 %v4201, %v4269
    %v4274 = vld [vmem:[%s3] sm:$0xff]
    %v4276 = vlaneseq
    %v4277 = vshrl.u32 %v4276, 7
    %v4278 = vsub.s32 0, %v4277
    %v4279 = vrot.slane %v4274, %v4278
    %v4280 = vlaneseq
    %v4281 = vshrl.u32 %v4280, 7
    %v4282 = vsub.s32 1, %v4281
    %v4283 = vrot.slane %v4274, %v4282
    %v4284 = vlaneseq
    %v4285 = vshrl.u32 %v4284, 7
    %v4286 = vsub.s32 2, %v4285
    %v4287 = vrot.slane %v4274, %v4286
    %v4288 = vlaneseq
    %v4289 = vshrl.u32 %v4288, 7
    %v4290 = vsub.s32 3, %v4289
    %v4291 = vrot.slane %v4274, %v4290
    %v4292 = vlaneseq
    %v4293 = vshrl.u32 %v4292, 7
    %v4294 = vsub.s32 4, %v4293
    %v4295 = vrot.slane %v4274, %v4294
    %v4296 = vlaneseq
    %v4297 = vshrl.u32 %v4296, 7
    %v4298 = vsub.s32 5, %v4297
    %v4299 = vrot.slane %v4274, %v4298
    %v4300 = vlaneseq
    %v4301 = vshrl.u32 %v4300, 7
    %v4302 = vsub.s32 6, %v4301
    %v4303 = vrot.slane %v4274, %v4302
    %v4304 = vlaneseq
    %v4305 = vshrl.u32 %v4304, 7
    %v4306 = vsub.s32 7, %v4305
    %v4307 = vrot.slane %v4274, %v4306
    %v4308 = vcombine.low %v4279, %v4283
    %v4309 = vcombine.low %v4287, %v4291
    %v4311 = vunpack.c.l.s4 1983009808
    %v4312 = vunpack.c.0.s8 %v4311
    %v4313 = vlaneseq
    %v4314 = vshrl.u32 %v4313, 7
    %v4315 = vsub.s32 %v4312, %v4314
    %v4316 = vrot.slane %v4308, %v4315
    %v4318 = vunpack.c.l.s4 1983009808
    %v4319 = vunpack.c.0.s8 %v4318
    %v4320 = vlaneseq
    %v4321 = vshrl.u32 %v4320, 7
    %v4322 = vsub.s32 %v4319, %v4321
    %v4323 = vrot.slane %v4309, %v4322
    %v4324 = vcombine.low %v4316, %v4323
    %v4325 = vcombine.low %v4295, %v4299
    %v4326 = vcombine.low %v4303, %v4307
    %v4328 = vunpack.c.l.s4 1983009808
    %v4329 = vunpack.c.0.s8 %v4328
    %v4330 = vlaneseq
    %v4331 = vshrl.u32 %v4330, 7
    %v4332 = vsub.s32 %v4329, %v4331
    %v4333 = vrot.slane %v4325, %v4332
    %v4335 = vunpack.c.l.s4 1983009808
    %v4336 = vunpack.c.0.s8 %v4335
    %v4337 = vlaneseq
    %v4338 = vshrl.u32 %v4337, 7
    %v4339 = vsub.s32 %v4336, %v4338
    %v4340 = vrot.slane %v4326, %v4339
    %v4341 = vcombine.low %v4333, %v4340
    %v4344 = vadd.f32 %v4272, %v4324
    %v4345 = vadd.f32 %v4273, %v4341
    %v4346 = vmul.f32 %v4344, 0.5
    %v4347 = vmul.f32 %v4345, 0.5
    %v4348 = vmul.f32 %v4344, 0.70710677
    %v4349 = vmul.f32 %v4345, 0.70710677
    %v4350 = verf.f32.pop %v4348
    %v4351 = verf.f32.pop %v4349
    %v4352 = vadd.f32 %v4350, 1.0
    %v4353 = vadd.f32 %v4351, 1.0
    %v4354 = vmul.f32 %v4346, %v4352
    %v4355 = vmul.f32 %v4347, %v4353
    %v4357 = vlaneseq
    %v4358 = vshrl.u32 %v4357, 7
    %v4359 = vsub.s32 0, %v4358
    %v4360 = vrot.slane %v4354, %v4359
    %v4361 = vlaneseq
    %v4362 = vshrl.u32 %v4361, 7
    %v4363 = vsub.s32 2, %v4362
    %v4364 = vrot.slane %v4354, %v4363
    %v4367 = vlaneseq
    %v4368 = vshrl.u32 %v4367, 7
    %v4369 = vsub.s32 1, %v4368
    %v4370 = vrot.slane %v4354, %v4369
    %v4371 = vlaneseq
    %v4372 = vshrl.u32 %v4371, 7
    %v4373 = vsub.s32 3, %v4372
    %v4374 = vrot.slane %v4354, %v4373
    %v4377 = vlaneseq
    %v4378 = vshrl.u32 %v4377, 7
    %v4379 = vsub.s32 4, %v4378
    %v4380 = vrot.slane %v4354, %v4379
    %v4381 = vlaneseq
    %v4382 = vshrl.u32 %v4381, 7
    %v4383 = vsub.s32 6, %v4382
    %v4384 = vrot.slane %v4354, %v4383
    %v4385 = vlaneseq
    %v4386 = vshrl.u32 %v4385, 7
    %v4387 = vsub.s32 5, %v4386
    %v4388 = vrot.slane %v4354, %v4387
    %v4389 = vlaneseq
    %v4390 = vshrl.u32 %v4389, 7
    %v4391 = vsub.s32 7, %v4390
    %v4392 = vrot.slane %v4354, %v4391
    %v4394 = vlaneseq
    %v4395 = vshrl.u32 %v4394, 7
    %v4396 = vsub.s32 0, %v4395
    %v4397 = vrot.slane %v4355, %v4396
    %v4398 = vlaneseq
    %v4399 = vshrl.u32 %v4398, 7
    %v4400 = vsub.s32 2, %v4399
    %v4401 = vrot.slane %v4355, %v4400
    %v4402 = vlaneseq
    %v4403 = vshrl.u32 %v4402, 7
    %v4404 = vsub.s32 1, %v4403
    %v4405 = vrot.slane %v4355, %v4404
    %v4406 = vlaneseq
    %v4407 = vshrl.u32 %v4406, 7
    %v4408 = vsub.s32 3, %v4407
    %v4409 = vrot.slane %v4355, %v4408
    %v4410 = vlaneseq
    %v4411 = vshrl.u32 %v4410, 7
    %v4412 = vsub.s32 4, %v4411
    %v4413 = vrot.slane %v4355, %v4412
    %v4414 = vlaneseq
    %v4415 = vshrl.u32 %v4414, 7
    %v4416 = vsub.s32 6, %v4415
    %v4417 = vrot.slane %v4355, %v4416
    %v4418 = vlaneseq
    %v4419 = vshrl.u32 %v4418, 7
    %v4420 = vsub.s32 5, %v4419
    %v4421 = vrot.slane %v4355, %v4420
    %v4422 = vlaneseq
    %v4423 = vshrl.u32 %v4422, 7
    %v4424 = vsub.s32 7, %v4423
    %v4425 = vrot.slane %v4355, %v4424
    %v4426 = vrot.slane %v4380, 7
    %v4427 = vrot.slane %v4384, 7
    %v4428 = vrot.slane %v4388, 7
    %v4429 = vrot.slane %v4392, 7
    %v4434 = vrot.slane %v4397, 6
    %v4435 = vrot.slane %v4401, 6
    %v4436 = vrot.slane %v4405, 6
    %v4437 = vrot.slane %v4409, 6
    %v4442 = vrot.slane %v4413, 5
    %v4443 = vrot.slane %v4417, 5
    %v4444 = vrot.slane %v4421, 5
    %v4445 = vrot.slane %v4425, 5
    %vm4450 = vcmask 1040384
    %v4451 = vsel %vm4450, %v4360, %v4426
    %v4452 = vsel %vm4450, %v4364, %v4427
    %v4453 = vsel %vm4450, %v4370, %v4428
    %v4454 = vsel %vm4450, %v4374, %v4429
    %v4455 = vsel %vm3918, %v4451, %v4434
    %v4456 = vsel %vm3918, %v4452, %v4435
    %v4457 = vsel %vm3918, %v4453, %v4436
    %v4458 = vsel %vm3918, %v4454, %v4437
    %vm4459 = vcmask 1042432
    %v4460 = vsel %vm4459, %v4455, %v4442
    %v4461 = vsel %vm4459, %v4456, %v4443
    %v4462 = vsel %vm4459, %v4457, %v4444
    %v4463 = vsel %vm4459, %v4458, %v4445
    %v4464 = vlaneseq
    %v4465 = vand.u32 %v4464, 127
    %v4466 = vadd.s32 %v4465, 128
    %v4467 = vadd.s32 %v4465, 256
    %v4468 = vadd.s32 %v4465, 384
    %v4469 = vshra.s32 %v4465, 4
    %v4470 = vshra.s32 %v4466, 4
    %v4471 = vshra.s32 %v4467, 4
    %v4472 = vshra.s32 %v4468, 4
    %v4473 = vand.u32 %v4469, 15
    %v4474 = vand.u32 %v4470, 15
    %v4475 = vand.u32 %v4471, 15
    %v4476 = vand.u32 %v4472, 15
    %v4477 = vand.u32 %v4465, 15
    %v4478 = vand.u32 %v4466, 15
    %v4479 = vand.u32 %v4467, 15
    %v4480 = vand.u32 %v4468, 15
    %v4481 = vadd.s32 %v4473, 4294967294
    %v4482 = vadd.s32 %v4474, 4294967294
    %v4483 = vadd.s32 %v4475, 4294967294
    %v4484 = vadd.s32 %v4476, 4294967294
    %vm4485 = vcmp.ge.s32.totalorder %v4481, 0
    %vm4486 = vcmp.ge.s32.totalorder %v4482, 0
    %vm4487 = vcmp.ge.s32.totalorder %v4483, 0
    %vm4488 = vcmp.ge.s32.totalorder %v4484, 0
    %vm4489 = vcmp.lt.s32.totalorder %v4481, 16
    %vm4490 = vcmp.lt.s32.totalorder %v4482, 16
    %vm4491 = vcmp.lt.s32.totalorder %v4483, 16
    %vm4492 = vcmp.lt.s32.totalorder %v4484, 16
    %vm4493 = vmand %vm4485, %vm4489
    %vm4494 = vmand %vm4486, %vm4490
    %vm4495 = vmand %vm4487, %vm4491
    %vm4496 = vmand %vm4488, %vm4492
    %v4497 = vadd.s32 %v4473, 4294967295
    %v4498 = vadd.s32 %v4474, 4294967295
    %v4499 = vadd.s32 %v4475, 4294967295
    %v4500 = vadd.s32 %v4476, 4294967295
    %vm4501 = vcmp.ge.s32.totalorder %v4497, 0
    %vm4502 = vcmp.ge.s32.totalorder %v4498, 0
    %vm4503 = vcmp.ge.s32.totalorder %v4499, 0
    %vm4504 = vcmp.ge.s32.totalorder %v4500, 0
    %vm4505 = vcmp.lt.s32.totalorder %v4497, 16
    %vm4506 = vcmp.lt.s32.totalorder %v4498, 16
    %vm4507 = vcmp.lt.s32.totalorder %v4499, 16
    %vm4508 = vcmp.lt.s32.totalorder %v4500, 16
    %vm4509 = vmand %vm4501, %vm4505
    %vm4510 = vmand %vm4502, %vm4506
    %vm4511 = vmand %vm4503, %vm4507
    %vm4512 = vmand %vm4504, %vm4508
    %vm4513 = vcmp.ge.s32.totalorder %v4473, 0
    %vm4514 = vcmp.ge.s32.totalorder %v4474, 0
    %vm4515 = vcmp.ge.s32.totalorder %v4475, 0
    %vm4516 = vcmp.ge.s32.totalorder %v4476, 0
    %vm4517 = vcmp.lt.s32.totalorder %v4473, 16
    %vm4518 = vcmp.lt.s32.totalorder %v4474, 16
    %vm4519 = vcmp.lt.s32.totalorder %v4475, 16
    %vm4520 = vcmp.lt.s32.totalorder %v4476, 16
    %vm4521 = vmand %vm4513, %vm4517
    %vm4522 = vmand %vm4514, %vm4518
    %vm4523 = vmand %vm4515, %vm4519
    %vm4524 = vmand %vm4516, %vm4520
    %v4525 = vadd.s32 %v4473, 1
    %v4526 = vadd.s32 %v4474, 1
    %v4527 = vadd.s32 %v4475, 1
    %v4528 = vadd.s32 %v4476, 1
    %vm4529 = vcmp.ge.s32.totalorder %v4525, 0
    %vm4530 = vcmp.ge.s32.totalorder %v4526, 0
    %vm4531 = vcmp.ge.s32.totalorder %v4527, 0
    %vm4532 = vcmp.ge.s32.totalorder %v4528, 0
    %vm4533 = vcmp.lt.s32.totalorder %v4525, 16
    %vm4534 = vcmp.lt.s32.totalorder %v4526, 16
    %vm4535 = vcmp.lt.s32.totalorder %v4527, 16
    %vm4536 = vcmp.lt.s32.totalorder %v4528, 16
    %vm4537 = vmand %vm4529, %vm4533
    %vm4538 = vmand %vm4530, %vm4534
    %vm4539 = vmand %vm4531, %vm4535
    %vm4540 = vmand %vm4532, %vm4536
    %v4541 = vadd.s32 %v4473, 2
    %v4542 = vadd.s32 %v4474, 2
    %v4543 = vadd.s32 %v4475, 2
    %v4544 = vadd.s32 %v4476, 2
    %vm4545 = vcmp.ge.s32.totalorder %v4541, 0
    %vm4546 = vcmp.ge.s32.totalorder %v4542, 0
    %vm4547 = vcmp.ge.s32.totalorder %v4543, 0
    %vm4548 = vcmp.ge.s32.totalorder %v4544, 0
    %vm4549 = vcmp.lt.s32.totalorder %v4541, 16
    %vm4550 = vcmp.lt.s32.totalorder %v4542, 16
    %vm4551 = vcmp.lt.s32.totalorder %v4543, 16
    %vm4552 = vcmp.lt.s32.totalorder %v4544, 16
    %vm4553 = vmand %vm4545, %vm4549
    %vm4554 = vmand %vm4546, %vm4550
    %vm4555 = vmand %vm4547, %vm4551
    %vm4556 = vmand %vm4548, %vm4552
    %v4557 = vadd.s32 %v4477, 4294967294
    %v4558 = vadd.s32 %v4478, 4294967294
    %v4559 = vadd.s32 %v4479, 4294967294
    %v4560 = vadd.s32 %v4480, 4294967294
    %vm4561 = vcmp.ge.s32.totalorder %v4557, 0
    %vm4562 = vcmp.ge.s32.totalorder %v4558, 0
    %vm4563 = vcmp.ge.s32.totalorder %v4559, 0
    %vm4564 = vcmp.ge.s32.totalorder %v4560, 0
    %vm4565 = vcmp.lt.s32.totalorder %v4557, 16
    %vm4566 = vcmp.lt.s32.totalorder %v4558, 16
    %vm4567 = vcmp.lt.s32.totalorder %v4559, 16
    %vm4568 = vcmp.lt.s32.totalorder %v4560, 16
    %vm4569 = vmand %vm4561, %vm4565
    %vm4570 = vmand %vm4562, %vm4566
    %vm4571 = vmand %vm4563, %vm4567
    %vm4572 = vmand %vm4564, %vm4568
    %v4573 = vadd.s32 %v4477, 4294967295
    %v4574 = vadd.s32 %v4478, 4294967295
    %v4575 = vadd.s32 %v4479, 4294967295
    %v4576 = vadd.s32 %v4480, 4294967295
    %vm4577 = vcmp.ge.s32.totalorder %v4573, 0
    %vm4578 = vcmp.ge.s32.totalorder %v4574, 0
    %vm4579 = vcmp.ge.s32.totalorder %v4575, 0
    %vm4580 = vcmp.ge.s32.totalorder %v4576, 0
    %vm4581 = vcmp.lt.s32.totalorder %v4573, 16
    %vm4582 = vcmp.lt.s32.totalorder %v4574, 16
    %vm4583 = vcmp.lt.s32.totalorder %v4575, 16
    %vm4584 = vcmp.lt.s32.totalorder %v4576, 16
    %vm4585 = vmand %vm4577, %vm4581
    %vm4586 = vmand %vm4578, %vm4582
    %vm4587 = vmand %vm4579, %vm4583
    %vm4588 = vmand %vm4580, %vm4584
    %vm4589 = vcmp.ge.s32.totalorder %v4477, 0
    %vm4590 = vcmp.ge.s32.totalorder %v4478, 0
    %vm4591 = vcmp.ge.s32.totalorder %v4479, 0
    %vm4592 = vcmp.ge.s32.totalorder %v4480, 0
    %vm4593 = vcmp.lt.s32.totalorder %v4477, 16
    %vm4594 = vcmp.lt.s32.totalorder %v4478, 16
    %vm4595 = vcmp.lt.s32.totalorder %v4479, 16
    %vm4596 = vcmp.lt.s32.totalorder %v4480, 16
    %vm4597 = vmand %vm4589, %vm4593
    %vm4598 = vmand %vm4590, %vm4594
    %vm4599 = vmand %vm4591, %vm4595
    %vm4600 = vmand %vm4592, %vm4596
    %v4601 = vadd.s32 %v4477, 1
    %v4602 = vadd.s32 %v4478, 1
    %v4603 = vadd.s32 %v4479, 1
    %v4604 = vadd.s32 %v4480, 1
    %vm4605 = vcmp.ge.s32.totalorder %v4601, 0
    %vm4606 = vcmp.ge.s32.totalorder %v4602, 0
    %vm4607 = vcmp.ge.s32.totalorder %v4603, 0
    %vm4608 = vcmp.ge.s32.totalorder %v4604, 0
    %vm4609 = vcmp.lt.s32.totalorder %v4601, 16
    %vm4610 = vcmp.lt.s32.totalorder %v4602, 16
    %vm4611 = vcmp.lt.s32.totalorder %v4603, 16
    %vm4612 = vcmp.lt.s32.totalorder %v4604, 16
    %vm4613 = vmand %vm4605, %vm4609
    %vm4614 = vmand %vm4606, %vm4610
    %vm4615 = vmand %vm4607, %vm4611
    %vm4616 = vmand %vm4608, %vm4612
    %v4617 = vadd.s32 %v4477, 2
    %v4618 = vadd.s32 %v4478, 2
    %v4619 = vadd.s32 %v4479, 2
    %v4620 = vadd.s32 %v4480, 2
    %vm4621 = vcmp.ge.s32.totalorder %v4617, 0
    %vm4622 = vcmp.ge.s32.totalorder %v4618, 0
    %vm4623 = vcmp.ge.s32.totalorder %v4619, 0
    %vm4624 = vcmp.ge.s32.totalorder %v4620, 0
    %vm4625 = vcmp.lt.s32.totalorder %v4617, 16
    %vm4626 = vcmp.lt.s32.totalorder %v4618, 16
    %vm4627 = vcmp.lt.s32.totalorder %v4619, 16
    %vm4628 = vcmp.lt.s32.totalorder %v4620, 16
    %vm4629 = vmand %vm4621, %vm4625
    %vm4630 = vmand %vm4622, %vm4626
    %vm4631 = vmand %vm4623, %vm4627
    %vm4632 = vmand %vm4624, %vm4628
    %4633 = vrot.lane.b32.xlu0 %v4460, 34
    %v4634 = vpop.permute.xlu0 %4633
    %4635 = vrot.lane.b32.xlu0 %v4461, 34
    %v4636 = vpop.permute.xlu0 %4635
    %4637 = vrot.lane.b32.xlu0 %v4462, 34
    %v4638 = vpop.permute.xlu0 %4637
    %4639 = vrot.lane.b32.xlu0 %v4463, 34
    %v4640 = vpop.permute.xlu0 %4639
    %vm4641 = vcmp.lt.s32.totalorder %v4465, 34
    %v4642 = vsel %vm4641, %v4638, %v4640
    %v4643 = vsel %vm4641, %v4636, %v4638
    %v4644 = vsel %vm4641, %v4634, %v4636
    %v4645 = vsel %vm4641, %v4640, %v4634
    %vm4646 = vmand %vm4493, %vm4569
    %vm4647 = vmand %vm4494, %vm4570
    %vm4648 = vmand %vm4495, %vm4571
    %vm4649 = vmand %vm4496, %vm4572
    %v4650 = vsel %vm4646, %v4645, 0.0
    %v4651 = vsel %vm4647, %v4644, 0.0
    %v4652 = vsel %vm4648, %v4643, 0.0
    %v4653 = vsel %vm4649, %v4642, 0.0
    %4654 = vrot.lane.b32.xlu0 %v4460, 33
    %v4655 = vpop.permute.xlu0 %4654
    %4656 = vrot.lane.b32.xlu0 %v4461, 33
    %v4657 = vpop.permute.xlu0 %4656
    %4658 = vrot.lane.b32.xlu0 %v4462, 33
    %v4659 = vpop.permute.xlu0 %4658
    %4660 = vrot.lane.b32.xlu0 %v4463, 33
    %v4661 = vpop.permute.xlu0 %4660
    %vm4662 = vcmp.lt.s32.totalorder %v4465, 33
    %v4663 = vsel %vm4662, %v4659, %v4661
    %v4664 = vsel %vm4662, %v4657, %v4659
    %v4665 = vsel %vm4662, %v4655, %v4657
    %v4666 = vsel %vm4662, %v4661, %v4655
    %vm4667 = vmand %vm4493, %vm4585
    %vm4668 = vmand %vm4494, %vm4586
    %vm4669 = vmand %vm4495, %vm4587
    %vm4670 = vmand %vm4496, %vm4588
    %v4671 = vsel %vm4667, %v4666, 0.0
    %v4672 = vsel %vm4668, %v4665, 0.0
    %v4673 = vsel %vm4669, %v4664, 0.0
    %v4674 = vsel %vm4670, %v4663, 0.0
    %v4679 = vrot.slane %v4671, 4
    %v4680 = vrot.slane %v4672, 4
    %v4681 = vrot.slane %v4673, 4
    %v4682 = vrot.slane %v4674, 4
    %vm4687 = vcmask 1043456
    %v4688 = vsel %vm4687, %v4650, %v4679
    %v4689 = vsel %vm4687, %v4651, %v4680
    %v4690 = vsel %vm4687, %v4652, %v4681
    %v4691 = vsel %vm4687, %v4653, %v4682
    %4692 = vst [vmem:[#allocation3] sm:$0xff] %v4688
    %4693 = vst [vmem:[#allocation3 + $0x8] sm:$0xff] %v4689
    %4694 = vst [vmem:[#allocation3 + $0x10] sm:$0xff] %v4690
    %4695 = vst [vmem:[#allocation3 + $0x18] sm:$0xff] %v4691
    %4696 = vrot.lane.b32.xlu0 %v4460, 32
    %v4697 = vpop.permute.xlu0 %4696
    %4698 = vrot.lane.b32.xlu0 %v4461, 32
    %v4699 = vpop.permute.xlu0 %4698
    %4700 = vrot.lane.b32.xlu0 %v4462, 32
    %v4701 = vpop.permute.xlu0 %4700
    %4702 = vrot.lane.b32.xlu0 %v4463, 32
    %v4703 = vpop.permute.xlu0 %4702
    %vm4704 = vcmp.lt.s32.totalorder %v4465, 32
    %v4705 = vsel %vm4704, %v4701, %v4703
    %v4706 = vsel %vm4704, %v4699, %v4701
    %v4707 = vsel %vm4704, %v4697, %v4699
    %v4708 = vsel %vm4704, %v4703, %v4697
    %vm4709 = vmand %vm4493, %vm4597
    %vm4710 = vmand %vm4494, %vm4598
    %vm4711 = vmand %vm4495, %vm4599
    %vm4712 = vmand %vm4496, %vm4600
    %v4713 = vsel %vm4709, %v4708, 0.0
    %v4714 = vsel %vm4710, %v4707, 0.0
    %v4715 = vsel %vm4711, %v4706, 0.0
    %v4716 = vsel %vm4712, %v4705, 0.0
    %4717 = vrot.lane.b32.xlu0 %v4460, 31
    %v4718 = vpop.permute.xlu0 %4717
    %4719 = vrot.lane.b32.xlu0 %v4461, 31
    %v4720 = vpop.permute.xlu0 %4719
    %4721 = vrot.lane.b32.xlu0 %v4462, 31
    %v4722 = vpop.permute.xlu0 %4721
    %4723 = vrot.lane.b32.xlu0 %v4463, 31
    %v4724 = vpop.permute.xlu0 %4723
    %vm4725 = vcmp.lt.s32.totalorder %v4465, 31
    %v4726 = vsel %vm4725, %v4722, %v4724
    %v4727 = vsel %vm4725, %v4720, %v4722
    %v4728 = vsel %vm4725, %v4718, %v4720
    %v4729 = vsel %vm4725, %v4724, %v4718
    %vm4730 = vmand %vm4493, %vm4613
    %vm4731 = vmand %vm4494, %vm4614
    %vm4732 = vmand %vm4495, %vm4615
    %vm4733 = vmand %vm4496, %vm4616
    %v4734 = vsel %vm4730, %v4729, 0.0
    %v4735 = vsel %vm4731, %v4728, 0.0
    %v4736 = vsel %vm4732, %v4727, 0.0
    %v4737 = vsel %vm4733, %v4726, 0.0
    %v4742 = vrot.slane %v4734, 4
    %v4743 = vrot.slane %v4735, 4
    %v4744 = vrot.slane %v4736, 4
    %v4745 = vrot.slane %v4737, 4
    %v4750 = vsel %vm4687, %v4713, %v4742
    %v4751 = vsel %vm4687, %v4714, %v4743
    %v4752 = vsel %vm4687, %v4715, %v4744
    %v4753 = vsel %vm4687, %v4716, %v4745
    %4754 = vst [vmem:[#allocation3 + $0x20] sm:$0xff] %v4750
    %4755 = vst [vmem:[#allocation3 + $0x28] sm:$0xff] %v4751
    %4756 = vst [vmem:[#allocation3 + $0x30] sm:$0xff] %v4752
    %4757 = vst [vmem:[#allocation3 + $0x38] sm:$0xff] %v4753
    %4758 = vrot.lane.b32.xlu0 %v4460, 30
    %v4759 = vpop.permute.xlu0 %4758
    %4760 = vrot.lane.b32.xlu0 %v4461, 30
    %v4761 = vpop.permute.xlu0 %4760
    %4762 = vrot.lane.b32.xlu0 %v4462, 30
    %v4763 = vpop.permute.xlu0 %4762
    %4764 = vrot.lane.b32.xlu0 %v4463, 30
    %v4765 = vpop.permute.xlu0 %4764
    %vm4766 = vcmp.lt.s32.totalorder %v4465, 30
    %v4767 = vsel %vm4766, %v4763, %v4765
    %v4768 = vsel %vm4766, %v4761, %v4763
    %v4769 = vsel %vm4766, %v4759, %v4761
    %v4770 = vsel %vm4766, %v4765, %v4759
    %vm4771 = vmand %vm4493, %vm4629
    %vm4772 = vmand %vm4494, %vm4630
    %vm4773 = vmand %vm4495, %vm4631
    %vm4774 = vmand %vm4496, %vm4632
    %v4775 = vsel %vm4771, %v4770, 0.0
    %v4776 = vsel %vm4772, %v4769, 0.0
    %v4777 = vsel %vm4773, %v4768, 0.0
    %v4778 = vsel %vm4774, %v4767, 0.0
    %4779 = vrot.lane.b32.xlu0 %v4460, 18
    %v4780 = vpop.permute.xlu0 %4779
    %4781 = vrot.lane.b32.xlu0 %v4461, 18
    %v4782 = vpop.permute.xlu0 %4781
    %4783 = vrot.lane.b32.xlu0 %v4462, 18
    %v4784 = vpop.permute.xlu0 %4783
    %4785 = vrot.lane.b32.xlu0 %v4463, 18
    %v4786 = vpop.permute.xlu0 %4785
    %vm4787 = vcmp.lt.s32.totalorder %v4465, 18
    %v4788 = vsel %vm4787, %v4784, %v4786
    %v4789 = vsel %vm4787, %v4782, %v4784
    %v4790 = vsel %vm4787, %v4780, %v4782
    %v4791 = vsel %vm4787, %v4786, %v4780
    %vm4792 = vmand %vm4509, %vm4569
    %vm4793 = vmand %vm4510, %vm4570
    %vm4794 = vmand %vm4511, %vm4571
    %vm4795 = vmand %vm4512, %vm4572
    %v4796 = vsel %vm4792, %v4791, 0.0
    %v4797 = vsel %vm4793, %v4790, 0.0
    %v4798 = vsel %vm4794, %v4789, 0.0
    %v4799 = vsel %vm4795, %v4788, 0.0
    %v4804 = vrot.slane %v4796, 4
    %v4805 = vrot.slane %v4797, 4
    %v4806 = vrot.slane %v4798, 4
    %v4807 = vrot.slane %v4799, 4
    %v4812 = vsel %vm4687, %v4775, %v4804
    %v4813 = vsel %vm4687, %v4776, %v4805
    %v4814 = vsel %vm4687, %v4777, %v4806
    %v4815 = vsel %vm4687, %v4778, %v4807
    %4816 = vst [vmem:[#allocation3 + $0x40] sm:$0xff] %v4812
    %4817 = vst [vmem:[#allocation3 + $0x48] sm:$0xff] %v4813
    %4818 = vst [vmem:[#allocation3 + $0x50] sm:$0xff] %v4814
    %4819 = vst [vmem:[#allocation3 + $0x58] sm:$0xff] %v4815
    %4820 = vrot.lane.b32.xlu0 %v4460, 17
    %v4821 = vpop.permute.xlu0 %4820
    %4822 = vrot.lane.b32.xlu0 %v4461, 17
    %v4823 = vpop.permute.xlu0 %4822
    %4824 = vrot.lane.b32.xlu0 %v4462, 17
    %v4825 = vpop.permute.xlu0 %4824
    %4826 = vrot.lane.b32.xlu0 %v4463, 17
    %v4827 = vpop.permute.xlu0 %4826
    %vm4828 = vcmp.lt.s32.totalorder %v4465, 17
    %v4829 = vsel %vm4828, %v4825, %v4827
    %v4830 = vsel %vm4828, %v4823, %v4825
    %v4831 = vsel %vm4828, %v4821, %v4823
    %v4832 = vsel %vm4828, %v4827, %v4821
    %vm4833 = vmand %vm4509, %vm4585
    %vm4834 = vmand %vm4510, %vm4586
    %vm4835 = vmand %vm4511, %vm4587
    %vm4836 = vmand %vm4512, %vm4588
    %v4837 = vsel %vm4833, %v4832, 0.0
    %v4838 = vsel %vm4834, %v4831, 0.0
    %v4839 = vsel %vm4835, %v4830, 0.0
    %v4840 = vsel %vm4836, %v4829, 0.0
    %4841 = vrot.lane.b32.xlu0 %v4460, 16
    %v4842 = vpop.permute.xlu0 %4841
    %4843 = vrot.lane.b32.xlu0 %v4461, 16
    %v4844 = vpop.permute.xlu0 %4843
    %4845 = vrot.lane.b32.xlu0 %v4462, 16
    %v4846 = vpop.permute.xlu0 %4845
    %4847 = vrot.lane.b32.xlu0 %v4463, 16
    %v4848 = vpop.permute.xlu0 %4847
    %vm4849 = vcmp.lt.s32.totalorder %v4465, 16
    %v4850 = vsel %vm4849, %v4846, %v4848
    %v4851 = vsel %vm4849, %v4844, %v4846
    %v4852 = vsel %vm4849, %v4842, %v4844
    %v4853 = vsel %vm4849, %v4848, %v4842
    %vm4854 = vmand %vm4509, %vm4597
    %vm4855 = vmand %vm4510, %vm4598
    %vm4856 = vmand %vm4511, %vm4599
    %vm4857 = vmand %vm4512, %vm4600
    %v4858 = vsel %vm4854, %v4853, 0.0
    %v4859 = vsel %vm4855, %v4852, 0.0
    %v4860 = vsel %vm4856, %v4851, 0.0
    %v4861 = vsel %vm4857, %v4850, 0.0
    %v4866 = vrot.slane %v4858, 4
    %v4867 = vrot.slane %v4859, 4
    %v4868 = vrot.slane %v4860, 4
    %v4869 = vrot.slane %v4861, 4
    %v4874 = vsel %vm4687, %v4837, %v4866
    %v4875 = vsel %vm4687, %v4838, %v4867
    %v4876 = vsel %vm4687, %v4839, %v4868
    %v4877 = vsel %vm4687, %v4840, %v4869
    %4878 = vst [vmem:[#allocation3 + $0x60] sm:$0xff] %v4874
    %4879 = vst [vmem:[#allocation3 + $0x68] sm:$0xff] %v4875
    %4880 = vst [vmem:[#allocation3 + $0x70] sm:$0xff] %v4876
    %4881 = vst [vmem:[#allocation3 + $0x78] sm:$0xff] %v4877
    %4882 = vrot.lane.b32.xlu0 %v4460, 15
    %v4883 = vpop.permute.xlu0 %4882
    %4884 = vrot.lane.b32.xlu0 %v4461, 15
    %v4885 = vpop.permute.xlu0 %4884
    %4886 = vrot.lane.b32.xlu0 %v4462, 15
    %v4887 = vpop.permute.xlu0 %4886
    %4888 = vrot.lane.b32.xlu0 %v4463, 15
    %v4889 = vpop.permute.xlu0 %4888
    %vm4890 = vcmp.lt.s32.totalorder %v4465, 15
    %v4891 = vsel %vm4890, %v4887, %v4889
    %v4892 = vsel %vm4890, %v4885, %v4887
    %v4893 = vsel %vm4890, %v4883, %v4885
    %v4894 = vsel %vm4890, %v4889, %v4883
    %vm4895 = vmand %vm4509, %vm4613
    %vm4896 = vmand %vm4510, %vm4614
    %vm4897 = vmand %vm4511, %vm4615
    %vm4898 = vmand %vm4512, %vm4616
    %v4899 = vsel %vm4895, %v4894, 0.0
    %v4900 = vsel %vm4896, %v4893, 0.0
    %v4901 = vsel %vm4897, %v4892, 0.0
    %v4902 = vsel %vm4898, %v4891, 0.0
    %4903 = vrot.lane.b32.xlu0 %v4460, 14
    %v4904 = vpop.permute.xlu0 %4903
    %4905 = vrot.lane.b32.xlu0 %v4461, 14
    %v4906 = vpop.permute.xlu0 %4905
    %4907 = vrot.lane.b32.xlu0 %v4462, 14
    %v4908 = vpop.permute.xlu0 %4907
    %4909 = vrot.lane.b32.xlu0 %v4463, 14
    %v4910 = vpop.permute.xlu0 %4909
    %vm4911 = vcmp.lt.s32.totalorder %v4465, 14
    %v4912 = vsel %vm4911, %v4908, %v4910
    %v4913 = vsel %vm4911, %v4906, %v4908
    %v4914 = vsel %vm4911, %v4904, %v4906
    %v4915 = vsel %vm4911, %v4910, %v4904
    %vm4916 = vmand %vm4509, %vm4629
    %vm4917 = vmand %vm4510, %vm4630
    %vm4918 = vmand %vm4511, %vm4631
    %vm4919 = vmand %vm4512, %vm4632
    %v4920 = vsel %vm4916, %v4915, 0.0
    %v4921 = vsel %vm4917, %v4914, 0.0
    %v4922 = vsel %vm4918, %v4913, 0.0
    %v4923 = vsel %vm4919, %v4912, 0.0
    %v4928 = vrot.slane %v4920, 4
    %v4929 = vrot.slane %v4921, 4
    %v4930 = vrot.slane %v4922, 4
    %v4931 = vrot.slane %v4923, 4
    %v4936 = vsel %vm4687, %v4899, %v4928
    %v4937 = vsel %vm4687, %v4900, %v4929
    %v4938 = vsel %vm4687, %v4901, %v4930
    %v4939 = vsel %vm4687, %v4902, %v4931
    %4940 = vst [vmem:[#allocation3 + $0x80] sm:$0xff] %v4936
    %4941 = vst [vmem:[#allocation3 + $0x88] sm:$0xff] %v4937
    %4942 = vst [vmem:[#allocation3 + $0x90] sm:$0xff] %v4938
    %4943 = vst [vmem:[#allocation3 + $0x98] sm:$0xff] %v4939
    %4944 = vrot.lane.b32.xlu0 %v4460, 2
    %v4945 = vpop.permute.xlu0 %4944
    %4946 = vrot.lane.b32.xlu0 %v4461, 2
    %v4947 = vpop.permute.xlu0 %4946
    %4948 = vrot.lane.b32.xlu0 %v4462, 2
    %v4949 = vpop.permute.xlu0 %4948
    %4950 = vrot.lane.b32.xlu0 %v4463, 2
    %v4951 = vpop.permute.xlu0 %4950
    %vm4952 = vcmp.lt.s32.totalorder %v4465, 2
    %v4953 = vsel %vm4952, %v4949, %v4951
    %v4954 = vsel %vm4952, %v4947, %v4949
    %v4955 = vsel %vm4952, %v4945, %v4947
    %v4956 = vsel %vm4952, %v4951, %v4945
    %vm4957 = vmand %vm4521, %vm4569
    %vm4958 = vmand %vm4522, %vm4570
    %vm4959 = vmand %vm4523, %vm4571
    %vm4960 = vmand %vm4524, %vm4572
    %v4961 = vsel %vm4957, %v4956, 0.0
    %v4962 = vsel %vm4958, %v4955, 0.0
    %v4963 = vsel %vm4959, %v4954, 0.0
    %v4964 = vsel %vm4960, %v4953, 0.0
    %4965 = vrot.lane.b32.xlu0 %v4460, 1
    %v4966 = vpop.permute.xlu0 %4965
    %4967 = vrot.lane.b32.xlu0 %v4461, 1
    %v4968 = vpop.permute.xlu0 %4967
    %4969 = vrot.lane.b32.xlu0 %v4462, 1
    %v4970 = vpop.permute.xlu0 %4969
    %4971 = vrot.lane.b32.xlu0 %v4463, 1
    %v4972 = vpop.permute.xlu0 %4971
    %vm4973 = vcmp.lt.s32.totalorder %v4465, 1
    %v4974 = vsel %vm4973, %v4970, %v4972
    %v4975 = vsel %vm4973, %v4968, %v4970
    %v4976 = vsel %vm4973, %v4966, %v4968
    %v4977 = vsel %vm4973, %v4972, %v4966
    %vm4978 = vmand %vm4521, %vm4585
    %vm4979 = vmand %vm4522, %vm4586
    %vm4980 = vmand %vm4523, %vm4587
    %vm4981 = vmand %vm4524, %vm4588
    %v4982 = vsel %vm4978, %v4977, 0.0
    %v4983 = vsel %vm4979, %v4976, 0.0
    %v4984 = vsel %vm4980, %v4975, 0.0
    %v4985 = vsel %vm4981, %v4974, 0.0
    %v4990 = vrot.slane %v4982, 4
    %v4991 = vrot.slane %v4983, 4
    %v4992 = vrot.slane %v4984, 4
    %v4993 = vrot.slane %v4985, 4
    %v4998 = vsel %vm4687, %v4961, %v4990
    %v4999 = vsel %vm4687, %v4962, %v4991
    %v5000 = vsel %vm4687, %v4963, %v4992
    %v5001 = vsel %vm4687, %v4964, %v4993
    %5002 = vst [vmem:[#allocation3 + $0xa0] sm:$0xff] %v4998
    %5003 = vst [vmem:[#allocation3 + $0xa8] sm:$0xff] %v4999
    %5004 = vst [vmem:[#allocation3 + $0xb0] sm:$0xff] %v5000
    %5005 = vst [vmem:[#allocation3 + $0xb8] sm:$0xff] %v5001
    %vm5006 = vmand %vm4521, %vm4597
    %vm5007 = vmand %vm4522, %vm4598
    %vm5008 = vmand %vm4523, %vm4599
    %vm5009 = vmand %vm4524, %vm4600
    %v5010 = vsel %vm5006, %v4460, 0.0
    %v5011 = vsel %vm5007, %v4461, 0.0
    %v5012 = vsel %vm5008, %v4462, 0.0
    %v5013 = vsel %vm5009, %v4463, 0.0
    %5014 = vrot.lane.b32.xlu0 %v4460, 127
    %v5015 = vpop.permute.xlu0 %5014
    %5016 = vrot.lane.b32.xlu0 %v4461, 127
    %v5017 = vpop.permute.xlu0 %5016
    %5018 = vrot.lane.b32.xlu0 %v4462, 127
    %v5019 = vpop.permute.xlu0 %5018
    %5020 = vrot.lane.b32.xlu0 %v4463, 127
    %v5021 = vpop.permute.xlu0 %5020
    %vm5022 = vcmp.lt.s32.totalorder %v4465, 127
    %v5023 = vsel %vm5022, %v5019, %v5021
    %v5024 = vsel %vm5022, %v5017, %v5019
    %v5025 = vsel %vm5022, %v5015, %v5017
    %v5026 = vsel %vm5022, %v5021, %v5015
    %vm5027 = vmand %vm4521, %vm4613
    %vm5028 = vmand %vm4522, %vm4614
    %vm5029 = vmand %vm4523, %vm4615
    %vm5030 = vmand %vm4524, %vm4616
    %v5031 = vsel %vm5027, %v5025, 0.0
    %v5032 = vsel %vm5028, %v5024, 0.0
    %v5033 = vsel %vm5029, %v5023, 0.0
    %v5034 = vsel %vm5030, %v5026, 0.0
    %v5039 = vrot.slane %v5031, 4
    %v5040 = vrot.slane %v5032, 4
    %v5041 = vrot.slane %v5033, 4
    %v5042 = vrot.slane %v5034, 4
    %v5047 = vsel %vm4687, %v5010, %v5039
    %v5048 = vsel %vm4687, %v5011, %v5040
    %v5049 = vsel %vm4687, %v5012, %v5041
    %v5050 = vsel %vm4687, %v5013, %v5042
    %5051 = vst [vmem:[#allocation3 + $0xc0] sm:$0xff] %v5047
    %5052 = vst [vmem:[#allocation3 + $0xc8] sm:$0xff] %v5048
    %5053 = vst [vmem:[#allocation3 + $0xd0] sm:$0xff] %v5049
    %5054 = vst [vmem:[#allocation3 + $0xd8] sm:$0xff] %v5050
    %5055 = vrot.lane.b32.xlu0 %v4460, 126
    %v5056 = vpop.permute.xlu0 %5055
    %5057 = vrot.lane.b32.xlu0 %v4461, 126
    %v5058 = vpop.permute.xlu0 %5057
    %5059 = vrot.lane.b32.xlu0 %v4462, 126
    %v5060 = vpop.permute.xlu0 %5059
    %5061 = vrot.lane.b32.xlu0 %v4463, 126
    %v5062 = vpop.permute.xlu0 %5061
    %vm5063 = vcmp.lt.s32.totalorder %v4465, 126
    %v5064 = vsel %vm5063, %v5060, %v5062
    %v5065 = vsel %vm5063, %v5058, %v5060
    %v5066 = vsel %vm5063, %v5056, %v5058
    %v5067 = vsel %vm5063, %v5062, %v5056
    %vm5068 = vmand %vm4521, %vm4629
    %vm5069 = vmand %vm4522, %vm4630
    %vm5070 = vmand %vm4523, %vm4631
    %vm5071 = vmand %vm4524, %vm4632
    %v5072 = vsel %vm5068, %v5066, 0.0
    %v5073 = vsel %vm5069, %v5065, 0.0
    %v5074 = vsel %vm5070, %v5064, 0.0
    %v5075 = vsel %vm5071, %v5067, 0.0
    %5076 = vrot.lane.b32.xlu0 %v4460, 114
    %v5077 = vpop.permute.xlu0 %5076
    %5078 = vrot.lane.b32.xlu0 %v4461, 114
    %v5079 = vpop.permute.xlu0 %5078
    %5080 = vrot.lane.b32.xlu0 %v4462, 114
    %v5081 = vpop.permute.xlu0 %5080
    %5082 = vrot.lane.b32.xlu0 %v4463, 114
    %v5083 = vpop.permute.xlu0 %5082
    %vm5084 = vcmp.lt.s32.totalorder %v4465, 114
    %v5085 = vsel %vm5084, %v5081, %v5083
    %v5086 = vsel %vm5084, %v5079, %v5081
    %v5087 = vsel %vm5084, %v5077, %v5079
    %v5088 = vsel %vm5084, %v5083, %v5077
    %vm5089 = vmand %vm4537, %vm4569
    %vm5090 = vmand %vm4538, %vm4570
    %vm5091 = vmand %vm4539, %vm4571
    %vm5092 = vmand %vm4540, %vm4572
    %v5093 = vsel %vm5089, %v5087, 0.0
    %v5094 = vsel %vm5090, %v5086, 0.0
    %v5095 = vsel %vm5091, %v5085, 0.0
    %v5096 = vsel %vm5092, %v5088, 0.0
    %v5101 = vrot.slane %v5093, 4
    %v5102 = vrot.slane %v5094, 4
    %v5103 = vrot.slane %v5095, 4
    %v5104 = vrot.slane %v5096, 4
    %v5109 = vsel %vm4687, %v5072, %v5101
    %v5110 = vsel %vm4687, %v5073, %v5102
    %v5111 = vsel %vm4687, %v5074, %v5103
    %v5112 = vsel %vm4687, %v5075, %v5104
    %5113 = vst [vmem:[#allocation3 + $0xe0] sm:$0xff] %v5109
    %5114 = vst [vmem:[#allocation3 + $0xe8] sm:$0xff] %v5110
    %5115 = vst [vmem:[#allocation3 + $0xf0] sm:$0xff] %v5111
    %5116 = vst [vmem:[#allocation3 + $0xf8] sm:$0xff] %v5112
    %5117 = vrot.lane.b32.xlu0 %v4460, 113
    %v5118 = vpop.permute.xlu0 %5117
    %5119 = vrot.lane.b32.xlu0 %v4461, 113
    %v5120 = vpop.permute.xlu0 %5119
    %5121 = vrot.lane.b32.xlu0 %v4462, 113
    %v5122 = vpop.permute.xlu0 %5121
    %5123 = vrot.lane.b32.xlu0 %v4463, 113
    %v5124 = vpop.permute.xlu0 %5123
    %vm5125 = vcmp.lt.s32.totalorder %v4465, 113
    %v5126 = vsel %vm5125, %v5122, %v5124
    %v5127 = vsel %vm5125, %v5120, %v5122
    %v5128 = vsel %vm5125, %v5118, %v5120
    %v5129 = vsel %vm5125, %v5124, %v5118
    %vm5130 = vmand %vm4537, %vm4585
    %vm5131 = vmand %vm4538, %vm4586
    %vm5132 = vmand %vm4539, %vm4587
    %vm5133 = vmand %vm4540, %vm4588
    %v5134 = vsel %vm5130, %v5128, 0.0
    %v5135 = vsel %vm5131, %v5127, 0.0
    %v5136 = vsel %vm5132, %v5126, 0.0
    %v5137 = vsel %vm5133, %v5129, 0.0
    %5138 = vrot.lane.b32.xlu0 %v4460, 112
    %v5139 = vpop.permute.xlu0 %5138
    %5140 = vrot.lane.b32.xlu0 %v4461, 112
    %v5141 = vpop.permute.xlu0 %5140
    %5142 = vrot.lane.b32.xlu0 %v4462, 112
    %v5143 = vpop.permute.xlu0 %5142
    %5144 = vrot.lane.b32.xlu0 %v4463, 112
    %v5145 = vpop.permute.xlu0 %5144
    %vm5146 = vcmp.lt.s32.totalorder %v4465, 112
    %v5147 = vsel %vm5146, %v5143, %v5145
    %v5148 = vsel %vm5146, %v5141, %v5143
    %v5149 = vsel %vm5146, %v5139, %v5141
    %v5150 = vsel %vm5146, %v5145, %v5139
    %vm5151 = vmand %vm4537, %vm4597
    %vm5152 = vmand %vm4538, %vm4598
    %vm5153 = vmand %vm4539, %vm4599
    %vm5154 = vmand %vm4540, %vm4600
    %v5155 = vsel %vm5151, %v5149, 0.0
    %v5156 = vsel %vm5152, %v5148, 0.0
    %v5157 = vsel %vm5153, %v5147, 0.0
    %v5158 = vsel %vm5154, %v5150, 0.0
    %v5163 = vrot.slane %v5155, 4
    %v5164 = vrot.slane %v5156, 4
    %v5165 = vrot.slane %v5157, 4
    %v5166 = vrot.slane %v5158, 4
    %v5171 = vsel %vm4687, %v5134, %v5163
    %v5172 = vsel %vm4687, %v5135, %v5164
    %v5173 = vsel %vm4687, %v5136, %v5165
    %v5174 = vsel %vm4687, %v5137, %v5166
    %5175 = vst [vmem:[#allocation3 + $0x100] sm:$0xff] %v5171
    %5176 = vst [vmem:[#allocation3 + $0x108] sm:$0xff] %v5172
    %5177 = vst [vmem:[#allocation3 + $0x110] sm:$0xff] %v5173
    %5178 = vst [vmem:[#allocation3 + $0x118] sm:$0xff] %v5174
    %5179 = vrot.lane.b32.xlu0 %v4460, 111
    %v5180 = vpop.permute.xlu0 %5179
    %5181 = vrot.lane.b32.xlu0 %v4461, 111
    %v5182 = vpop.permute.xlu0 %5181
    %5183 = vrot.lane.b32.xlu0 %v4462, 111
    %v5184 = vpop.permute.xlu0 %5183
    %5185 = vrot.lane.b32.xlu0 %v4463, 111
    %v5186 = vpop.permute.xlu0 %5185
    %vm5187 = vcmp.lt.s32.totalorder %v4465, 111
    %v5188 = vsel %vm5187, %v5184, %v5186
    %v5189 = vsel %vm5187, %v5182, %v5184
    %v5190 = vsel %vm5187, %v5180, %v5182
    %v5191 = vsel %vm5187, %v5186, %v5180
    %vm5192 = vmand %vm4537, %vm4613
    %vm5193 = vmand %vm4538, %vm4614
    %vm5194 = vmand %vm4539, %vm4615
    %vm5195 = vmand %vm4540, %vm4616
    %v5196 = vsel %vm5192, %v5190, 0.0
    %v5197 = vsel %vm5193, %v5189, 0.0
    %v5198 = vsel %vm5194, %v5188, 0.0
    %v5199 = vsel %vm5195, %v5191, 0.0
    %5200 = vrot.lane.b32.xlu0 %v4460, 110
    %v5201 = vpop.permute.xlu0 %5200
    %5202 = vrot.lane.b32.xlu0 %v4461, 110
    %v5203 = vpop.permute.xlu0 %5202
    %5204 = vrot.lane.b32.xlu0 %v4462, 110
    %v5205 = vpop.permute.xlu0 %5204
    %5206 = vrot.lane.b32.xlu0 %v4463, 110
    %v5207 = vpop.permute.xlu0 %5206
    %vm5208 = vcmp.lt.s32.totalorder %v4465, 110
    %v5209 = vsel %vm5208, %v5205, %v5207
    %v5210 = vsel %vm5208, %v5203, %v5205
    %v5211 = vsel %vm5208, %v5201, %v5203
    %v5212 = vsel %vm5208, %v5207, %v5201
    %vm5213 = vmand %vm4537, %vm4629
    %vm5214 = vmand %vm4538, %vm4630
    %vm5215 = vmand %vm4539, %vm4631
    %vm5216 = vmand %vm4540, %vm4632
    %v5217 = vsel %vm5213, %v5211, 0.0
    %v5218 = vsel %vm5214, %v5210, 0.0
    %v5219 = vsel %vm5215, %v5209, 0.0
    %v5220 = vsel %vm5216, %v5212, 0.0
    %v5225 = vrot.slane %v5217, 4
    %v5226 = vrot.slane %v5218, 4
    %v5227 = vrot.slane %v5219, 4
    %v5228 = vrot.slane %v5220, 4
    %v5233 = vsel %vm4687, %v5196, %v5225
    %v5234 = vsel %vm4687, %v5197, %v5226
    %v5235 = vsel %vm4687, %v5198, %v5227
    %v5236 = vsel %vm4687, %v5199, %v5228
    %5237 = vst [vmem:[#allocation3 + $0x120] sm:$0xff] %v5233
    %5238 = vst [vmem:[#allocation3 + $0x128] sm:$0xff] %v5234
    %5239 = vst [vmem:[#allocation3 + $0x130] sm:$0xff] %v5235
    %5240 = vst [vmem:[#allocation3 + $0x138] sm:$0xff] %v5236
    %5241 = vrot.lane.b32.xlu0 %v4460, 98
    %v5242 = vpop.permute.xlu0 %5241
    %5243 = vrot.lane.b32.xlu0 %v4461, 98
    %v5244 = vpop.permute.xlu0 %5243
    %5245 = vrot.lane.b32.xlu0 %v4462, 98
    %v5246 = vpop.permute.xlu0 %5245
    %5247 = vrot.lane.b32.xlu0 %v4463, 98
    %v5248 = vpop.permute.xlu0 %5247
    %vm5249 = vcmp.lt.s32.totalorder %v4465, 98
    %v5250 = vsel %vm5249, %v5246, %v5248
    %v5251 = vsel %vm5249, %v5244, %v5246
    %v5252 = vsel %vm5249, %v5242, %v5244
    %v5253 = vsel %vm5249, %v5248, %v5242
    %vm5254 = vmand %vm4553, %vm4569
    %vm5255 = vmand %vm4554, %vm4570
    %vm5256 = vmand %vm4555, %vm4571
    %vm5257 = vmand %vm4556, %vm4572
    %v5258 = vsel %vm5254, %v5252, 0.0
    %v5259 = vsel %vm5255, %v5251, 0.0
    %v5260 = vsel %vm5256, %v5250, 0.0
    %v5261 = vsel %vm5257, %v5253, 0.0
    %5262 = vrot.lane.b32.xlu0 %v4460, 97
    %v5263 = vpop.permute.xlu0 %5262
    %5264 = vrot.lane.b32.xlu0 %v4461, 97
    %v5265 = vpop.permute.xlu0 %5264
    %5266 = vrot.lane.b32.xlu0 %v4462, 97
    %v5267 = vpop.permute.xlu0 %5266
    %5268 = vrot.lane.b32.xlu0 %v4463, 97
    %v5269 = vpop.permute.xlu0 %5268
    %vm5270 = vcmp.lt.s32.totalorder %v4465, 97
    %v5271 = vsel %vm5270, %v5267, %v5269
    %v5272 = vsel %vm5270, %v5265, %v5267
    %v5273 = vsel %vm5270, %v5263, %v5265
    %v5274 = vsel %vm5270, %v5269, %v5263
    %vm5275 = vmand %vm4553, %vm4585
    %vm5276 = vmand %vm4554, %vm4586
    %vm5277 = vmand %vm4555, %vm4587
    %vm5278 = vmand %vm4556, %vm4588
    %v5279 = vsel %vm5275, %v5273, 0.0
    %v5280 = vsel %vm5276, %v5272, 0.0
    %v5281 = vsel %vm5277, %v5271, 0.0
    %v5282 = vsel %vm5278, %v5274, 0.0
    %v5287 = vrot.slane %v5279, 4
    %v5288 = vrot.slane %v5280, 4
    %v5289 = vrot.slane %v5281, 4
    %v5290 = vrot.slane %v5282, 4
    %v5295 = vsel %vm4687, %v5258, %v5287
    %v5296 = vsel %vm4687, %v5259, %v5288
    %v5297 = vsel %vm4687, %v5260, %v5289
    %v5298 = vsel %vm4687, %v5261, %v5290
    %5299 = vst [vmem:[#allocation3 + $0x140] sm:$0xff] %v5295
    %5300 = vst [vmem:[#allocation3 + $0x148] sm:$0xff] %v5296
    %5301 = vst [vmem:[#allocation3 + $0x150] sm:$0xff] %v5297
    %5302 = vst [vmem:[#allocation3 + $0x158] sm:$0xff] %v5298
    %5303 = vrot.lane.b32.xlu0 %v4460, 96
    %v5304 = vpop.permute.xlu0 %5303
    %5305 = vrot.lane.b32.xlu0 %v4461, 96
    %v5306 = vpop.permute.xlu0 %5305
    %5307 = vrot.lane.b32.xlu0 %v4462, 96
    %v5308 = vpop.permute.xlu0 %5307
    %5309 = vrot.lane.b32.xlu0 %v4463, 96
    %v5310 = vpop.permute.xlu0 %5309
    %vm5311 = vcmp.lt.s32.totalorder %v4465, 96
    %v5312 = vsel %vm5311, %v5308, %v5310
    %v5313 = vsel %vm5311, %v5306, %v5308
    %v5314 = vsel %vm5311, %v5304, %v5306
    %v5315 = vsel %vm5311, %v5310, %v5304
    %vm5316 = vmand %vm4553, %vm4597
    %vm5317 = vmand %vm4554, %vm4598
    %vm5318 = vmand %vm4555, %vm4599
    %vm5319 = vmand %vm4556, %vm4600
    %v5320 = vsel %vm5316, %v5314, 0.0
    %v5321 = vsel %vm5317, %v5313, 0.0
    %v5322 = vsel %vm5318, %v5312, 0.0
    %v5323 = vsel %vm5319, %v5315, 0.0
    %5324 = vrot.lane.b32.xlu0 %v4460, 95
    %v5325 = vpop.permute.xlu0 %5324
    %5326 = vrot.lane.b32.xlu0 %v4461, 95
    %v5327 = vpop.permute.xlu0 %5326
    %5328 = vrot.lane.b32.xlu0 %v4462, 95
    %v5329 = vpop.permute.xlu0 %5328
    %5330 = vrot.lane.b32.xlu0 %v4463, 95
    %v5331 = vpop.permute.xlu0 %5330
    %vm5332 = vcmp.lt.s32.totalorder %v4465, 95
    %v5333 = vsel %vm5332, %v5329, %v5331
    %v5334 = vsel %vm5332, %v5327, %v5329
    %v5335 = vsel %vm5332, %v5325, %v5327
    %v5336 = vsel %vm5332, %v5331, %v5325
    %vm5337 = vmand %vm4553, %vm4613
    %vm5338 = vmand %vm4554, %vm4614
    %vm5339 = vmand %vm4555, %vm4615
    %vm5340 = vmand %vm4556, %vm4616
    %v5341 = vsel %vm5337, %v5335, 0.0
    %v5342 = vsel %vm5338, %v5334, 0.0
    %v5343 = vsel %vm5339, %v5333, 0.0
    %v5344 = vsel %vm5340, %v5336, 0.0
    %v5349 = vrot.slane %v5341, 4
    %v5350 = vrot.slane %v5342, 4
    %v5351 = vrot.slane %v5343, 4
    %v5352 = vrot.slane %v5344, 4
    %v5357 = vsel %vm4687, %v5320, %v5349
    %v5358 = vsel %vm4687, %v5321, %v5350
    %v5359 = vsel %vm4687, %v5322, %v5351
    %v5360 = vsel %vm4687, %v5323, %v5352
    %5361 = vst [vmem:[#allocation3 + $0x160] sm:$0xff] %v5357
    %5362 = vst [vmem:[#allocation3 + $0x168] sm:$0xff] %v5358
    %5363 = vst [vmem:[#allocation3 + $0x170] sm:$0xff] %v5359
    %5364 = vst [vmem:[#allocation3 + $0x178] sm:$0xff] %v5360
    %5365 = vrot.lane.b32.xlu0 %v4460, 94
    %v5366 = vpop.permute.xlu0 %5365
    %5367 = vrot.lane.b32.xlu0 %v4461, 94
    %v5368 = vpop.permute.xlu0 %5367
    %5369 = vrot.lane.b32.xlu0 %v4462, 94
    %v5370 = vpop.permute.xlu0 %5369
    %5371 = vrot.lane.b32.xlu0 %v4463, 94
    %v5372 = vpop.permute.xlu0 %5371
    %vm5373 = vcmp.lt.s32.totalorder %v4465, 94
    %v5374 = vsel %vm5373, %v5370, %v5372
    %v5375 = vsel %vm5373, %v5368, %v5370
    %v5376 = vsel %vm5373, %v5366, %v5368
    %v5377 = vsel %vm5373, %v5372, %v5366
    %vm5378 = vmand %vm4553, %vm4629
    %vm5379 = vmand %vm4554, %vm4630
    %vm5380 = vmand %vm4555, %vm4631
    %vm5381 = vmand %vm4556, %vm4632
    %v5382 = vsel %vm5378, %v5376, 0.0
    %v5383 = vsel %vm5379, %v5375, 0.0
    %v5384 = vsel %vm5380, %v5374, 0.0
    %v5385 = vsel %vm5381, %v5377, 0.0
    %v5386 = vsel %vm4687, %v5382, 0.0
    %v5387 = vsel %vm4687, %v5383, 0.0
    %v5388 = vsel %vm4687, %v5384, 0.0
    %v5389 = vsel %vm4687, %v5385, 0.0
    %5390 = vst [vmem:[#allocation3 + $0x180] sm:$0xff] %v5386
    %5391 = vst [vmem:[#allocation3 + $0x188] sm:$0xff] %v5387
    %5392 = vst [vmem:[#allocation3 + $0x190] sm:$0xff] %v5388
    %5393 = vst [vmem:[#allocation3 + $0x198] sm:$0xff] %v5389
    %5394 = vst [vmem:[#allocation3 + $0x1a0] sm:$0xff] 0.0
    %5395 = vst [vmem:[#allocation3 + $0x1a8] sm:$0xff] 0.0
    %5396 = vst [vmem:[#allocation3 + $0x1b0] sm:$0xff] 0.0
    %5397 = vst [vmem:[#allocation3 + $0x1b8] sm:$0xff] 0.0
    %5398 = vst [vmem:[#allocation3 + $0x1c0] sm:$0xff] 0.0
    %5399 = vst [vmem:[#allocation3 + $0x1c8] sm:$0xff] 0.0
    %5400 = vst [vmem:[#allocation3 + $0x1d0] sm:$0xff] 0.0
    %5401 = vst [vmem:[#allocation3 + $0x1d8] sm:$0xff] 0.0
    %5402 = vst [vmem:[#allocation3 + $0x1e0] sm:$0xff] 0.0
    %5403 = vst [vmem:[#allocation3 + $0x1e8] sm:$0xff] 0.0
    %5404 = vst [vmem:[#allocation3 + $0x1f0] sm:$0xff] 0.0
    %5405 = vst [vmem:[#allocation3 + $0x1f8] sm:$0xff] 0.0
    %v5406 = vld [vmem:[%s4] sm:$0xff]
    %v5407 = vld [vmem:[%s4 + $0x8] sm:$0xff]
    %v5408 = vld [vmem:[%s4 + $0x10] sm:$0xff]
    %v5409 = vld [vmem:[%s4 + $0x18] sm:$0xff]
    %v5410 = vld [vmem:[%s4 + $0x20] sm:$0xff]
    %v5411 = vld [vmem:[%s4 + $0x28] sm:$0xff]
    %v5412 = vld [vmem:[%s4 + $0x30] sm:$0xff]
    %v5413 = vld [vmem:[%s4 + $0x38] sm:$0xff]
    %v5414 = vld [vmem:[#allocation3] sm:$0xff]
    %v5415 = vld [vmem:[#allocation3 + $0x8] sm:$0xff]
    %v5416 = vld [vmem:[#allocation3 + $0x10] sm:$0xff]
    %v5417 = vld [vmem:[#allocation3 + $0x18] sm:$0xff]
    %v5418 = vld [vmem:[#allocation3 + $0x20] sm:$0xff]
    %v5419 = vld [vmem:[#allocation3 + $0x28] sm:$0xff]
    %v5420 = vld [vmem:[#allocation3 + $0x30] sm:$0xff]
    %v5421 = vld [vmem:[#allocation3 + $0x38] sm:$0xff]
    %v5422 = vld [vmem:[#allocation3 + $0x40] sm:$0xff]
    %v5423 = vld [vmem:[#allocation3 + $0x48] sm:$0xff]
    %v5424 = vld [vmem:[#allocation3 + $0x50] sm:$0xff]
    %v5425 = vld [vmem:[#allocation3 + $0x58] sm:$0xff]
    %v5426 = vld [vmem:[#allocation3 + $0x60] sm:$0xff]
    %v5427 = vld [vmem:[#allocation3 + $0x68] sm:$0xff]
    %v5428 = vld [vmem:[#allocation3 + $0x70] sm:$0xff]
    %v5429 = vld [vmem:[#allocation3 + $0x78] sm:$0xff]
    %v5430 = vld [vmem:[#allocation3 + $0x80] sm:$0xff]
    %v5431 = vld [vmem:[#allocation3 + $0x88] sm:$0xff]
    %v5432 = vld [vmem:[#allocation3 + $0x90] sm:$0xff]
    %v5433 = vld [vmem:[#allocation3 + $0x98] sm:$0xff]
    %v5434 = vld [vmem:[#allocation3 + $0xa0] sm:$0xff]
    %v5435 = vld [vmem:[#allocation3 + $0xa8] sm:$0xff]
    %v5436 = vld [vmem:[#allocation3 + $0xb0] sm:$0xff]
    %v5437 = vld [vmem:[#allocation3 + $0xb8] sm:$0xff]
    %v5438 = vld [vmem:[#allocation3 + $0xc0] sm:$0xff]
    %v5439 = vld [vmem:[#allocation3 + $0xc8] sm:$0xff]
    %v5440 = vld [vmem:[#allocation3 + $0xd0] sm:$0xff]
    %v5441 = vld [vmem:[#allocation3 + $0xd8] sm:$0xff]
    %v5442 = vld [vmem:[#allocation3 + $0xe0] sm:$0xff]
    %v5443 = vld [vmem:[#allocation3 + $0xe8] sm:$0xff]
    %v5444 = vld [vmem:[#allocation3 + $0xf0] sm:$0xff]
    %v5445 = vld [vmem:[#allocation3 + $0xf8] sm:$0xff]
    %v5446 = vld [vmem:[#allocation3 + $0x100] sm:$0xff]
    %v5447 = vld [vmem:[#allocation3 + $0x108] sm:$0xff]
    %v5448 = vld [vmem:[#allocation3 + $0x110] sm:$0xff]
    %v5449 = vld [vmem:[#allocation3 + $0x118] sm:$0xff]
    %v5450 = vld [vmem:[#allocation3 + $0x120] sm:$0xff]
    %v5451 = vld [vmem:[#allocation3 + $0x128] sm:$0xff]
    %v5452 = vld [vmem:[#allocation3 + $0x130] sm:$0xff]
    %v5453 = vld [vmem:[#allocation3 + $0x138] sm:$0xff]
    %v5454 = vld [vmem:[#allocation3 + $0x140] sm:$0xff]
    %v5455 = vld [vmem:[#allocation3 + $0x148] sm:$0xff]
    %v5456 = vld [vmem:[#allocation3 + $0x150] sm:$0xff]
    %v5457 = vld [vmem:[#allocation3 + $0x158] sm:$0xff]
    %v5458 = vld [vmem:[#allocation3 + $0x160] sm:$0xff]
    %v5459 = vld [vmem:[#allocation3 + $0x168] sm:$0xff]
    %v5460 = vld [vmem:[#allocation3 + $0x170] sm:$0xff]
    %v5461 = vld [vmem:[#allocation3 + $0x178] sm:$0xff]
    %v5462 = vld [vmem:[#allocation3 + $0x180] sm:$0xff]
    %v5463 = vld [vmem:[#allocation3 + $0x188] sm:$0xff]
    %v5464 = vld [vmem:[#allocation3 + $0x190] sm:$0xff]
    %v5465 = vld [vmem:[#allocation3 + $0x198] sm:$0xff]
    %v5466 = vld [vmem:[#allocation3 + $0x1a0] sm:$0xff]
    %v5467 = vld [vmem:[#allocation3 + $0x1a8] sm:$0xff]
    %v5468 = vld [vmem:[#allocation3 + $0x1b0] sm:$0xff]
    %v5469 = vld [vmem:[#allocation3 + $0x1b8] sm:$0xff]
    %v5470 = vld [vmem:[#allocation3 + $0x1c0] sm:$0xff]
    %v5471 = vld [vmem:[#allocation3 + $0x1c8] sm:$0xff]
    %v5472 = vld [vmem:[#allocation3 + $0x1d0] sm:$0xff]
    %v5473 = vld [vmem:[#allocation3 + $0x1d8] sm:$0xff]
    %v5474 = vld [vmem:[#allocation3 + $0x1e0] sm:$0xff]
    %v5475 = vld [vmem:[#allocation3 + $0x1e8] sm:$0xff]
    %v5476 = vld [vmem:[#allocation3 + $0x1f0] sm:$0xff]
    %v5477 = vld [vmem:[#allocation3 + $0x1f8] sm:$0xff]
    %5478 = vmatprep.subr.mxu0 %v5415
    %5479 = vmatpush1.msra.mxu0 %v5414
    %5480 = vmatprep.subr.mxu0 %v5419
    %5481 = vmatpush1.msra.mxu0 %v5418
    %5482 = vmatprep.subr.mxu0 %v5423
    %5483 = vmatpush1.msra.mxu0 %v5422
    %5484 = vmatprep.subr.mxu0 %v5427
    %5485 = vmatpush1.msra.mxu0 %v5426
    %5486 = vmatprep.subr.mxu0 %v5431
    %5487 = vmatpush1.msra.mxu0 %v5430
    %5488 = vmatprep.subr.mxu0 %v5435
    %5489 = vmatpush1.msra.mxu0 %v5434
    %5490 = vmatprep.subr.mxu0 %v5439
    %5491 = vmatpush1.msra.mxu0 %v5438
    %5492 = vmatprep.subr.mxu0 %v5443
    %5493 = vmatpush1.msra.mxu0 %v5442
    %5494 = vmatprep.subr.mxu0 %v5447
    %5495 = vmatpush1.msra.mxu0 %v5446
    %5496 = vmatprep.subr.mxu0 %v5451
    %5497 = vmatpush1.msra.mxu0 %v5450
    %5498 = vmatprep.subr.mxu0 %v5455
    %5499 = vmatpush1.msra.mxu0 %v5454
    %5500 = vmatprep.subr.mxu0 %v5459
    %5501 = vmatpush1.msra.mxu0 %v5458
    %5502 = vmatprep.subr.mxu0 %v5463
    %5503 = vmatpush1.msra.mxu0 %v5462
    %5504 = vmatprep.subr.mxu0 %v5467
    %5505 = vmatpush1.msra.mxu0 %v5466
    %5506 = vmatprep.subr.mxu0 %v5471
    %5507 = vmatpush1.msra.mxu0 %v5470
    %5508 = vmatprep.subr.mxu0 %v5475
    %5509 = vmatpush1.msra.mxu0 %v5474
    %5510 = vmatprep.subr.mxu0 0.0
    %5511 = vmatpush1.msra.mxu0 0.0
    %5512 = vmatprep.subr.mxu0 0.0
    %5513 = vmatpush1.msra.mxu0 0.0
    %5514 = vmatprep.subr.mxu0 0.0
    %5515 = vmatpush1.msra.mxu0 0.0
    %5516 = vmatprep.subr.mxu0 0.0
    %5517 = vmatpush1.msra.mxu0 0.0
    %5518 = vmatprep.subr.mxu0 0.0
    %5519 = vmatpush1.msra.mxu0 0.0
    %5520 = vmatprep.subr.mxu0 0.0
    %5521 = vmatpush1.msra.mxu0 0.0
    %5522 = vmatprep.subr.mxu0 0.0
    %5523 = vmatpush1.msra.mxu0 0.0
    %5524 = vmatprep.subr.mxu0 0.0
    %5525 = vmatpush1.msra.mxu0 0.0
    %5526 = vmatprep.subr.mxu0 0.0
    %5527 = vmatpush1.msra.mxu0 0.0
    %5528 = vmatprep.subr.mxu0 0.0
    %5529 = vmatpush1.msra.mxu0 0.0
    %5530 = vmatprep.subr.mxu0 0.0
    %5531 = vmatpush1.msra.mxu0 0.0
    %5532 = vmatprep.subr.mxu0 0.0
    %5533 = vmatpush1.msra.mxu0 0.0
    %5534 = vmatprep.subr.mxu0 0.0
    %5535 = vmatpush1.msra.mxu0 0.0
    %5536 = vmatprep.subr.mxu0 0.0
    %5537 = vmatpush1.msra.mxu0 0.0
    %5538 = vmatprep.subr.mxu0 0.0
    %5539 = vmatpush1.msra.mxu0 0.0
    %5540 = vmatprep.subr.mxu0 0.0
    %5541 = vmatpush1.msra.mxu0 0.0
    %5542 = vmatprep.mubr.f32.mxu0 0.0
    %5543 = vmatmul.mubr.f32.gmra.mrb[0].mxu0 %v5406
    %v5544 = vpop.f32.mrb[0].mxu0
    %v5545 = vadd.f32 0.0, %v5544
    %v5546 = vpop.f32.mrb[0].mxu0
    %v5547 = vadd.f32 0.0, %v5546
    %5548 = vmatprep.mubr.f32.mxu0 0.0
    %5549 = vmatmul.mubr.f32.gmra.mrb[0].mxu0 %v5407
    %v5550 = vpop.f32.mrb[0].mxu0
    %v5551 = vadd.f32 0.0, %v5550
    %v5552 = vpop.f32.mrb[0].mxu0
    %v5553 = vadd.f32 0.0, %v5552
    %5554 = vmatprep.mubr.f32.mxu0 0.0
    %5555 = vmatmul.mubr.f32.gmra.mrb[0].mxu0 %v5408
    %v5556 = vpop.f32.mrb[0].mxu0
    %v5557 = vadd.f32 0.0, %v5556
    %v5558 = vpop.f32.mrb[0].mxu0
    %v5559 = vadd.f32 0.0, %v5558
    %5560 = vmatprep.mubr.f32.mxu0 0.0
    %5561 = vmatmul.mubr.f32.gmra.mrb[0].mxu0 %v5409
    %v5562 = vpop.f32.mrb[0].mxu0
    %v5563 = vadd.f32 0.0, %v5562
    %v5564 = vpop.f32.mrb[0].mxu0
    %v5565 = vadd.f32 0.0, %v5564
    %5566 = vmatprep.mubr.f32.mxu0 0.0
    %5567 = vmatmul.mubr.f32.gmra.mrb[0].mxu0 %v5410
    %v5568 = vpop.f32.mrb[0].mxu0
    %v5569 = vadd.f32 0.0, %v5568
    %v5570 = vpop.f32.mrb[0].mxu0
    %v5571 = vadd.f32 0.0, %v5570
    %5572 = vmatprep.mubr.f32.mxu0 0.0
    %5573 = vmatmul.mubr.f32.gmra.mrb[0].mxu0 %v5411
    %v5574 = vpop.f32.mrb[0].mxu0
    %v5575 = vadd.f32 0.0, %v5574
    %v5576 = vpop.f32.mrb[0].mxu0
    %v5577 = vadd.f32 0.0, %v5576
    %5578 = vmatprep.mubr.f32.mxu0 0.0
    %5579 = vmatmul.mubr.f32.gmra.mrb[0].mxu0 %v5412
    %v5580 = vpop.f32.mrb[0].mxu0
    %v5581 = vadd.f32 0.0, %v5580
    %v5582 = vpop.f32.mrb[0].mxu0
    %v5583 = vadd.f32 0.0, %v5582
    %5584 = vmatprep.mubr.f32.mxu0 0.0
    %5585 = vmatmul.mubr.f32.gmra.mrb[0].mxu0 %v5413
    %v5586 = vpop.f32.mrb[0].mxu0
    %v5587 = vadd.f32 0.0, %v5586
    %v5588 = vpop.f32.mrb[0].mxu0
    %v5589 = vadd.f32 0.0, %v5588
    %5590 = vdwg.mxu0
    %5591 = vmatprep.subr.mxu0 %v5417
    %5592 = vmatpush1.msra.mxu0 %v5416
    %5593 = vmatprep.subr.mxu0 %v5421
    %5594 = vmatpush1.msra.mxu0 %v5420
    %5595 = vmatprep.subr.mxu0 %v5425
    %5596 = vmatpush1.msra.mxu0 %v5424
    %5597 = vmatprep.subr.mxu0 %v5429
    %5598 = vmatpush1.msra.mxu0 %v5428
    %5599 = vmatprep.subr.mxu0 %v5433
    %5600 = vmatpush1.msra.mxu0 %v5432
    %5601 = vmatprep.subr.mxu0 %v5437
    %5602 = vmatpush1.msra.mxu0 %v5436
    %5603 = vmatprep.subr.mxu0 %v5441
    %5604 = vmatpush1.msra.mxu0 %v5440
    %5605 = vmatprep.subr.mxu0 %v5445
    %5606 = vmatpush1.msra.mxu0 %v5444
    %5607 = vmatprep.subr.mxu0 %v5449
    %5608 = vmatpush1.msra.mxu0 %v5448
    %5609 = vmatprep.subr.mxu0 %v5453
    %5610 = vmatpush1.msra.mxu0 %v5452
    %5611 = vmatprep.subr.mxu0 %v5457
    %5612 = vmatpush1.msra.mxu0 %v5456
    %5613 = vmatprep.subr.mxu0 %v5461
    %5614 = vmatpush1.msra.mxu0 %v5460
    %5615 = vmatprep.subr.mxu0 %v5465
    %5616 = vmatpush1.msra.mxu0 %v5464
    %5617 = vmatprep.subr.mxu0 %v5469
    %5618 = vmatpush1.msra.mxu0 %v5468
    %5619 = vmatprep.subr.mxu0 %v5473
    %5620 = vmatpush1.msra.mxu0 %v5472
    %5621 = vmatprep.subr.mxu0 %v5477
    %5622 = vmatpush1.msra.mxu0 %v5476
    %5623 = vmatprep.subr.mxu0 0.0
    %5624 = vmatpush1.msra.mxu0 0.0
    %5625 = vmatprep.subr.mxu0 0.0
    %5626 = vmatpush1.msra.mxu0 0.0
    %5627 = vmatprep.subr.mxu0 0.0
    %5628 = vmatpush1.msra.mxu0 0.0
    %5629 = vmatprep.subr.mxu0 0.0
    %5630 = vmatpush1.msra.mxu0 0.0
    %5631 = vmatprep.subr.mxu0 0.0
    %5632 = vmatpush1.msra.mxu0 0.0
    %5633 = vmatprep.subr.mxu0 0.0
    %5634 = vmatpush1.msra.mxu0 0.0
    %5635 = vmatprep.subr.mxu0 0.0
    %5636 = vmatpush1.msra.mxu0 0.0
    %5637 = vmatprep.subr.mxu0 0.0
    %5638 = vmatpush1.msra.mxu0 0.0
    %5639 = vmatprep.subr.mxu0 0.0
    %5640 = vmatpush1.msra.mxu0 0.0
    %5641 = vmatprep.subr.mxu0 0.0
    %5642 = vmatpush1.msra.mxu0 0.0
    %5643 = vmatprep.subr.mxu0 0.0
    %5644 = vmatpush1.msra.mxu0 0.0
    %5645 = vmatprep.subr.mxu0 0.0
    %5646 = vmatpush1.msra.mxu0 0.0
    %5647 = vmatprep.subr.mxu0 0.0
    %5648 = vmatpush1.msra.mxu0 0.0
    %5649 = vmatprep.subr.mxu0 0.0
    %5650 = vmatpush1.msra.mxu0 0.0
    %5651 = vmatprep.subr.mxu0 0.0
    %5652 = vmatpush1.msra.mxu0 0.0
    %5653 = vmatprep.subr.mxu0 0.0
    %5654 = vmatpush1.msra.mxu0 0.0
    %5655 = vmatprep.mubr.f32.mxu0 0.0
    %5656 = vmatmul.mubr.f32.gmra.mrb[0].mxu0 %v5406
    %v5657 = vpop.f32.mrb[0].mxu0
    %v5658 = vadd.f32 0.0, %v5657
    %v5659 = vpop.f32.mrb[0].mxu0
    %v5660 = vadd.f32 0.0, %v5659
    %5661 = vmatprep.mubr.f32.mxu0 0.0
    %5662 = vmatmul.mubr.f32.gmra.mrb[0].mxu0 %v5407
    %v5663 = vpop.f32.mrb[0].mxu0
    %v5664 = vadd.f32 0.0, %v5663
    %v5665 = vpop.f32.mrb[0].mxu0
    %v5666 = vadd.f32 0.0, %v5665
    %5667 = vmatprep.mubr.f32.mxu0 0.0
    %5668 = vmatmul.mubr.f32.gmra.mrb[0].mxu0 %v5408
    %v5669 = vpop.f32.mrb[0].mxu0
    %v5670 = vadd.f32 0.0, %v5669
    %v5671 = vpop.f32.mrb[0].mxu0
    %v5672 = vadd.f32 0.0, %v5671
    %5673 = vmatprep.mubr.f32.mxu0 0.0
    %5674 = vmatmul.mubr.f32.gmra.mrb[0].mxu0 %v5409
    %v5675 = vpop.f32.mrb[0].mxu0
    %v5676 = vadd.f32 0.0, %v5675
    %v5677 = vpop.f32.mrb[0].mxu0
    %v5678 = vadd.f32 0.0, %v5677
    %5679 = vmatprep.mubr.f32.mxu0 0.0
    %5680 = vmatmul.mubr.f32.gmra.mrb[0].mxu0 %v5410
    %v5681 = vpop.f32.mrb[0].mxu0
    %v5682 = vadd.f32 0.0, %v5681
    %v5683 = vpop.f32.mrb[0].mxu0
    %v5684 = vadd.f32 0.0, %v5683
    %5685 = vmatprep.mubr.f32.mxu0 0.0
    %5686 = vmatmul.mubr.f32.gmra.mrb[0].mxu0 %v5411
    %v5687 = vpop.f32.mrb[0].mxu0
    %v5688 = vadd.f32 0.0, %v5687
    %v5689 = vpop.f32.mrb[0].mxu0
    %v5690 = vadd.f32 0.0, %v5689
    %5691 = vmatprep.mubr.f32.mxu0 0.0
    %5692 = vmatmul.mubr.f32.gmra.mrb[0].mxu0 %v5412
    %v5693 = vpop.f32.mrb[0].mxu0
    %v5694 = vadd.f32 0.0, %v5693
    %v5695 = vpop.f32.mrb[0].mxu0
    %v5696 = vadd.f32 0.0, %v5695
    %5697 = vmatprep.mubr.f32.mxu0 0.0
    %5698 = vmatmul.mubr.f32.gmra.mrb[0].mxu0 %v5413
    %v5699 = vpop.f32.mrb[0].mxu0
    %v5700 = vadd.f32 0.0, %v5699
    %v5701 = vpop.f32.mrb[0].mxu0
    %v5702 = vadd.f32 0.0, %v5701
    %5703 = vdwg.mxu0
    %v5704 = vadd.f32 %v5545, %v5547
    %v5705 = vadd.f32 %v5704, %v5658
    %v5706 = vadd.f32 %v5705, %v5660
    %5707 = vadd.xlane.f32.xlu0 %v5706
    %v5708 = vpop.xlane.xlu0 %5707
    %v5709 = vadd.f32 %v5551, %v5553
    %v5710 = vadd.f32 %v5709, %v5664
    %v5711 = vadd.f32 %v5710, %v5666
    %5712 = vadd.xlane.f32.xlu0 %v5711
    %v5713 = vpop.xlane.xlu0 %5712
    %v5714 = vadd.f32 %v5557, %v5559
    %v5715 = vadd.f32 %v5714, %v5670
    %v5716 = vadd.f32 %v5715, %v5672
    %5717 = vadd.xlane.f32.xlu0 %v5716
    %v5718 = vpop.xlane.xlu0 %5717
    %v5719 = vadd.f32 %v5563, %v5565
    %v5720 = vadd.f32 %v5719, %v5676
    %v5721 = vadd.f32 %v5720, %v5678
    %5722 = vadd.xlane.f32.xlu0 %v5721
    %v5723 = vpop.xlane.xlu0 %5722
    %v5724 = vadd.f32 %v5569, %v5571
    %v5725 = vadd.f32 %v5724, %v5682
    %v5726 = vadd.f32 %v5725, %v5684
    %5727 = vadd.xlane.f32.xlu0 %v5726
    %v5728 = vpop.xlane.xlu0 %5727
    %v5729 = vadd.f32 %v5575, %v5577
    %v5730 = vadd.f32 %v5729, %v5688
    %v5731 = vadd.f32 %v5730, %v5690
    %5732 = vadd.xlane.f32.xlu0 %v5731
    %v5733 = vpop.xlane.xlu0 %5732
    %v5734 = vadd.f32 %v5581, %v5583
    %v5735 = vadd.f32 %v5734, %v5694
    %v5736 = vadd.f32 %v5735, %v5696
    %5737 = vadd.xlane.f32.xlu0 %v5736
    %v5738 = vpop.xlane.xlu0 %5737
    %v5739 = vadd.f32 %v5587, %v5589
    %v5740 = vadd.f32 %v5739, %v5700
    %v5741 = vadd.f32 %v5740, %v5702
    %5742 = vadd.xlane.f32.xlu0 %v5741
    %v5743 = vpop.xlane.xlu0 %5742
    %v5744 = vrcp.pop 512.0
    %v5745 = vmul.f32 %v5708, %v5744
    %v5746 = vmul.f32 %v5713, %v5744
    %v5747 = vmul.f32 %v5718, %v5744
    %v5748 = vmul.f32 %v5723, %v5744
    %v5749 = vmul.f32 %v5728, %v5744
    %v5750 = vmul.f32 %v5733, %v5744
    %v5751 = vmul.f32 %v5738, %v5744
    %v5752 = vmul.f32 %v5743, %v5744
    %v5753 = vsub.f32 %v5545, %v5745
    %v5754 = vsub.f32 %v5547, %v5745
    %v5755 = vsub.f32 %v5658, %v5745
    %v5756 = vsub.f32 %v5660, %v5745
    %v5757 = vsub.f32 %v5551, %v5746
    %v5758 = vsub.f32 %v5553, %v5746
    %v5759 = vsub.f32 %v5664, %v5746
    %v5760 = vsub.f32 %v5666, %v5746
    %v5761 = vsub.f32 %v5557, %v5747
    %v5762 = vsub.f32 %v5559, %v5747
    %v5763 = vsub.f32 %v5670, %v5747
    %v5764 = vsub.f32 %v5672, %v5747
    %v5765 = vsub.f32 %v5563, %v5748
    %v5766 = vsub.f32 %v5565, %v5748
    %v5767 = vsub.f32 %v5676, %v5748
    %v5768 = vsub.f32 %v5678, %v5748
    %v5769 = vsub.f32 %v5569, %v5749
    %v5770 = vsub.f32 %v5571, %v5749
    %v5771 = vsub.f32 %v5682, %v5749
    %v5772 = vsub.f32 %v5684, %v5749
    %v5773 = vsub.f32 %v5575, %v5750
    %v5774 = vsub.f32 %v5577, %v5750
    %v5775 = vsub.f32 %v5688, %v5750
    %v5776 = vsub.f32 %v5690, %v5750
    %v5777 = vsub.f32 %v5581, %v5751
    %v5778 = vsub.f32 %v5583, %v5751
    %v5779 = vsub.f32 %v5694, %v5751
    %v5780 = vsub.f32 %v5696, %v5751
    %v5781 = vsub.f32 %v5587, %v5752
    %v5782 = vsub.f32 %v5589, %v5752
    %v5783 = vsub.f32 %v5700, %v5752
    %v5784 = vsub.f32 %v5702, %v5752
    %v5785 = vmul.f32 %v5753, %v5753
    %v5786 = vmul.f32 %v5754, %v5754
    %v5787 = vmul.f32 %v5755, %v5755
    %v5788 = vmul.f32 %v5756, %v5756
    %v5789 = vmul.f32 %v5757, %v5757
    %v5790 = vmul.f32 %v5758, %v5758
    %v5791 = vmul.f32 %v5759, %v5759
    %v5792 = vmul.f32 %v5760, %v5760
    %v5793 = vmul.f32 %v5761, %v5761
    %v5794 = vmul.f32 %v5762, %v5762
    %v5795 = vmul.f32 %v5763, %v5763
    %v5796 = vmul.f32 %v5764, %v5764
    %v5797 = vmul.f32 %v5765, %v5765
    %v5798 = vmul.f32 %v5766, %v5766
    %v5799 = vmul.f32 %v5767, %v5767
    %v5800 = vmul.f32 %v5768, %v5768
    %v5801 = vmul.f32 %v5769, %v5769
    %v5802 = vmul.f32 %v5770, %v5770
    %v5803 = vmul.f32 %v5771, %v5771
    %v5804 = vmul.f32 %v5772, %v5772
    %v5805 = vmul.f32 %v5773, %v5773
    %v5806 = vmul.f32 %v5774, %v5774
    %v5807 = vmul.f32 %v5775, %v5775
    %v5808 = vmul.f32 %v5776, %v5776
    %v5809 = vmul.f32 %v5777, %v5777
    %v5810 = vmul.f32 %v5778, %v5778
    %v5811 = vmul.f32 %v5779, %v5779
    %v5812 = vmul.f32 %v5780, %v5780
    %v5813 = vmul.f32 %v5781, %v5781
    %v5814 = vmul.f32 %v5782, %v5782
    %v5815 = vmul.f32 %v5783, %v5783
    %v5816 = vmul.f32 %v5784, %v5784
    %v5817 = vadd.f32 %v5785, %v5786
    %v5818 = vadd.f32 %v5817, %v5787
    %v5819 = vadd.f32 %v5818, %v5788
    %5820 = vadd.xlane.f32.xlu0 %v5819
    %v5821 = vpop.xlane.xlu0 %5820
    %v5822 = vadd.f32 %v5789, %v5790
    %v5823 = vadd.f32 %v5822, %v5791
    %v5824 = vadd.f32 %v5823, %v5792
    %5825 = vadd.xlane.f32.xlu0 %v5824
    %v5826 = vpop.xlane.xlu0 %5825
    %v5827 = vadd.f32 %v5793, %v5794
    %v5828 = vadd.f32 %v5827, %v5795
    %v5829 = vadd.f32 %v5828, %v5796
    %5830 = vadd.xlane.f32.xlu0 %v5829
    %v5831 = vpop.xlane.xlu0 %5830
    %v5832 = vadd.f32 %v5797, %v5798
    %v5833 = vadd.f32 %v5832, %v5799
    %v5834 = vadd.f32 %v5833, %v5800
    %5835 = vadd.xlane.f32.xlu0 %v5834
    %v5836 = vpop.xlane.xlu0 %5835
    %v5837 = vadd.f32 %v5801, %v5802
    %v5838 = vadd.f32 %v5837, %v5803
    %v5839 = vadd.f32 %v5838, %v5804
    %5840 = vadd.xlane.f32.xlu0 %v5839
    %v5841 = vpop.xlane.xlu0 %5840
    %v5842 = vadd.f32 %v5805, %v5806
    %v5843 = vadd.f32 %v5842, %v5807
    %v5844 = vadd.f32 %v5843, %v5808
    %5845 = vadd.xlane.f32.xlu0 %v5844
    %v5846 = vpop.xlane.xlu0 %5845
    %v5847 = vadd.f32 %v5809, %v5810
    %v5848 = vadd.f32 %v5847, %v5811
    %v5849 = vadd.f32 %v5848, %v5812
    %5850 = vadd.xlane.f32.xlu0 %v5849
    %v5851 = vpop.xlane.xlu0 %5850
    %v5852 = vadd.f32 %v5813, %v5814
    %v5853 = vadd.f32 %v5852, %v5815
    %v5854 = vadd.f32 %v5853, %v5816
    %5855 = vadd.xlane.f32.xlu0 %v5854
    %v5856 = vpop.xlane.xlu0 %5855
    %v5857 = vmul.f32 %v5821, %v5744
    %v5858 = vmul.f32 %v5826, %v5744
    %v5859 = vmul.f32 %v5831, %v5744
    %v5860 = vmul.f32 %v5836, %v5744
    %v5861 = vmul.f32 %v5841, %v5744
    %v5862 = vmul.f32 %v5846, %v5744
    %v5863 = vmul.f32 %v5851, %v5744
    %v5864 = vmul.f32 %v5856, %v5744
    %v5865 = vadd.f32 %v5857, 1e-05
    %v5866 = vadd.f32 %v5858, 1e-05
    %v5867 = vadd.f32 %v5859, 1e-05
    %v5868 = vadd.f32 %v5860, 1e-05
    %v5869 = vadd.f32 %v5861, 1e-05
    %v5870 = vadd.f32 %v5862, 1e-05
    %v5871 = vadd.f32 %v5863, 1e-05
    %v5872 = vadd.f32 %v5864, 1e-05
    %v5873 = vrsqrt.pop %v5865
    %v5874 = vrsqrt.pop %v5866
    %v5875 = vrsqrt.pop %v5867
    %v5876 = vrsqrt.pop %v5868
    %v5877 = vrsqrt.pop %v5869
    %v5878 = vrsqrt.pop %v5870
    %v5879 = vrsqrt.pop %v5871
    %v5880 = vrsqrt.pop %v5872
    %v5881 = vmul.f32 %v5753, %v5873
    %v5882 = vmul.f32 %v5754, %v5873
    %v5883 = vmul.f32 %v5755, %v5873
    %v5884 = vmul.f32 %v5756, %v5873
    %v5885 = vmul.f32 %v5757, %v5874
    %v5886 = vmul.f32 %v5758, %v5874
    %v5887 = vmul.f32 %v5759, %v5874
    %v5888 = vmul.f32 %v5760, %v5874
    %v5889 = vmul.f32 %v5761, %v5875
    %v5890 = vmul.f32 %v5762, %v5875
    %v5891 = vmul.f32 %v5763, %v5875
    %v5892 = vmul.f32 %v5764, %v5875
    %v5893 = vmul.f32 %v5765, %v5876
    %v5894 = vmul.f32 %v5766, %v5876
    %v5895 = vmul.f32 %v5767, %v5876
    %v5896 = vmul.f32 %v5768, %v5876
    %v5897 = vmul.f32 %v5769, %v5877
    %v5898 = vmul.f32 %v5770, %v5877
    %v5899 = vmul.f32 %v5771, %v5877
    %v5900 = vmul.f32 %v5772, %v5877
    %v5901 = vmul.f32 %v5773, %v5878
    %v5902 = vmul.f32 %v5774, %v5878
    %v5903 = vmul.f32 %v5775, %v5878
    %v5904 = vmul.f32 %v5776, %v5878
    %v5905 = vmul.f32 %v5777, %v5879
    %v5906 = vmul.f32 %v5778, %v5879
    %v5907 = vmul.f32 %v5779, %v5879
    %v5908 = vmul.f32 %v5780, %v5879
    %v5909 = vmul.f32 %v5781, %v5880
    %v5910 = vmul.f32 %v5782, %v5880
    %v5911 = vmul.f32 %v5783, %v5880
    %v5912 = vmul.f32 %v5784, %v5880
    %v5913 = vld [vmem:[%s5] sm:$0xff]
    %v5914 = vld [vmem:[%s5 + $0x8] sm:$0xff]
    %v5915 = vld [vmem:[%s5 + $0x10] sm:$0xff]
    %v5916 = vld [vmem:[%s5 + $0x18] sm:$0xff]
    %v5917 = vld [vmem:[%s5 + $0x20] sm:$0xff]
    %v5918 = vld [vmem:[%s5 + $0x28] sm:$0xff]
    %v5919 = vld [vmem:[%s5 + $0x30] sm:$0xff]
    %v5920 = vld [vmem:[%s5 + $0x38] sm:$0xff]
    %5922 = vset.pattern.permute.xlu0 0
    %5923 = vperm.xlu0 %5922, %v5913
    %v5924 = vpop.permute.xlu0 %5923
    %5927 = vset.pattern.permute.xlu0 0
    %5928 = vperm.xlu0 %5927, %v5914
    %v5929 = vpop.permute.xlu0 %5928
    %5932 = vset.pattern.permute.xlu0 0
    %5933 = vperm.xlu0 %5932, %v5915
    %v5934 = vpop.permute.xlu0 %5933
    %5937 = vset.pattern.permute.xlu0 0
    %5938 = vperm.xlu0 %5937, %v5916
    %v5939 = vpop.permute.xlu0 %5938
    %5942 = vset.pattern.permute.xlu0 0
    %5943 = vperm.xlu0 %5942, %v5917
    %v5944 = vpop.permute.xlu0 %5943
    %5947 = vset.pattern.permute.xlu0 0
    %5948 = vperm.xlu0 %5947, %v5918
    %v5949 = vpop.permute.xlu0 %5948
    %5952 = vset.pattern.permute.xlu0 0
    %5953 = vperm.xlu0 %5952, %v5919
    %v5954 = vpop.permute.xlu0 %5953
    %5957 = vset.pattern.permute.xlu0 0
    %5958 = vperm.xlu0 %5957, %v5920
    %v5959 = vpop.permute.xlu0 %5958
    %v5961 = vmul.f32 %v5881, %v5924
    %v5962 = vmul.f32 %v5882, %v5924
    %v5963 = vmul.f32 %v5883, %v5924
    %v5964 = vmul.f32 %v5884, %v5924
    %v5965 = vmul.f32 %v5885, %v5929
    %v5966 = vmul.f32 %v5886, %v5929
    %v5967 = vmul.f32 %v5887, %v5929
    %v5968 = vmul.f32 %v5888, %v5929
    %v5969 = vmul.f32 %v5889, %v5934
    %v5970 = vmul.f32 %v5890, %v5934
    %v5971 = vmul.f32 %v5891, %v5934
    %v5972 = vmul.f32 %v5892, %v5934
    %v5973 = vmul.f32 %v5893, %v5939
    %v5974 = vmul.f32 %v5894, %v5939
    %v5975 = vmul.f32 %v5895, %v5939
    %v5976 = vmul.f32 %v5896, %v5939
    %v5977 = vmul.f32 %v5897, %v5944
    %v5978 = vmul.f32 %v5898, %v5944
    %v5979 = vmul.f32 %v5899, %v5944
    %v5980 = vmul.f32 %v5900, %v5944
    %v5981 = vmul.f32 %v5901, %v5949
    %v5982 = vmul.f32 %v5902, %v5949
    %v5983 = vmul.f32 %v5903, %v5949
    %v5984 = vmul.f32 %v5904, %v5949
    %v5985 = vmul.f32 %v5905, %v5954
    %v5986 = vmul.f32 %v5906, %v5954
    %v5987 = vmul.f32 %v5907, %v5954
    %v5988 = vmul.f32 %v5908, %v5954
    %v5989 = vmul.f32 %v5909, %v5959
    %v5990 = vmul.f32 %v5910, %v5959
    %v5991 = vmul.f32 %v5911, %v5959
    %v5992 = vmul.f32 %v5912, %v5959
    %v5993 = vld [vmem:[%s6] sm:$0xff]
    %v5994 = vld [vmem:[%s6 + $0x8] sm:$0xff]
    %v5995 = vld [vmem:[%s6 + $0x10] sm:$0xff]
    %v5996 = vld [vmem:[%s6 + $0x18] sm:$0xff]
    %v5997 = vld [vmem:[%s6 + $0x20] sm:$0xff]
    %v5998 = vld [vmem:[%s6 + $0x28] sm:$0xff]
    %v5999 = vld [vmem:[%s6 + $0x30] sm:$0xff]
    %v6000 = vld [vmem:[%s6 + $0x38] sm:$0xff]
    %6002 = vset.pattern.permute.xlu0 0
    %6003 = vperm.xlu0 %6002, %v5993
    %v6004 = vpop.permute.xlu0 %6003
    %6007 = vset.pattern.permute.xlu0 0
    %6008 = vperm.xlu0 %6007, %v5994
    %v6009 = vpop.permute.xlu0 %6008
    %6012 = vset.pattern.permute.xlu0 0
    %6013 = vperm.xlu0 %6012, %v5995
    %v6014 = vpop.permute.xlu0 %6013
    %6017 = vset.pattern.permute.xlu0 0
    %6018 = vperm.xlu0 %6017, %v5996
    %v6019 = vpop.permute.xlu0 %6018
    %6022 = vset.pattern.permute.xlu0 0
    %6023 = vperm.xlu0 %6022, %v5997
    %v6024 = vpop.permute.xlu0 %6023
    %6027 = vset.pattern.permute.xlu0 0
    %6028 = vperm.xlu0 %6027, %v5998
    %v6029 = vpop.permute.xlu0 %6028
    %6032 = vset.pattern.permute.xlu0 0
    %6033 = vperm.xlu0 %6032, %v5999
    %v6034 = vpop.permute.xlu0 %6033
    %6037 = vset.pattern.permute.xlu0 0
    %6038 = vperm.xlu0 %6037, %v6000
    %v6039 = vpop.permute.xlu0 %6038
    %v6041 = vadd.f32 %v5961, %v6004
    %v6042 = vadd.f32 %v5962, %v6004
    %v6043 = vadd.f32 %v5963, %v6004
    %v6044 = vadd.f32 %v5964, %v6004
    %v6045 = vadd.f32 %v5965, %v6009
    %v6046 = vadd.f32 %v5966, %v6009
    %v6047 = vadd.f32 %v5967, %v6009
    %v6048 = vadd.f32 %v5968, %v6009
    %v6049 = vadd.f32 %v5969, %v6014
    %v6050 = vadd.f32 %v5970, %v6014
    %v6051 = vadd.f32 %v5971, %v6014
    %v6052 = vadd.f32 %v5972, %v6014
    %v6053 = vadd.f32 %v5973, %v6019
    %v6054 = vadd.f32 %v5974, %v6019
    %v6055 = vadd.f32 %v5975, %v6019
    %v6056 = vadd.f32 %v5976, %v6019
    %v6057 = vadd.f32 %v5977, %v6024
    %v6058 = vadd.f32 %v5978, %v6024
    %v6059 = vadd.f32 %v5979, %v6024
    %v6060 = vadd.f32 %v5980, %v6024
    %v6061 = vadd.f32 %v5981, %v6029
    %v6062 = vadd.f32 %v5982, %v6029
    %v6063 = vadd.f32 %v5983, %v6029
    %v6064 = vadd.f32 %v5984, %v6029
    %v6065 = vadd.f32 %v5985, %v6034
    %v6066 = vadd.f32 %v5986, %v6034
    %v6067 = vadd.f32 %v5987, %v6034
    %v6068 = vadd.f32 %v5988, %v6034
    %v6069 = vadd.f32 %v5989, %v6039
    %v6070 = vadd.f32 %v5990, %v6039
    %v6071 = vadd.f32 %v5991, %v6039
    %v6072 = vadd.f32 %v5992, %v6039
    %v6073 = vmul.f32 %v6041, 0.5
    %v6074 = vmul.f32 %v6042, 0.5
    %v6075 = vmul.f32 %v6043, 0.5
    %v6076 = vmul.f32 %v6044, 0.5
    %v6077 = vmul.f32 %v6045, 0.5
    %v6078 = vmul.f32 %v6046, 0.5
    %v6079 = vmul.f32 %v6047, 0.5
    %v6080 = vmul.f32 %v6048, 0.5
    %v6081 = vmul.f32 %v6049, 0.5
    %v6082 = vmul.f32 %v6050, 0.5
    %v6083 = vmul.f32 %v6051, 0.5
    %v6084 = vmul.f32 %v6052, 0.5
    %v6085 = vmul.f32 %v6053, 0.5
    %v6086 = vmul.f32 %v6054, 0.5
    %v6087 = vmul.f32 %v6055, 0.5
    %v6088 = vmul.f32 %v6056, 0.5
    %v6089 = vmul.f32 %v6057, 0.5
    %v6090 = vmul.f32 %v6058, 0.5
    %v6091 = vmul.f32 %v6059, 0.5
    %v6092 = vmul.f32 %v6060, 0.5
    %v6093 = vmul.f32 %v6061, 0.5
    %v6094 = vmul.f32 %v6062, 0.5
    %v6095 = vmul.f32 %v6063, 0.5
    %v6096 = vmul.f32 %v6064, 0.5
    %v6097 = vmul.f32 %v6065, 0.5
    %v6098 = vmul.f32 %v6066, 0.5
    %v6099 = vmul.f32 %v6067, 0.5
    %v6100 = vmul.f32 %v6068, 0.5
    %v6101 = vmul.f32 %v6069, 0.5
    %v6102 = vmul.f32 %v6070, 0.5
    %v6103 = vmul.f32 %v6071, 0.5
    %v6104 = vmul.f32 %v6072, 0.5
    %v6105 = vmul.f32 %v6041, 0.70710677
    %v6106 = vmul.f32 %v6042, 0.70710677
    %v6107 = vmul.f32 %v6043, 0.70710677
    %v6108 = vmul.f32 %v6044, 0.70710677
    %v6109 = vmul.f32 %v6045, 0.70710677
    %v6110 = vmul.f32 %v6046, 0.70710677
    %v6111 = vmul.f32 %v6047, 0.70710677
    %v6112 = vmul.f32 %v6048, 0.70710677
    %v6113 = vmul.f32 %v6049, 0.70710677
    %v6114 = vmul.f32 %v6050, 0.70710677
    %v6115 = vmul.f32 %v6051, 0.70710677
    %v6116 = vmul.f32 %v6052, 0.70710677
    %v6117 = vmul.f32 %v6053, 0.70710677
    %v6118 = vmul.f32 %v6054, 0.70710677
    %v6119 = vmul.f32 %v6055, 0.70710677
    %v6120 = vmul.f32 %v6056, 0.70710677
    %v6121 = vmul.f32 %v6057, 0.70710677
    %v6122 = vmul.f32 %v6058, 0.70710677
    %v6123 = vmul.f32 %v6059, 0.70710677
    %v6124 = vmul.f32 %v6060, 0.70710677
    %v6125 = vmul.f32 %v6061, 0.70710677
    %v6126 = vmul.f32 %v6062, 0.70710677
    %v6127 = vmul.f32 %v6063, 0.70710677
    %v6128 = vmul.f32 %v6064, 0.70710677
    %v6129 = vmul.f32 %v6065, 0.70710677
    %v6130 = vmul.f32 %v6066, 0.70710677
    %v6131 = vmul.f32 %v6067, 0.70710677
    %v6132 = vmul.f32 %v6068, 0.70710677
    %v6133 = vmul.f32 %v6069, 0.70710677
    %v6134 = vmul.f32 %v6070, 0.70710677
    %v6135 = vmul.f32 %v6071, 0.70710677
    %v6136 = vmul.f32 %v6072, 0.70710677
    %v6137 = verf.f32.pop %v6105
    %v6138 = verf.f32.pop %v6106
    %v6139 = verf.f32.pop %v6107
    %v6140 = verf.f32.pop %v6108
    %v6141 = verf.f32.pop %v6109
    %v6142 = verf.f32.pop %v6110
    %v6143 = verf.f32.pop %v6111
    %v6144 = verf.f32.pop %v6112
    %v6145 = verf.f32.pop %v6113
    %v6146 = verf.f32.pop %v6114
    %v6147 = verf.f32.pop %v6115
    %v6148 = verf.f32.pop %v6116
    %v6149 = verf.f32.pop %v6117
    %v6150 = verf.f32.pop %v6118
    %v6151 = verf.f32.pop %v6119
    %v6152 = verf.f32.pop %v6120
    %v6153 = verf.f32.pop %v6121
    %v6154 = verf.f32.pop %v6122
    %v6155 = verf.f32.pop %v6123
    %v6156 = verf.f32.pop %v6124
    %v6157 = verf.f32.pop %v6125
    %v6158 = verf.f32.pop %v6126
    %v6159 = verf.f32.pop %v6127
    %v6160 = verf.f32.pop %v6128
    %v6161 = verf.f32.pop %v6129
    %v6162 = verf.f32.pop %v6130
    %v6163 = verf.f32.pop %v6131
    %v6164 = verf.f32.pop %v6132
    %v6165 = verf.f32.pop %v6133
    %v6166 = verf.f32.pop %v6134
    %v6167 = verf.f32.pop %v6135
    %v6168 = verf.f32.pop %v6136
    %v6169 = vadd.f32 %v6137, 1.0
    %v6170 = vadd.f32 %v6138, 1.0
    %v6171 = vadd.f32 %v6139, 1.0
    %v6172 = vadd.f32 %v6140, 1.0
    %v6173 = vadd.f32 %v6141, 1.0
    %v6174 = vadd.f32 %v6142, 1.0
    %v6175 = vadd.f32 %v6143, 1.0
    %v6176 = vadd.f32 %v6144, 1.0
    %v6177 = vadd.f32 %v6145, 1.0
    %v6178 = vadd.f32 %v6146, 1.0
    %v6179 = vadd.f32 %v6147, 1.0
    %v6180 = vadd.f32 %v6148, 1.0
    %v6181 = vadd.f32 %v6149, 1.0
    %v6182 = vadd.f32 %v6150, 1.0
    %v6183 = vadd.f32 %v6151, 1.0
    %v6184 = vadd.f32 %v6152, 1.0
    %v6185 = vadd.f32 %v6153, 1.0
    %v6186 = vadd.f32 %v6154, 1.0
    %v6187 = vadd.f32 %v6155, 1.0
    %v6188 = vadd.f32 %v6156, 1.0
    %v6189 = vadd.f32 %v6157, 1.0
    %v6190 = vadd.f32 %v6158, 1.0
    %v6191 = vadd.f32 %v6159, 1.0
    %v6192 = vadd.f32 %v6160, 1.0
    %v6193 = vadd.f32 %v6161, 1.0
    %v6194 = vadd.f32 %v6162, 1.0
    %v6195 = vadd.f32 %v6163, 1.0
    %v6196 = vadd.f32 %v6164, 1.0
    %v6197 = vadd.f32 %v6165, 1.0
    %v6198 = vadd.f32 %v6166, 1.0
    %v6199 = vadd.f32 %v6167, 1.0
    %v6200 = vadd.f32 %v6168, 1.0
    %v6201 = vmul.f32 %v6073, %v6169
    %v6202 = vmul.f32 %v6074, %v6170
    %v6203 = vmul.f32 %v6075, %v6171
    %v6204 = vmul.f32 %v6076, %v6172
    %v6205 = vmul.f32 %v6077, %v6173
    %v6206 = vmul.f32 %v6078, %v6174
    %v6207 = vmul.f32 %v6079, %v6175
    %v6208 = vmul.f32 %v6080, %v6176
    %v6209 = vmul.f32 %v6081, %v6177
    %v6210 = vmul.f32 %v6082, %v6178
    %v6211 = vmul.f32 %v6083, %v6179
    %v6212 = vmul.f32 %v6084, %v6180
    %v6213 = vmul.f32 %v6085, %v6181
    %v6214 = vmul.f32 %v6086, %v6182
    %v6215 = vmul.f32 %v6087, %v6183
    %v6216 = vmul.f32 %v6088, %v6184
    %v6217 = vmul.f32 %v6089, %v6185
    %v6218 = vmul.f32 %v6090, %v6186
    %v6219 = vmul.f32 %v6091, %v6187
    %v6220 = vmul.f32 %v6092, %v6188
    %v6221 = vmul.f32 %v6093, %v6189
    %v6222 = vmul.f32 %v6094, %v6190
    %v6223 = vmul.f32 %v6095, %v6191
    %v6224 = vmul.f32 %v6096, %v6192
    %v6225 = vmul.f32 %v6097, %v6193
    %v6226 = vmul.f32 %v6098, %v6194
    %v6227 = vmul.f32 %v6099, %v6195
    %v6228 = vmul.f32 %v6100, %v6196
    %v6229 = vmul.f32 %v6101, %v6197
    %v6230 = vmul.f32 %v6102, %v6198
    %v6231 = vmul.f32 %v6103, %v6199
    %v6232 = vmul.f32 %v6104, %v6200
    %6233 = vst [vmem:[%s7] sm:$0xff] %v6201
    %6234 = vst [vmem:[%s7 + $0x8] sm:$0xff] %v6202
    %6235 = vst [vmem:[%s7 + $0x10] sm:$0xff] %v6205
    %6236 = vst [vmem:[%s7 + $0x18] sm:$0xff] %v6206
    %6237 = vst [vmem:[%s7 + $0x20] sm:$0xff] %v6209
    %6238 = vst [vmem:[%s7 + $0x28] sm:$0xff] %v6210
    %6239 = vst [vmem:[%s7 + $0x30] sm:$0xff] %v6213
    %6240 = vst [vmem:[%s7 + $0x38] sm:$0xff] %v6214
    %6241 = vst [vmem:[%s7 + $0x40] sm:$0xff] %v6217
    %6242 = vst [vmem:[%s7 + $0x48] sm:$0xff] %v6218
    %6243 = vst [vmem:[%s7 + $0x50] sm:$0xff] %v6221
    %6244 = vst [vmem:[%s7 + $0x58] sm:$0xff] %v6222
    %6245 = vst [vmem:[%s7 + $0x60] sm:$0xff] %v6225
    %6246 = vst [vmem:[%s7 + $0x68] sm:$0xff] %v6226
    %6247 = vst [vmem:[%s7 + $0x70] sm:$0xff] %v6229
    %6248 = vst [vmem:[%s7 + $0x78] sm:$0xff] %v6230
    %s6249 = scalar_lea.vmem %s7, 128
    %6250 = vst [vmem:[%s6249] sm:$0xff] %v6203
    %6251 = vst [vmem:[%s6249 + $0x8] sm:$0xff] %v6204
    %6252 = vst [vmem:[%s6249 + $0x10] sm:$0xff] %v6207
    %6253 = vst [vmem:[%s6249 + $0x18] sm:$0xff] %v6208
    %6254 = vst [vmem:[%s6249 + $0x20] sm:$0xff] %v6211
    %6255 = vst [vmem:[%s6249 + $0x28] sm:$0xff] %v6212
    %6256 = vst [vmem:[%s6249 + $0x30] sm:$0xff] %v6215
    %6257 = vst [vmem:[%s6249 + $0x38] sm:$0xff] %v6216
    %6258 = vst [vmem:[%s6249 + $0x40] sm:$0xff] %v6219
    %6259 = vst [vmem:[%s6249 + $0x48] sm:$0xff] %v6220
    %6260 = vst [vmem:[%s6249 + $0x50] sm:$0xff] %v6223
    %6261 = vst [vmem:[%s6249 + $0x58] sm:$0xff] %v6224
    %6262 = vst [vmem:[%s6249 + $0x60] sm:$0xff] %v6227
    %6263 = vst [vmem:[%s6249 + $0x68] sm:$0xff] %v6228
    %6264 = vst [vmem:[%s6249 + $0x70] sm:$0xff] %v6231
    %6265 = vst [vmem:[%s6249 + $0x78] sm:$0xff] %v6232
  $region37: #{projection_forward.1} parent=0 // pred_fallthru
    _
  // Predicated region
  $region38: #{projection_forward.1} parent=0 // pred_check
    _
  $region39: #{projection_forward.1} parent=0 // pred_check_branch
    %6267 = sbr.rel (0) target = $region41
  $region40: #{projection_forward.1} parent=0 // pred_region
    _
  $region41: #{projection_forward.1} parent=0 // pred_fallthru
    _
  // Predicated region
  $region42: #{projection_forward.1} parent=0 // pred_check
    _
  $region43: #{projection_forward.1} parent=0 // pred_check_branch
    %6269 = sbr.rel (0) target = $region45
  $region44: #{projection_forward.1} parent=0 // pred_region
    _
  $region45: #{projection_forward.1} parent=0 // pred_fallthru
    _

</llo_original>
